<compile_context>
chip_gen: v7x
topology: tpu7x:2x2x1
jax: 0.10.0
libtpu: 0.0.40
codegen_flags: <defaults>
</compile_context>

<pallas_src>
import functools

import jax
import jax.numpy as jnp
from jax.experimental import pallas as pl
from jax.experimental.pallas import tpu as pltpu


# ---------------------------------------------------------------------------
# 1) DKNN forward: euclidean scores + FasterNeuralSort soft top-k
# ---------------------------------------------------------------------------
def _dknn_topk_kernel(qT_ref, x_ref, out_ref, st_ref, bsum_ref, *, k, tau, n, ll):
    # qT_ref : (D, TM)  query tile, transposed, native dtype
    # x_ref  : (N, D)   neighbours (resident across grid steps), native dtype
    # out_ref: (N, TM)  f32 transposed soft-top-k (wrapper transposes back)
    # st_ref, bsum_ref: (N, TM) f32 scratch (scores_T, B-term)
    qT = qT_ref[...]
    x = x_ref[...]

    # scores_T[j, m] = -||q_m - x_j||^2 = 2 x_j.q_m - ||x_j||^2 - ||q_m||^2
    # MXU sees native-dtype operands in canonical (N,D)x(D,TM) orientation.
    cross = jax.lax.dot_general(x, qT, (((1,), (0,)), ((), ())),
                                preferred_element_type=jnp.float32)    # (N, TM)
    xf = x.astype(jnp.float32)
    qf = qT.astype(jnp.float32)
    xsq = jnp.sum(xf * xf, axis=1, keepdims=True)                      # (N, 1)
    qsq = jnp.sum(qf * qf, axis=0, keepdims=True)                      # (1, TM)
    st_ref[...] = 2.0 * cross - xsq - qsq
    st = st_ref[...]                                                   # (N, TM)

    # NeuralSort B-term: bsum[j, m] = sum_l |s[j, m] - s[l, m]|, accumulated
    # over l-chunks of LL rows.  Per-chunk temp is (N, LL, TM) — bounded.
    bsum_ref[...] = jnp.zeros_like(bsum_ref)
    nc = n // ll

    def chunk_body(c, carry):
        l0 = pl.multiple_of(c * ll, ll)
        s_l = st_ref[pl.ds(l0, ll), :]                                 # (LL, TM)
        diff = jnp.abs(st[:, None, :] - s_l[None, :, :])              # (N, LL, TM)
        bsum_ref[...] += jnp.sum(diff, axis=1)
        return carry

    jax.lax.fori_loop(0, nc, chunk_body, 0)
    bsum = bsum_ref[...]

    # Soft top-k: sum of the first k rows of the NeuralSort permutation matrix.
    inv_tau = 1.0 / tau
    st_scaled = st * inv_tau            # hoisted out of the k loop
    b_scaled = bsum * inv_tau

    acc = jnp.zeros_like(st)
    for r in range(k):                  # k is small & static -> unrolled
        coef = float(n + 1 - 2 * (r + 1))
        logits = coef * st_scaled - b_scaled                           # (N, TM)
        mx = jnp.max(logits, axis=0, keepdims=True)                    # (1, TM)
        e = jnp.exp(logits - mx)
        denom = jnp.sum(e, axis=0, keepdims=True)                      # (1, TM)
        acc = acc + e * pl.reciprocal(denom, approx=True)
    out_ref[...] = acc.astype(out_ref.dtype)


def dknn_topk(query, neighbors, k, tau=1.0, block_q=None):
    """DKNN.forward for method='deterministic', similarity='euclidean'."""
    # TODO(synk): cosine similarity, concept_weights re-weighting, stochastic
    # method (Plackett-Luce sampling) and hard straight-through NeuralSort are
    # not implemented in the Pallas path.
    M, D = query.shape
    N, D2 = neighbors.shape
    assert D == D2
    assert N % 8 == 0, "pad the neighbour set to a multiple of 8"
    k = int(k)
    assert 1 <= k <= min(N, 64), "k must be small (unrolled in-kernel)"

    # Query tile: MXU-native 128 rows when possible, else whole batch.
    if block_q is None:
        block_q = 128 if (M % 128 == 0) else M
    block_q = min(int(block_q), M)
    assert M % block_q == 0, "pad the query batch to a multiple of block_q"
    assert block_q % 128 == 0 or block_q == M, "block_q must be 128-aligned or M"

    # l-chunk size: multiple of 8 dividing N, temp (N, LL, block_q) f32 ~<= 1 MiB.
    budget_elems = (1 << 20) // 4
    ll = budget_elems // (N * block_q)
    ll = max(8, (ll // 8) * 8)
    ll = min(ll, N)
    while N % ll:
        ll -= 8

    # VMEM budget (double-buffered blocks + scratches + chunk/loop temps).
    isz_q = query.dtype.itemsize
    isz_x = neighbors.dtype.itemsize
    est = (2 * (D * block_q * isz_q + N * D * isz_x)
           + 2 * N * block_q * 4          # output double buffer
           + 2 * N * block_q * 4          # st / bsum scratch
           + 3 * N * ll * block_q * 4     # broadcast/abs temps in the l loop
           + 8 * N * block_q * 4          # live (N, TM) f32 values in the r loop
           + (2 << 20))
    vmem_limit = int(min(max(est, 32 << 20), 100 << 20))

    qT = query.T                          # (D, M): column slab per query tile
    kernel = functools.partial(_dknn_topk_kernel, k=k, tau=float(tau), n=N, ll=ll)

    out_t = pl.pallas_call(
        kernel,
        out_shape=jax.ShapeDtypeStruct((N, M), jnp.float32),
        grid=(M // block_q,),
        in_specs=[
            pl.BlockSpec((D, block_q), lambda i: (0, i)),   # query tile (transposed)
            pl.BlockSpec((N, D), lambda i: (0, 0)),         # neighbours: resident
        ],
        out_specs=pl.BlockSpec((N, block_q), lambda i: (0, i)),  # lane-dense (TM)
        scratch_shapes=[pltpu.VMEM((N, block_q), jnp.float32),
                        pltpu.VMEM((N, block_q), jnp.float32)],
        compiler_params=pltpu.CompilerParams(
            dimension_semantics=("parallel",),               # megacore on v7x
            vmem_limit_bytes=vmem_limit),
    )(qT, neighbors)
    return out_t.T                        # (M, N)


# ---------------------------------------------------------------------------
# 2) Sparse-weighted DKNN loss — per-block lane-wide partial sums, JAX epilogue
# ---------------------------------------------------------------------------
def _loss_partials_kernel(d_ref, t_ref, out_ref, *, valid_rows, block_rows,
                          mask_rows):
    d = d_ref[...].astype(jnp.float32)            # (block_rows, K)
    t = t_ref[...].astype(jnp.float32)
    if mask_rows:
        # Ragged final row-block: zero out rows past the true batch size.
        row = jax.lax.broadcasted_iota(jnp.int32, d.shape, 0)
        valid = (row + pl.program_id(0) * block_rows) < valid_rows
        d = jnp.where(valid, d, 0.0)
        t = jnp.where(valid, t, 0.0)
    is_pos = t == 1.0
    pt = jnp.sum(t, axis=0, keepdims=True)                          # (1, K)
    pd = jnp.sum(d, axis=0, keepdims=True)                          # (1, K)
    pp = jnp.sum(jnp.where(is_pos, d, 0.0), axis=0, keepdims=True)  # (1, K)
    out_ref[0] = jnp.concatenate([pt, pd, pp], axis=0)              # single store


def dknn_loss_sparse_weighted(dknn_output, truth,
                              positive_weight=1.0, negative_weight=1.0,
                              num_neighbour_agnostic=True, block_rows=None):
    assert dknn_output.shape == truth.shape
    B, K = dknn_output.shape
    total = B * K

    if block_rows is None:
        # ~512 KiB f32 per input tile (measured HBM-roofline sweet spot).
        block_rows = max(8, (((512 << 10) // (max(K, 1) * 4)) // 8) * 8)
    block_rows = int(block_rows)
    if block_rows >= B:
        block_rows = B                     # single full-dim block (always legal)
    else:
        block_rows = max(8, (block_rows // 8) * 8)
    nb = pl.cdiv(B, block_rows)
    mask_rows = (B % block_rows) != 0

    kernel = functools.partial(_loss_partials_kernel, valid_rows=B,
                               block_rows=block_rows, mask_rows=mask_rows)

    partials = pl.pallas_call(
        kernel,
        out_shape=jax.ShapeDtypeStruct((nb, 3, K), jnp.float32),
        grid=(nb,),
        in_specs=[
            pl.BlockSpec((block_rows, K), lambda i: (i, 0)),
            pl.BlockSpec((block_rows, K), lambda i: (i, 0)),
        ],
        out_specs=pl.BlockSpec((1, 3, K), lambda i: (i, 0, 0)),
        compiler_params=pltpu.CompilerParams(
            dimension_semantics=("parallel",)),   # independent blocks -> both TCs
    )(dknn_output, truth)

    # Tiny JAX epilogue: final cross-lane/cross-block reduction + scalar math.
    sums = jnp.sum(partials, axis=(0, 2))         # (3,)
    s_truth, s_dknn, s_pos = sums[0], sums[1], sums[2]
    s_neg = s_dknn - s_pos                        # negatives = everything else

    pos_w = float(positive_weight)
    neg_w = float(negative_weight)
    # NOTE: matches the PyTorch module exactly, including inf/nan when
    # truth.sum() == 0 (all-negative batch).
    loss = (s_pos * (-pos_w / s_truth)
            + s_neg * (neg_w / (float(total) - s_truth))) / (pos_w + neg_w)
    if num_neighbour_agnostic:
        loss = loss * K
    return loss


# ---------------------------------------------------------------------------
# Pure-JAX references (transcriptions of the PyTorch forward passes)
# ---------------------------------------------------------------------------
def _dknn_topk_reference(query, neighbors, k, tau):
    diffs = query[:, None, :] - neighbors[None, :, :]
    scores = -jnp.sum(diffs ** 2, axis=-1)                     # (M, N)
    n = scores.shape[-1]
    pair = jnp.abs(scores[:, :, None] - scores[:, None, :])
    bsum = jnp.sum(pair, axis=-1)
    out = jnp.zeros_like(scores)
    for r in range(k):
        coef = n + 1 - 2 * (r + 1)
        out = out + jax.nn.softmax((coef * scores - bsum) / tau, axis=-1)
    return out


def _loss_reference(dknn_output, truth, positive_weight=1.0, negative_weight=1.0,
                    num_neighbour_agnostic=True):
    weight_factor = positive_weight + negative_weight
    is_positive = truth.sum()
    amplification = jnp.where(
        truth == 1,
        positive_weight * -1.0 / is_positive,
        negative_weight / (dknn_output.size - is_positive))
    loss = (dknn_output * amplification).sum() / weight_factor
    if num_neighbour_agnostic:
        loss = loss * dknn_output.shape[1]
    return loss


if __name__ == "__main__":
    key = jax.random.PRNGKey(0)
    kq, kn, kd, kt, kd2, kt2, kd3, kt3 = jax.random.split(key, 8)

    # --- DKNN forward (deterministic / euclidean) ----------------------------
    M, N, D, k, tau = 256, 128, 32, 4, 16.0           # 2 query tiles of 128
    query = 0.1 * jax.random.normal(kq, (M, D), dtype=jnp.float32)
    neighbors = 0.1 * jax.random.normal(kn, (N, D), dtype=jnp.float32)

    topk = jax.block_until_ready(dknn_topk(query, neighbors, k=k, tau=tau))
    topk_ref = _dknn_topk_reference(query, neighbors, k=k, tau=tau)
    assert topk.shape == (M, N)
    assert jnp.allclose(topk, topk_ref, rtol=5e-3, atol=2e-3), (
        float(jnp.max(jnp.abs(topk - topk_ref))))

    pos_w, neg_w = 2.0, 1.0

    # --- DKNN sparse-weighted loss, small (single-block fast path) -----------
    B, K = 16, 32
    dknn_output = jax.random.uniform(kd, (B, K), dtype=jnp.float32)
    truth = (jax.random.uniform(kt, (B, K)) < 0.15).astype(jnp.float32)
    loss = jax.block_until_ready(dknn_loss_sparse_weighted(
        dknn_output, truth, positive_weight=pos_w, negative_weight=neg_w))
    loss_ref = _loss_reference(dknn_output, truth, positive_weight=pos_w,
                               negative_weight=neg_w)
    assert jnp.allclose(loss, loss_ref, rtol=1e-4, atol=1e-6), (loss, loss_ref)

    # --- DKNN loss, larger case (multi-block, parallel grid, no padding) -----
    B2, K2 = 512, 512
    dknn2 = jax.random.uniform(kd2, (B2, K2), dtype=jnp.float32)
    truth2 = (jax.random.uniform(kt2, (B2, K2)) < 0.1).astype(jnp.float32)
    loss2 = jax.block_until_ready(dknn_loss_sparse_weighted(
        dknn2, truth2, positive_weight=pos_w, negative_weight=neg_w))
    loss2_ref = _loss_reference(dknn2, truth2, positive_weight=pos_w,
                                negative_weight=neg_w)
    assert jnp.allclose(loss2, loss2_ref, rtol=1e-3, atol=1e-4), (loss2, loss2_ref)

    # --- DKNN loss, ragged batch (exercises in-kernel row mask) --------------
    B3, K3 = 100, 48
    dknn3 = jax.random.uniform(kd3, (B3, K3), dtype=jnp.float32)
    truth3 = (jax.random.uniform(kt3, (B3, K3)) < 0.2).astype(jnp.float32)
    loss3 = jax.block_until_ready(dknn_loss_sparse_weighted(
        dknn3, truth3, positive_weight=pos_w, negative_weight=neg_w,
        block_rows=32))
    loss3_ref = _loss_reference(dknn3, truth3, positive_weight=pos_w,
                                negative_weight=neg_w)
    assert jnp.allclose(loss3, loss3_ref, rtol=1e-3, atol=1e-5), (loss3, loss3_ref)

    print("KERNEL_OK")
</pallas_src>

<mosaic_0001>
module attributes {stable_mosaic.version = 11 : i64} {
  func.func @_dknn_topk_kernel(%arg0: i32, %arg1: memref<32x128xf32, #tpu.memory_space<vmem>>, %arg2: memref<128x32xf32, #tpu.memory_space<vmem>>, %arg3: memref<128x128xf32, #tpu.memory_space<vmem>>, %arg4: memref<128x128xf32, #tpu.memory_space<vmem>>, %arg5: memref<128x128xf32, #tpu.memory_space<vmem>>) attributes {dimension_semantics = [#tpu.dimension_semantics<parallel>], iteration_bounds = array<i64: 2>, scalar_prefetch = 0 : i64, scratch_operands = 2 : i64, tpu.core_type = #tpu.core_type<tc>, window_params = [{transform_indices = @transform_0, window_bounds = array<i64: 32, 128>}, {pipeline_mode = #tpu.pipeline_mode<synchronous>, transform_indices = @transform_1, window_bounds = array<i64: 128, 32>}, {transform_indices = @transform_2, window_bounds = array<i64: 128, 128>}]} {
    %c0 = arith.constant 0 : index
    %c0_0 = arith.constant 0 : index
    %0 = vector.load %arg1[%c0, %c0_0] : memref<32x128xf32, #tpu.memory_space<vmem>>, vector<32x128xf32>
    %c0_1 = arith.constant 0 : index
    %c0_2 = arith.constant 0 : index
    %1 = vector.load %arg2[%c0_1, %c0_2] : memref<128x32xf32, #tpu.memory_space<vmem>>, vector<128x32xf32>
    %cst = arith.constant dense<0.000000e+00> : vector<128x128xf32>
    %2 = tpu.matmul %1, %0, %cst {dimension_numbers = #tpu.dot_dimension_numbers<[1], [0], [0], [1], [0, 0, 1, 1], [], []>} : vector<128x32xf32>, vector<32x128xf32>, vector<128x128xf32> -> vector<128x128xf32>
    %3 = arith.mulf %1, %1 : vector<128x32xf32>
    %cst_3 = arith.constant dense<0.000000e+00> : vector<128xf32>
    %4 = vector.multi_reduction <add>, %3, %cst_3 [1] : vector<128x32xf32> to vector<128xf32>
    %5 = vector.shape_cast %4 : vector<128xf32> to vector<128x1xf32>
    %6 = arith.mulf %0, %0 : vector<32x128xf32>
    %cst_4 = arith.constant dense<0.000000e+00> : vector<128xf32>
    %7 = vector.multi_reduction <add>, %6, %cst_4 [0] : vector<32x128xf32> to vector<128xf32>
    %8 = vector.shape_cast %7 : vector<128xf32> to vector<1x128xf32>
    %cst_5 = arith.constant 2.000000e+00 : f32
    %9 = vector.broadcast %cst_5 : f32 to vector<128x128xf32>
    %10 = arith.mulf %9, %2 : vector<128x128xf32>
    %11 = vector.broadcast %5 : vector<128x1xf32> to vector<128x128xf32>
    %12 = arith.subf %10, %11 : vector<128x128xf32>
    %13 = vector.broadcast %8 : vector<1x128xf32> to vector<128x128xf32>
    %14 = arith.subf %12, %13 : vector<128x128xf32>
    %c0_6 = arith.constant 0 : index
    %c0_7 = arith.constant 0 : index
    %15 = vector.load %arg4[%c0_6, %c0_7] : memref<128x128xf32, #tpu.memory_space<vmem>>, vector<128x128xf32>
    tpu.vector_store %arg4[%c0_6, %c0_7], %14 {strides = array<i32>} : memref<128x128xf32, #tpu.memory_space<vmem>>, vector<128x128xf32>,
    %c0_8 = arith.constant 0 : index
    %c0_9 = arith.constant 0 : index
    %16 = vector.load %arg4[%c0_8, %c0_9] : memref<128x128xf32, #tpu.memory_space<vmem>>, vector<128x128xf32>
    %cst_10 = arith.constant 0.000000e+00 : f32
    %17 = vector.broadcast %cst_10 : f32 to vector<128x128xf32>
    %c0_11 = arith.constant 0 : index
    %c0_12 = arith.constant 0 : index
    %18 = vector.load %arg5[%c0_11, %c0_12] : memref<128x128xf32, #tpu.memory_space<vmem>>, vector<128x128xf32>
    tpu.vector_store %arg5[%c0_11, %c0_12], %17 {strides = array<i32>} : memref<128x128xf32, #tpu.memory_space<vmem>>, vector<128x128xf32>,
    %c0_i32 = arith.constant 0 : i32
    %c8_i32 = arith.constant 8 : i32
    %19 = arith.addi %c0_i32, %c8_i32 : i32
    %c1_i32 = arith.constant 1 : i32
    scf.for %arg6 = %c0_i32 to %19 step %c1_i32  : i32 {
      %c16_i32 = arith.constant 16 : i32
      %83 = arith.muli %arg6, %c16_i32 : i32
      %84 = tpu.assume_multiple %83, 16 : i32
      %85 = arith.index_cast %84 : i32 to index
      %c0_33 = arith.constant 0 : index
      %86 = vector.load %arg4[%85, %c0_33] : memref<128x128xf32, #tpu.memory_space<vmem>>, vector<16x128xf32>
      %87 = vector.shape_cast %16 : vector<128x128xf32> to vector<128x1x128xf32>
      %88 = vector.shape_cast %86 : vector<16x128xf32> to vector<1x16x128xf32>
      %89 = vector.broadcast %87 : vector<128x1x128xf32> to vector<128x16x128xf32>
      %90 = vector.broadcast %88 : vector<1x16x128xf32> to vector<128x16x128xf32>
      %91 = arith.subf %89, %90 : vector<128x16x128xf32>
      %92 = math.absf %91 : vector<128x16x128xf32>
      %c0_34 = arith.constant 0 : index
      %c0_35 = arith.constant 0 : index
      %93 = vector.load %arg5[%c0_34, %c0_35] : memref<128x128xf32, #tpu.memory_space<vmem>>, vector<128x128xf32>
      %cst_36 = arith.constant dense<0.000000e+00> : vector<128x128xf32>
      %94 = vector.multi_reduction <add>, %92, %cst_36 [1] : vector<128x16x128xf32> to vector<128x128xf32>
      %95 = arith.addf %93, %94 : vector<128x128xf32>
      %c0_37 = arith.constant 0 : index
      %c0_38 = arith.constant 0 : index
      %96 = vector.load %arg5[%c0_37, %c0_38] : memref<128x128xf32, #tpu.memory_space<vmem>>, vector<128x128xf32>
      tpu.vector_store %arg5[%c0_37, %c0_38], %95 {strides = array<i32>} : memref<128x128xf32, #tpu.memory_space<vmem>>, vector<128x128xf32>,
    }
    %c8_i32_13 = arith.constant 8 : i32
    %c0_14 = arith.constant 0 : index
    %c0_15 = arith.constant 0 : index
    %20 = vector.load %arg5[%c0_14, %c0_15] : memref<128x128xf32, #tpu.memory_space<vmem>>, vector<128x128xf32>
    %cst_16 = arith.constant 6.250000e-02 : f32
    %21 = vector.broadcast %cst_16 : f32 to vector<128x128xf32>
    %22 = arith.mulf %16, %21 : vector<128x128xf32>
    %cst_17 = arith.constant 6.250000e-02 : f32
    %23 = vector.broadcast %cst_17 : f32 to vector<128x128xf32>
    %24 = arith.mulf %20, %23 : vector<128x128xf32>
    %cst_18 = arith.constant 0.000000e+00 : f32
    %25 = vector.broadcast %cst_18 : f32 to vector<128x128xf32>
    %cst_19 = arith.constant 1.270000e+02 : f32
    %26 = vector.broadcast %cst_19 : f32 to vector<128x128xf32>
    %27 = arith.mulf %26, %22 : vector<128x128xf32>
    %28 = arith.subf %27, %24 : vector<128x128xf32>
    %cst_20 = arith.constant dense<0xFF800000> : vector<128xf32>
    %29 = vector.multi_reduction <maximumf>, %28, %cst_20 [0] : vector<128x128xf32> to vector<128xf32>
    %30 = vector.shape_cast %29 : vector<128xf32> to vector<1x128xf32>
    %31 = vector.broadcast %30 : vector<1x128xf32> to vector<128x128xf32>
    %32 = arith.subf %28, %31 : vector<128x128xf32>
    %33 = math.exp %32 : vector<128x128xf32>
    %cst_21 = arith.constant dense<0.000000e+00> : vector<128xf32>
    %34 = vector.multi_reduction <add>, %33, %cst_21 [0] : vector<128x128xf32> to vector<128xf32>
    %35 = vector.shape_cast %34 : vector<128xf32> to vector<1x128xf32>
    %36 = tpu.reciprocal %35 {approx = true} : vector<1x128xf32> -> vector<1x128xf32>
    %37 = vector.broadcast %36 : vector<1x128xf32> to vector<128x128xf32>
    %38 = arith.mulf %33, %37 : vector<128x128xf32>
    %39 = arith.addf %25, %38 : vector<128x128xf32>
    %cst_22 = arith.constant 1.250000e+02 : f32
    %40 = vector.broadcast %cst_22 : f32 to vector<128x128xf32>
    %41 = arith.mulf %40, %22 : vector<128x128xf32>
    %42 = arith.subf %41, %24 : vector<128x128xf32>
    %cst_23 = arith.constant dense<0xFF800000> : vector<128xf32>
    %43 = vector.multi_reduction <maximumf>, %42, %cst_23 [0] : vector<128x128xf32> to vector<128xf32>
    %44 = vector.shape_cast %43 : vector<128xf32> to vector<1x128xf32>
    %45 = vector.broadcast %44 : vector<1x128xf32> to vector<128x128xf32>
    %46 = arith.subf %42, %45 : vector<128x128xf32>
    %47 = math.exp %46 : vector<128x128xf32>
    %cst_24 = arith.constant dense<0.000000e+00> : vector<128xf32>
    %48 = vector.multi_reduction <add>, %47, %cst_24 [0] : vector<128x128xf32> to vector<128xf32>
    %49 = vector.shape_cast %48 : vector<128xf32> to vector<1x128xf32>
    %50 = tpu.reciprocal %49 {approx = true} : vector<1x128xf32> -> vector<1x128xf32>
    %51 = vector.broadcast %50 : vector<1x128xf32> to vector<128x128xf32>
    %52 = arith.mulf %47, %51 : vector<128x128xf32>
    %53 = arith.addf %39, %52 : vector<128x128xf32>
    %cst_25 = arith.constant 1.230000e+02 : f32
    %54 = vector.broadcast %cst_25 : f32 to vector<128x128xf32>
    %55 = arith.mulf %54, %22 : vector<128x128xf32>
    %56 = arith.subf %55, %24 : vector<128x128xf32>
    %cst_26 = arith.constant dense<0xFF800000> : vector<128xf32>
    %57 = vector.multi_reduction <maximumf>, %56, %cst_26 [0] : vector<128x128xf32> to vector<128xf32>
    %58 = vector.shape_cast %57 : vector<128xf32> to vector<1x128xf32>
    %59 = vector.broadcast %58 : vector<1x128xf32> to vector<128x128xf32>
    %60 = arith.subf %56, %59 : vector<128x128xf32>
    %61 = math.exp %60 : vector<128x128xf32>
    %cst_27 = arith.constant dense<0.000000e+00> : vector<128xf32>
    %62 = vector.multi_reduction <add>, %61, %cst_27 [0] : vector<128x128xf32> to vector<128xf32>
    %63 = vector.shape_cast %62 : vector<128xf32> to vector<1x128xf32>
    %64 = tpu.reciprocal %63 {approx = true} : vector<1x128xf32> -> vector<1x128xf32>
    %65 = vector.broadcast %64 : vector<1x128xf32> to vector<128x128xf32>
    %66 = arith.mulf %61, %65 : vector<128x128xf32>
    %67 = arith.addf %53, %66 : vector<128x128xf32>
    %cst_28 = arith.constant 1.210000e+02 : f32
    %68 = vector.broadcast %cst_28 : f32 to vector<128x128xf32>
    %69 = arith.mulf %68, %22 : vector<128x128xf32>
    %70 = arith.subf %69, %24 : vector<128x128xf32>
    %cst_29 = arith.constant dense<0xFF800000> : vector<128xf32>
    %71 = vector.multi_reduction <maximumf>, %70, %cst_29 [0] : vector<128x128xf32> to vector<128xf32>
    %72 = vector.shape_cast %71 : vector<128xf32> to vector<1x128xf32>
    %73 = vector.broadcast %72 : vector<1x128xf32> to vector<128x128xf32>
    %74 = arith.subf %70, %73 : vector<128x128xf32>
    %75 = math.exp %74 : vector<128x128xf32>
    %cst_30 = arith.constant dense<0.000000e+00> : vector<128xf32>
    %76 = vector.multi_reduction <add>, %75, %cst_30 [0] : vector<128x128xf32> to vector<128xf32>
    %77 = vector.shape_cast %76 : vector<128xf32> to vector<1x128xf32>
    %78 = tpu.reciprocal %77 {approx = true} : vector<1x128xf32> -> vector<1x128xf32>
    %79 = vector.broadcast %78 : vector<1x128xf32> to vector<128x128xf32>
    %80 = arith.mulf %75, %79 : vector<128x128xf32>
    %81 = arith.addf %67, %80 : vector<128x128xf32>
    %c0_31 = arith.constant 0 : index
    %c0_32 = arith.constant 0 : index
    %82 = vector.load %arg3[%c0_31, %c0_32] : memref<128x128xf32, #tpu.memory_space<vmem>>, vector<128x128xf32>
    tpu.vector_store %arg3[%c0_31, %c0_32], %81 {strides = array<i32>} : memref<128x128xf32, #tpu.memory_space<vmem>>, vector<128x128xf32>,
    return
  }
  func.func @transform_0(%arg0: i32) -> (i32, i32) {
    %c0_i32 = arith.constant 0 : i32
    %c0_i32_0 = arith.constant 0 : i32
    return %c0_i32, %arg0 : i32, i32
  }
  func.func @transform_1(%arg0: i32) -> (i32, i32) {
    %c0_i32 = arith.constant 0 : i32
    %c0_i32_0 = arith.constant 0 : i32
    %c0_i32_1 = arith.constant 0 : i32
    return %c0_i32, %c0_i32_0 : i32, i32
  }
  func.func @transform_2(%arg0: i32) -> (i32, i32) {
    %c0_i32 = arith.constant 0 : i32
    %c0_i32_0 = arith.constant 0 : i32
    return %c0_i32, %arg0 : i32, i32
  }
}

</mosaic_0001>

<llo_original>
// kernel: tpu_custom_call.1
$region0: #{tpu_custom_call.1}
  #allocation0 [shape = 'u32[]', space=smem, size = 0x4, offset = 0x4, fixed_abs, tag = 'smem constant byte address 0x4 - core index']
  #allocation1 [shape = 'u32[144,128]{1,0:T(1,128)}', space=vmem, size = 0x12000, scoped, tag = 'internal scratch']
  #allocation2 [shape = 'f32[128,128]{1,0:T(8,128)}', space=vmem, size = 0x10000, scoped, tag = 'scratch operand']
  #allocation3 [shape = 'f32[128,128]{1,0:T(8,128)}', space=vmem, size = 0x10000, scoped, tag = 'scratch operand']
  %s0 = inlined_call_operand.vmem [shape: f32[32,256], index: 0, kind: input, shape index: {}]
  %s1 = inlined_call_operand.vmem [shape: f32[128,32], index: 1, kind: input, shape index: {}]
  %s2 = inlined_call_operand.hbm [shape: f32[128,256], index: 2, kind: output, shape index: {}]
  %s3 = sld [smem:[#allocation0]]
  $region86: #{tpu_custom_call.1} parent=0
    _
  %s5 = ssub.s32 1, %s3
  %s6 = scalar_select 0, %s5, %s3
  $region1: #{tpu_custom_call.1} parent=0
    #allocation4 [shape = 'u8[32768]{0}', space=vmem, size = 0x8000, scoped, tag = 'input window, operand 0']
    #allocation5 [shape = 'u8[131072]{0}', space=vmem, size = 0x20000, scoped, tag = 'output window, operand 0']
    #allocation6 [shape = 's32[2]{0}', space=sflag, size = 0x8, scoped, tag = 'scoped memory for tpu_custom_call.1']
    %7 = vsyncpa [#allocation6], 0
    %s8 = scalar_lea.sflag [#allocation6], 1
    %9 = vsyncpa %s8, 0
    loop: start=0, step=1, limit=4
    $region2: #{tpu_custom_call.1} parent=1 // loop_pre_header
      _
    $region3: #{tpu_custom_call.1} parent=1 // loop_header
      %s11 = sphi 0, %s15
      %p12 = scmp.ge.s32.totalorder %s11, 4
      %s21 = sphi 0, %s23
      %s24 = sphi 0, %s21
      %s25 = sphi 0, %s24
      %s41 = sphi 0, %s25
      %s45 = sphi 0, %s45
      %s47 = sphi 0, %s45
      %s48 = sphi 0, %s47
      %s62 = sphi 0, %s48
      %s68 = sphi 0, %s70
      %s71 = sphi 0, %s68
      %s72 = sphi 0, %s71
      %s88 = sphi 0, %s72
    $region4: #{tpu_custom_call.1} parent=1 // loop_header_branch
      %14 = sbr.rel (%p12) target = $region8
    $region5: #{tpu_custom_call.1} parent=1 // loop_body
      %s16 = ssub.s32 %s11, 1
      %s17 = ssub.s32 %s11, 2
      %s18 = sadd.s32 %s11, 1
      %s19 = ssub.s32 %s11, %s18
      %p20 = scmp.eq.s32.totalorder %s19, 0
      %s22 = sadd.s32 %s21, 1
      %s23 = scalar_select %p20, %s21, %s22
      %p26 = pneg %p20
      %p27 = scmp.eq.s32.totalorder %s11, 1
      %p28 = por %p26, %p27
      %p29 = scmp.ne.s32.totalorder %s21, %s24
      %p30 = scmp.eq.s32.totalorder %s11, 0
      %p31 = por %p29, %p30
      %p32 = scmp.ne.s32.totalorder %s21, %s24
      %p33 = scmp.eq.s32.totalorder %s16, 1
      %p34 = por %p32, %p33
      %p35 = scmp.ne.s32.totalorder %s24, %s25
      %p36 = scmp.eq.s32.totalorder %s16, 0
      %p37 = por %p35, %p36
      %p38 = scmp.ne.s32.totalorder %s24, %s25
      %p39 = scmp.eq.s32.totalorder %s17, 1
      %p40 = por %p38, %p39
      %p42 = scmp.ne.s32.totalorder %s25, %s41
      %p43 = scmp.eq.s32.totalorder %s17, 0
      %p44 = por %p42, %p43
      %s46 = sadd.s32 %s45, 1
      %p49 = scmp.eq.s32.totalorder %s11, 1
      %p50 = scmp.ne.s32.totalorder %s45, %s47
      %p51 = scmp.eq.s32.totalorder %s11, 0
      %p52 = por %p50, %p51
      %p53 = scmp.ne.s32.totalorder %s45, %s47
      %p54 = scmp.eq.s32.totalorder %s16, 1
      %p55 = por %p53, %p54
      %p56 = scmp.ne.s32.totalorder %s47, %s48
      %p57 = scmp.eq.s32.totalorder %s16, 0
      %p58 = por %p56, %p57
      %p59 = scmp.ne.s32.totalorder %s47, %s48
      %p60 = scmp.eq.s32.totalorder %s17, 1
      %p61 = por %p59, %p60
      %p63 = scmp.ne.s32.totalorder %s48, %s62
      %p64 = scmp.eq.s32.totalorder %s17, 0
      %p65 = por %p63, %p64
      %s66 = ssub.s32 %s11, %s18
      %p67 = scmp.eq.s32.totalorder %s66, 0
      %s69 = sadd.s32 %s68, 1
      %s70 = scalar_select %p67, %s68, %s69
      %p73 = pneg %p67
      %p74 = scmp.eq.s32.totalorder %s11, 1
      %p75 = por %p73, %p74
      %p76 = scmp.ne.s32.totalorder %s68, %s71
      %p77 = scmp.eq.s32.totalorder %s11, 0
      %p78 = por %p76, %p77
      %p79 = scmp.ne.s32.totalorder %s68, %s71
      %p80 = scmp.eq.s32.totalorder %s16, 1
      %p81 = por %p79, %p80
      %p82 = scmp.ne.s32.totalorder %s71, %s72
      %p83 = scmp.eq.s32.totalorder %s16, 0
      %p84 = por %p82, %p83
      %p85 = scmp.ne.s32.totalorder %s71, %s72
      %p86 = scmp.eq.s32.totalorder %s17, 1
      %p87 = por %p85, %p86
      %p89 = scmp.ne.s32.totalorder %s72, %s88
      %p90 = scmp.eq.s32.totalorder %s17, 0
      %p91 = por %p89, %p90
      %p92 = scmp.le.s32.totalorder 1, %s11
      %p93 = scmp.lt.s32.totalorder %s11, 3
      %p94 = pnand %p92, %p93
      %p95 = pneg %p94
      // Predicated region
      $region9: #{tpu_custom_call.1} parent=5 // pred_check
        _
      $region10: #{tpu_custom_call.1} parent=5 // pred_check_branch
        %97 = sbr.rel (%p94) target = $region12
      $region11: #{tpu_custom_call.1} parent=5 // pred_region
        %s98 = ssub.s32 %s11, 1
        // Predicated region
        $region13: #{tpu_custom_call.1} parent=11 // pred_check
          %p99 = pneg %p58
        $region14: #{tpu_custom_call.1} parent=11 // pred_check_branch
          %101 = sbr.rel (%p99) target = $region16
        $region15: #{tpu_custom_call.1} parent=11 // pred_region
          _
        $region16: #{tpu_custom_call.1} parent=11 // pred_fallthru
          _
      $region12: #{tpu_custom_call.1} parent=5 // pred_fallthru
        _
      %p102 = scmp.lt.s32.totalorder %s11, 2
      // Predicated region
      $region17: #{tpu_custom_call.1} parent=5 // pred_check
        %p103 = pneg %p102
      $region18: #{tpu_custom_call.1} parent=5 // pred_check_branch
        %105 = sbr.rel (%p103) target = $region20
      $region19: #{tpu_custom_call.1} parent=5 // pred_region
        // Predicated region
        $region21: #{tpu_custom_call.1} parent=19 // pred_check
          %p106 = pneg %p31
        $region22: #{tpu_custom_call.1} parent=19 // pred_check_branch
          %108 = sbr.rel (%p106) target = $region24
        $region23: #{tpu_custom_call.1} parent=19 // pred_region
          %s109 = sand.u32 %s21, 1
          %s110 = sand.u32 %s21, 1
          %s111 = smul.addr %s110, 32
          %s112 = scalar_lea.vmem [#allocation4], %s111
          %s113 = smul.addr %s11, 8
          %s114 = scalar_lea.vmem %s0, %s113
          // Predicated region
          $region25: #{tpu_custom_call.1} parent=23 // pred_check
            _
          $region26: #{tpu_custom_call.1} parent=23 // pred_check_branch
            %116 = sbr.rel (0) target = $region28
          $region27: #{tpu_custom_call.1} parent=23 // pred_region
            // Predicated region
            $region29: #{tpu_custom_call.1} parent=27 // pred_check
              _
            $region30: #{tpu_custom_call.1} parent=27 // pred_check_branch
              %118 = sbr.rel (0) target = $region32
            $region31: #{tpu_custom_call.1} parent=27 // pred_region
              // Predicated region
              $region44: #{tpu_custom_call.1} parent=31 // pred_check
                _
              $region45: #{tpu_custom_call.1} parent=31 // pred_check_branch
                %139 = sbr.rel (0) target = $region47
              $region46: #{tpu_custom_call.1} parent=31 // pred_region
                loop: start=0, step=1, limit=1
                $region48: #{tpu_custom_call.1} parent=46 // loop_pre_header
                  _
                $region49: #{tpu_custom_call.1} parent=46 // loop_header
                  %s141 = sphi 0, %s145
                  %p142 = scmp.ge.s32.totalorder %s141, 1
                  %s146 = sphi %s114, %s114
                  %s147 = sphi %s112, %s112
                $region50: #{tpu_custom_call.1} parent=46 // loop_header_branch
                  %144 = sbr.rel (%p142) target = $region54
                $region51: #{tpu_custom_call.1} parent=46 // loop_body
                  %v148 = vld [vmem:[%s146] sm:$0xff]
                  %149 = vst [vmem:[%s147] sm:$0xff] %v148
                  %v150 = vld [vmem:[%s146 + $0x10] sm:$0xff]
                  %151 = vst [vmem:[%s147 + $0x8] sm:$0xff] %v150
                  %v152 = vld [vmem:[%s146 + $0x20] sm:$0xff]
                  %153 = vst [vmem:[%s147 + $0x10] sm:$0xff] %v152
                  %v154 = vld [vmem:[%s146 + $0x30] sm:$0xff]
                  %155 = vst [vmem:[%s147 + $0x18] sm:$0xff] %v154
                $region52: #{tpu_custom_call.1} parent=46 // loop_footer
                  %s145 = sadd.s32 1, %s141
                $region53: #{tpu_custom_call.1} parent=46 // loop_footer_branch
                  %140 = sbr.rel target = $region49
                $region54: #{tpu_custom_call.1} parent=46 // loop_exit
                  _
              $region47: #{tpu_custom_call.1} parent=31 // pred_fallthru
                _
              // Predicated region
              $region55: #{tpu_custom_call.1} parent=31 // pred_check
                _
              $region56: #{tpu_custom_call.1} parent=31 // pred_check_branch
                %157 = sbr.rel target = $region58
              $region57: #{tpu_custom_call.1} parent=31 // pred_region
                _
              $region58: #{tpu_custom_call.1} parent=31 // pred_fallthru
                _
            $region32: #{tpu_custom_call.1} parent=27 // pred_fallthru
              _
            // Predicated region
            $region33: #{tpu_custom_call.1} parent=27 // pred_check
              _
            $region34: #{tpu_custom_call.1} parent=27 // pred_check_branch
              %120 = sbr.rel target = $region36
            $region35: #{tpu_custom_call.1} parent=27 // pred_region
              loop: start=0, step=1, limit=1
              $region37: #{tpu_custom_call.1} parent=35 // loop_pre_header
                _
              $region38: #{tpu_custom_call.1} parent=35 // loop_header
                %s123 = sphi 0, %s127
                %p124 = scmp.ge.s32.totalorder %s123, 1
                %s128 = sphi %s114, %s114
                %s129 = sphi %s112, %s112
              $region39: #{tpu_custom_call.1} parent=35 // loop_header_branch
                %126 = sbr.rel (%p124) target = $region43
              $region40: #{tpu_custom_call.1} parent=35 // loop_body
                %v130 = vld [vmem:[%s128] sm:$0xff]
                %131 = vst [vmem:[%s129] sm:$0xff] %v130
                %v132 = vld [vmem:[%s128 + $0x10] sm:$0xff]
                %133 = vst [vmem:[%s129 + $0x8] sm:$0xff] %v132
                %v134 = vld [vmem:[%s128 + $0x20] sm:$0xff]
                %135 = vst [vmem:[%s129 + $0x10] sm:$0xff] %v134
                %v136 = vld [vmem:[%s128 + $0x30] sm:$0xff]
                %137 = vst [vmem:[%s129 + $0x18] sm:$0xff] %v136
              $region41: #{tpu_custom_call.1} parent=35 // loop_footer
                %s127 = sadd.s32 1, %s123
              $region42: #{tpu_custom_call.1} parent=35 // loop_footer_branch
                %122 = sbr.rel target = $region38
              $region43: #{tpu_custom_call.1} parent=35 // loop_exit
                _
            $region36: #{tpu_custom_call.1} parent=27 // pred_fallthru
              _
          $region28: #{tpu_custom_call.1} parent=23 // pred_fallthru
            _
          %158 = vnop
        $region24: #{tpu_custom_call.1} parent=19 // pred_fallthru
          _
      $region20: #{tpu_custom_call.1} parent=5 // pred_fallthru
        _
      %p159 = scmp.le.s32.totalorder 1, %s11
      %p160 = scmp.lt.s32.totalorder %s11, 3
      %p161 = pnand %p159, %p160
      %p162 = pneg %p161
      // Predicated region
      $region59: #{tpu_custom_call.1} parent=5 // pred_check
        _
      $region60: #{tpu_custom_call.1} parent=5 // pred_check_branch
        %164 = sbr.rel (%p161) target = $region62
      $region61: #{tpu_custom_call.1} parent=5 // pred_region
        %s165 = ssub.s32 %s11, 1
        %s166 = sand.u32 %s24, 1
        %s167 = sand.u32 %s24, 1
        %s168 = smul.addr %s167, 32
        %s169 = scalar_lea.vmem [#allocation4], %s168
        // Predicated region
        $region63: #{tpu_custom_call.1} parent=61 // pred_check
          %p170 = pneg %p37
        $region64: #{tpu_custom_call.1} parent=61 // pred_check_branch
          %172 = sbr.rel (%p170) target = $region66
        $region65: #{tpu_custom_call.1} parent=61 // pred_region
          _
        $region66: #{tpu_custom_call.1} parent=61 // pred_fallthru
          _
        %s173 = sand.u32 %s24, 1
        %s174 = sand.u32 %s24, 1
        %s175 = smul.addr %s174, 32
        %s176 = scalar_lea.vmem [#allocation4], %s175
        %p177 = pneg %p37
        %p178 = pneg %p34
        %p179 = pneg %p58
        %p180 = pneg %p55
        %p181 = pneg %p84
        %p182 = pneg %p81
        %s183 = sand.u32 %s71, 1
        %s184 = scalar_lea.sflag [#allocation6], %s183
        %s185 = sand.u32 %s71, 1
        %s186 = smul.addr %s185, 128
        %s187 = scalar_lea.vmem [#allocation5], %s186
        %v188 = vld [vmem:[%s169] sm:$0xff]
        %v189 = vld [vmem:[%s169 + $0x8] sm:$0xff]
        %v190 = vld [vmem:[%s169 + $0x10] sm:$0xff]
        %v191 = vld [vmem:[%s169 + $0x18] sm:$0xff]
        %v192 = vld [vmem:[%s1] sm:$0xff]
        %v193 = vld [vmem:[%s1 + $0x8] sm:$0xff]
        %v194 = vld [vmem:[%s1 + $0x10] sm:$0xff]
        %v195 = vld [vmem:[%s1 + $0x18] sm:$0xff]
        %v196 = vld [vmem:[%s1 + $0x20] sm:$0xff]
        %v197 = vld [vmem:[%s1 + $0x28] sm:$0xff]
        %v198 = vld [vmem:[%s1 + $0x30] sm:$0xff]
        %v199 = vld [vmem:[%s1 + $0x38] sm:$0xff]
        %v200 = vld [vmem:[%s1 + $0x40] sm:$0xff]
        %v201 = vld [vmem:[%s1 + $0x48] sm:$0xff]
        %v202 = vld [vmem:[%s1 + $0x50] sm:$0xff]
        %v203 = vld [vmem:[%s1 + $0x58] sm:$0xff]
        %v204 = vld [vmem:[%s1 + $0x60] sm:$0xff]
        %v205 = vld [vmem:[%s1 + $0x68] sm:$0xff]
        %v206 = vld [vmem:[%s1 + $0x70] sm:$0xff]
        %v207 = vld [vmem:[%s1 + $0x78] sm:$0xff]
        %vm208 = vcmask 261120
        %v210 = vsel %vm208, %v192, 0
        %v213 = vsel %vm208, %v193, 0
        %v216 = vsel %vm208, %v194, 0
        %v219 = vsel %vm208, %v195, 0
        %v222 = vsel %vm208, %v196, 0
        %v225 = vsel %vm208, %v197, 0
        %v228 = vsel %vm208, %v198, 0
        %v231 = vsel %vm208, %v199, 0
        %v234 = vsel %vm208, %v200, 0
        %v237 = vsel %vm208, %v201, 0
        %v240 = vsel %vm208, %v202, 0
        %v243 = vsel %vm208, %v203, 0
        %v246 = vsel %vm208, %v204, 0
        %v249 = vsel %vm208, %v205, 0
        %v252 = vsel %vm208, %v206, 0
        %v255 = vsel %vm208, %v207, 0
        %257 = vmatprep.subr.mxu0 0.0
        %258 = vmatpush1.msra.mxu0 %v188
        %259 = vmatprep.subr.mxu0 0.0
        %260 = vmatpush1.msra.mxu0 %v189
        %261 = vmatprep.subr.mxu0 0.0
        %262 = vmatpush1.msra.mxu0 %v190
        %263 = vmatprep.subr.mxu0 0.0
        %264 = vmatpush1.msra.mxu0 %v191
        %265 = vmatprep.subr.mxu0 0.0
        %266 = vmatpush1.msra.mxu0 0.0
        %267 = vmatprep.subr.mxu0 0.0
        %268 = vmatpush1.msra.mxu0 0.0
        %269 = vmatprep.subr.mxu0 0.0
        %270 = vmatpush1.msra.mxu0 0.0
        %271 = vmatprep.subr.mxu0 0.0
        %272 = vmatpush1.msra.mxu0 0.0
        %273 = vmatprep.subr.mxu0 0.0
        %274 = vmatpush1.msra.mxu0 0.0
        %275 = vmatprep.subr.mxu0 0.0
        %276 = vmatpush1.msra.mxu0 0.0
        %277 = vmatprep.subr.mxu0 0.0
        %278 = vmatpush1.msra.mxu0 0.0
        %279 = vmatprep.subr.mxu0 0.0
        %280 = vmatpush1.msra.mxu0 0.0
        %281 = vmatprep.subr.mxu0 0.0
        %282 = vmatpush1.msra.mxu0 0.0
        %283 = vmatprep.subr.mxu0 0.0
        %284 = vmatpush1.msra.mxu0 0.0
        %285 = vmatprep.subr.mxu0 0.0
        %286 = vmatpush1.msra.mxu0 0.0
        %287 = vmatprep.subr.mxu0 0.0
        %288 = vmatpush1.msra.mxu0 0.0
        %289 = vmatprep.subr.mxu0 0.0
        %290 = vmatpush1.msra.mxu0 0.0
        %291 = vmatprep.subr.mxu0 0.0
        %292 = vmatpush1.msra.mxu0 0.0
        %293 = vmatprep.subr.mxu0 0.0
        %294 = vmatpush1.msra.mxu0 0.0
        %295 = vmatprep.subr.mxu0 0.0
        %296 = vmatpush1.msra.mxu0 0.0
        %297 = vmatprep.subr.mxu0 0.0
        %298 = vmatpush1.msra.mxu0 0.0
        %299 = vmatprep.subr.mxu0 0.0
        %300 = vmatpush1.msra.mxu0 0.0
        %301 = vmatprep.subr.mxu0 0.0
        %302 = vmatpush1.msra.mxu0 0.0
        %303 = vmatprep.subr.mxu0 0.0
        %304 = vmatpush1.msra.mxu0 0.0
        %305 = vmatprep.subr.mxu0 0.0
        %306 = vmatpush1.msra.mxu0 0.0
        %307 = vmatprep.subr.mxu0 0.0
        %308 = vmatpush1.msra.mxu0 0.0
        %309 = vmatprep.subr.mxu0 0.0
        %310 = vmatpush1.msra.mxu0 0.0
        %311 = vmatprep.subr.mxu0 0.0
        %312 = vmatpush1.msra.mxu0 0.0
        %313 = vmatprep.subr.mxu0 0.0
        %314 = vmatpush1.msra.mxu0 0.0
        %315 = vmatprep.subr.mxu0 0.0
        %316 = vmatpush1.msra.mxu0 0.0
        %317 = vmatprep.subr.mxu0 0.0
        %318 = vmatpush1.msra.mxu0 0.0
        %319 = vmatprep.subr.mxu0 0.0
        %320 = vmatpush1.msra.mxu0 0.0
        %321 = vmatprep.mubr.f32.mxu0 0.0
        %322 = vmatmul.mubr.f32.gmra.mrb[0].mxu0 %v210
        %v323 = vpop.f32.mrb[0].mxu0
        %v324 = vadd.f32 0.0, %v323
        %v325 = vpop.f32.mrb[0].mxu0
        %326 = vmatprep.mubr.f32.mxu0 0.0
        %327 = vmatmul.mubr.f32.gmra.mrb[0].mxu0 %v213
        %v328 = vpop.f32.mrb[0].mxu0
        %v329 = vadd.f32 0.0, %v328
        %v330 = vpop.f32.mrb[0].mxu0
        %331 = vmatprep.mubr.f32.mxu0 0.0
        %332 = vmatmul.mubr.f32.gmra.mrb[0].mxu0 %v216
        %v333 = vpop.f32.mrb[0].mxu0
        %v334 = vadd.f32 0.0, %v333
        %v335 = vpop.f32.mrb[0].mxu0
        %336 = vmatprep.mubr.f32.mxu0 0.0
        %337 = vmatmul.mubr.f32.gmra.mrb[0].mxu0 %v219
        %v338 = vpop.f32.mrb[0].mxu0
        %v339 = vadd.f32 0.0, %v338
        %v340 = vpop.f32.mrb[0].mxu0
        %341 = vmatprep.mubr.f32.mxu0 0.0
        %342 = vmatmul.mubr.f32.gmra.mrb[0].mxu0 %v222
        %v343 = vpop.f32.mrb[0].mxu0
        %v344 = vadd.f32 0.0, %v343
        %v345 = vpop.f32.mrb[0].mxu0
        %346 = vmatprep.mubr.f32.mxu0 0.0
        %347 = vmatmul.mubr.f32.gmra.mrb[0].mxu0 %v225
        %v348 = vpop.f32.mrb[0].mxu0
        %v349 = vadd.f32 0.0, %v348
        %v350 = vpop.f32.mrb[0].mxu0
        %351 = vmatprep.mubr.f32.mxu0 0.0
        %352 = vmatmul.mubr.f32.gmra.mrb[0].mxu0 %v228
        %v353 = vpop.f32.mrb[0].mxu0
        %v354 = vadd.f32 0.0, %v353
        %v355 = vpop.f32.mrb[0].mxu0
        %356 = vmatprep.mubr.f32.mxu0 0.0
        %357 = vmatmul.mubr.f32.gmra.mrb[0].mxu0 %v231
        %v358 = vpop.f32.mrb[0].mxu0
        %v359 = vadd.f32 0.0, %v358
        %v360 = vpop.f32.mrb[0].mxu0
        %361 = vmatprep.mubr.f32.mxu0 0.0
        %362 = vmatmul.mubr.f32.gmra.mrb[0].mxu0 %v234
        %v363 = vpop.f32.mrb[0].mxu0
        %v364 = vadd.f32 0.0, %v363
        %v365 = vpop.f32.mrb[0].mxu0
        %366 = vmatprep.mubr.f32.mxu0 0.0
        %367 = vmatmul.mubr.f32.gmra.mrb[0].mxu0 %v237
        %v368 = vpop.f32.mrb[0].mxu0
        %v369 = vadd.f32 0.0, %v368
        %v370 = vpop.f32.mrb[0].mxu0
        %371 = vmatprep.mubr.f32.mxu0 0.0
        %372 = vmatmul.mubr.f32.gmra.mrb[0].mxu0 %v240
        %v373 = vpop.f32.mrb[0].mxu0
        %v374 = vadd.f32 0.0, %v373
        %v375 = vpop.f32.mrb[0].mxu0
        %376 = vmatprep.mubr.f32.mxu0 0.0
        %377 = vmatmul.mubr.f32.gmra.mrb[0].mxu0 %v243
        %v378 = vpop.f32.mrb[0].mxu0
        %v379 = vadd.f32 0.0, %v378
        %v380 = vpop.f32.mrb[0].mxu0
        %381 = vmatprep.mubr.f32.mxu0 0.0
        %382 = vmatmul.mubr.f32.gmra.mrb[0].mxu0 %v246
        %v383 = vpop.f32.mrb[0].mxu0
        %v384 = vadd.f32 0.0, %v383
        %v385 = vpop.f32.mrb[0].mxu0
        %386 = vmatprep.mubr.f32.mxu0 0.0
        %387 = vmatmul.mubr.f32.gmra.mrb[0].mxu0 %v249
        %v388 = vpop.f32.mrb[0].mxu0
        %v389 = vadd.f32 0.0, %v388
        %v390 = vpop.f32.mrb[0].mxu0
        %391 = vmatprep.mubr.f32.mxu0 0.0
        %392 = vmatmul.mubr.f32.gmra.mrb[0].mxu0 %v252
        %v393 = vpop.f32.mrb[0].mxu0
        %v394 = vadd.f32 0.0, %v393
        %v395 = vpop.f32.mrb[0].mxu0
        %396 = vmatprep.mubr.f32.mxu0 0.0
        %397 = vmatmul.mubr.f32.gmra.mrb[0].mxu0 %v255
        %v398 = vpop.f32.mrb[0].mxu0
        %v399 = vadd.f32 0.0, %v398
        %v400 = vpop.f32.mrb[0].mxu0
        %401 = vdwg.mxu0
        %v402 = vmul.f32 %v192, %v192
        %v403 = vmul.f32 %v193, %v193
        %v404 = vmul.f32 %v194, %v194
        %v405 = vmul.f32 %v195, %v195
        %v406 = vmul.f32 %v196, %v196
        %v407 = vmul.f32 %v197, %v197
        %v408 = vmul.f32 %v198, %v198
        %v409 = vmul.f32 %v199, %v199
        %v410 = vmul.f32 %v200, %v200
        %v411 = vmul.f32 %v201, %v201
        %v412 = vmul.f32 %v202, %v202
        %v413 = vmul.f32 %v203, %v203
        %v414 = vmul.f32 %v204, %v204
        %v415 = vmul.f32 %v205, %v205
        %v416 = vmul.f32 %v206, %v206
        %v417 = vmul.f32 %v207, %v207
        %v418 = vsel %vm208, %v402, 0.0
        %419 = vadd.xlane.f32.xlu0 %v418
        %v420 = vpop.xlane.xlu0 %419
        %v421 = vsel %vm208, %v403, 0.0
        %422 = vadd.xlane.f32.xlu0 %v421
        %v423 = vpop.xlane.xlu0 %422
        %v424 = vsel %vm208, %v404, 0.0
        %425 = vadd.xlane.f32.xlu0 %v424
        %v426 = vpop.xlane.xlu0 %425
        %v427 = vsel %vm208, %v405, 0.0
        %428 = vadd.xlane.f32.xlu0 %v427
        %v429 = vpop.xlane.xlu0 %428
        %v430 = vsel %vm208, %v406, 0.0
        %431 = vadd.xlane.f32.xlu0 %v430
        %v432 = vpop.xlane.xlu0 %431
        %v433 = vsel %vm208, %v407, 0.0
        %434 = vadd.xlane.f32.xlu0 %v433
        %v435 = vpop.xlane.xlu0 %434
        %v436 = vsel %vm208, %v408, 0.0
        %437 = vadd.xlane.f32.xlu0 %v436
        %v438 = vpop.xlane.xlu0 %437
        %v439 = vsel %vm208, %v409, 0.0
        %440 = vadd.xlane.f32.xlu0 %v439
        %v441 = vpop.xlane.xlu0 %440
        %v442 = vsel %vm208, %v410, 0.0
        %443 = vadd.xlane.f32.xlu0 %v442
        %v444 = vpop.xlane.xlu0 %443
        %v445 = vsel %vm208, %v411, 0.0
        %446 = vadd.xlane.f32.xlu0 %v445
        %v447 = vpop.xlane.xlu0 %446
        %v448 = vsel %vm208, %v412, 0.0
        %449 = vadd.xlane.f32.xlu0 %v448
        %v450 = vpop.xlane.xlu0 %449
        %v451 = vsel %vm208, %v413, 0.0
        %452 = vadd.xlane.f32.xlu0 %v451
        %v453 = vpop.xlane.xlu0 %452
        %v454 = vsel %vm208, %v414, 0.0
        %455 = vadd.xlane.f32.xlu0 %v454
        %v456 = vpop.xlane.xlu0 %455
        %v457 = vsel %vm208, %v415, 0.0
        %458 = vadd.xlane.f32.xlu0 %v457
        %v459 = vpop.xlane.xlu0 %458
        %v460 = vsel %vm208, %v416, 0.0
        %461 = vadd.xlane.f32.xlu0 %v460
        %v462 = vpop.xlane.xlu0 %461
        %v463 = vsel %vm208, %v417, 0.0
        %464 = vadd.xlane.f32.xlu0 %v463
        %v465 = vpop.xlane.xlu0 %464
        %v466 = vmul.f32 %v188, %v188
        %v467 = vmul.f32 %v189, %v189
        %v468 = vmul.f32 %v190, %v190
        %v469 = vmul.f32 %v191, %v191
        %v470 = vadd.f32 %v466, %v467
        %v471 = vadd.f32 %v470, %v468
        %v472 = vadd.f32 %v471, %v469
        %v473 = vrot.slane %v472, 4
        %v474 = vadd.f32 %v472, %v473
        %v475 = vrot.slane %v474, 2
        %v476 = vadd.f32 %v474, %v475
        %v477 = vrot.slane %v476, 1
        %v478 = vadd.f32 %v476, %v477
        %v479 = vmul.f32 %v324, 2.0
        %v480 = vmul.f32 %v329, 2.0
        %v481 = vmul.f32 %v334, 2.0
        %v482 = vmul.f32 %v339, 2.0
        %v483 = vmul.f32 %v344, 2.0
        %v484 = vmul.f32 %v349, 2.0
        %v485 = vmul.f32 %v354, 2.0
        %v486 = vmul.f32 %v359, 2.0
        %v487 = vmul.f32 %v364, 2.0
        %v488 = vmul.f32 %v369, 2.0
        %v489 = vmul.f32 %v374, 2.0
        %v490 = vmul.f32 %v379, 2.0
        %v491 = vmul.f32 %v384, 2.0
        %v492 = vmul.f32 %v389, 2.0
        %v493 = vmul.f32 %v394, 2.0
        %v494 = vmul.f32 %v399, 2.0
        %v495 = vsub.f32 %v479, %v420
        %v496 = vsub.f32 %v480, %v423
        %v497 = vsub.f32 %v481, %v426
        %v498 = vsub.f32 %v482, %v429
        %v499 = vsub.f32 %v483, %v432
        %v500 = vsub.f32 %v484, %v435
        %v501 = vsub.f32 %v485, %v438
        %v502 = vsub.f32 %v486, %v441
        %v503 = vsub.f32 %v487, %v444
        %v504 = vsub.f32 %v488, %v447
        %v505 = vsub.f32 %v489, %v450
        %v506 = vsub.f32 %v490, %v453
        %v507 = vsub.f32 %v491, %v456
        %v508 = vsub.f32 %v492, %v459
        %v509 = vsub.f32 %v493, %v462
        %v510 = vsub.f32 %v494, %v465
        %v511 = vsub.f32 %v495, %v478
        %v512 = vsub.f32 %v496, %v478
        %v513 = vsub.f32 %v497, %v478
        %v514 = vsub.f32 %v498, %v478
        %v515 = vsub.f32 %v499, %v478
        %v516 = vsub.f32 %v500, %v478
        %v517 = vsub.f32 %v501, %v478
        %v518 = vsub.f32 %v502, %v478
        %v519 = vsub.f32 %v503, %v478
        %v520 = vsub.f32 %v504, %v478
        %v521 = vsub.f32 %v505, %v478
        %v522 = vsub.f32 %v506, %v478
        %v523 = vsub.f32 %v507, %v478
        %v524 = vsub.f32 %v508, %v478
        %v525 = vsub.f32 %v509, %v478
        %v526 = vsub.f32 %v510, %v478
        %527 = vst [vmem:[#allocation2] sm:$0xff] %v511
        %528 = vst [vmem:[#allocation2 + $0x8] sm:$0xff] %v512
        %529 = vst [vmem:[#allocation2 + $0x10] sm:$0xff] %v513
        %530 = vst [vmem:[#allocation2 + $0x18] sm:$0xff] %v514
        %531 = vst [vmem:[#allocation2 + $0x20] sm:$0xff] %v515
        %532 = vst [vmem:[#allocation2 + $0x28] sm:$0xff] %v516
        %533 = vst [vmem:[#allocation2 + $0x30] sm:$0xff] %v517
        %534 = vst [vmem:[#allocation2 + $0x38] sm:$0xff] %v518
        %535 = vst [vmem:[#allocation2 + $0x40] sm:$0xff] %v519
        %536 = vst [vmem:[#allocation2 + $0x48] sm:$0xff] %v520
        %537 = vst [vmem:[#allocation2 + $0x50] sm:$0xff] %v521
        %538 = vst [vmem:[#allocation2 + $0x58] sm:$0xff] %v522
        %539 = vst [vmem:[#allocation2 + $0x60] sm:$0xff] %v523
        %540 = vst [vmem:[#allocation2 + $0x68] sm:$0xff] %v524
        %541 = vst [vmem:[#allocation2 + $0x70] sm:$0xff] %v525
        %542 = vst [vmem:[#allocation2 + $0x78] sm:$0xff] %v526
        %v543 = vld [vmem:[#allocation2] sm:$0xff]
        %v544 = vld [vmem:[#allocation2 + $0x8] sm:$0xff]
        %v545 = vld [vmem:[#allocation2 + $0x10] sm:$0xff]
        %v546 = vld [vmem:[#allocation2 + $0x18] sm:$0xff]
        %v547 = vld [vmem:[#allocation2 + $0x20] sm:$0xff]
        %v548 = vld [vmem:[#allocation2 + $0x28] sm:$0xff]
        %v549 = vld [vmem:[#allocation2 + $0x30] sm:$0xff]
        %v550 = vld [vmem:[#allocation2 + $0x38] sm:$0xff]
        %v551 = vld [vmem:[#allocation2 + $0x40] sm:$0xff]
        %v552 = vld [vmem:[#allocation2 + $0x48] sm:$0xff]
        %v553 = vld [vmem:[#allocation2 + $0x50] sm:$0xff]
        %v554 = vld [vmem:[#allocation2 + $0x58] sm:$0xff]
        %v555 = vld [vmem:[#allocation2 + $0x60] sm:$0xff]
        %v556 = vld [vmem:[#allocation2 + $0x68] sm:$0xff]
        %v557 = vld [vmem:[#allocation2 + $0x70] sm:$0xff]
        %v558 = vld [vmem:[#allocation2 + $0x78] sm:$0xff]
        %559 = vst [vmem:[#allocation3] sm:$0xff] 0.0
        %560 = vst [vmem:[#allocation3 + $0x8] sm:$0xff] 0.0
        %561 = vst [vmem:[#allocation3 + $0x10] sm:$0xff] 0.0
        %562 = vst [vmem:[#allocation3 + $0x18] sm:$0xff] 0.0
        %563 = vst [vmem:[#allocation3 + $0x20] sm:$0xff] 0.0
        %564 = vst [vmem:[#allocation3 + $0x28] sm:$0xff] 0.0
        %565 = vst [vmem:[#allocation3 + $0x30] sm:$0xff] 0.0
        %566 = vst [vmem:[#allocation3 + $0x38] sm:$0xff] 0.0
        %567 = vst [vmem:[#allocation3 + $0x40] sm:$0xff] 0.0
        %568 = vst [vmem:[#allocation3 + $0x48] sm:$0xff] 0.0
        %569 = vst [vmem:[#allocation3 + $0x50] sm:$0xff] 0.0
        %570 = vst [vmem:[#allocation3 + $0x58] sm:$0xff] 0.0
        %571 = vst [vmem:[#allocation3 + $0x60] sm:$0xff] 0.0
        %572 = vst [vmem:[#allocation3 + $0x68] sm:$0xff] 0.0
        %573 = vst [vmem:[#allocation3 + $0x70] sm:$0xff] 0.0
        %574 = vst [vmem:[#allocation3 + $0x78] sm:$0xff] 0.0
        loop: start=0, step=1, limit=8
        $region67: #{tpu_custom_call.1} parent=61 // loop_pre_header
          _
        $region68: #{tpu_custom_call.1} parent=61 // loop_header
          %s576 = sphi 0, %s580
          %p577 = scmp.ge.s32.totalorder %s576, 8
        $region69: #{tpu_custom_call.1} parent=61 // loop_header_branch
          %579 = sbr.rel (%p577) target = $region73
        $region70: #{tpu_custom_call.1} parent=61 // loop_body
          %s581 = smul.u32 %s576, 16
          %s582 = scalar_lea.vmem [#allocation2], %s581
          %v583 = vld [vmem:[%s582] sm:$0xff]
          %v584 = vld [vmem:[%s582 + $0x8] sm:$0xff]
          %v601 = vcombine.high %v543, %v543
          %v603 = vunpack.c.l.s4 1966171168
          %v604 = vunpack.c.0.s8 %v603
          %v605 = vlaneseq
          %v606 = vshrl.u32 %v605, 7
          %v607 = vsub.s32 %v604, %v606
          %v608 = vrot.slane %v543, %v607
          %v610 = vunpack.c.l.s4 1966171168
          %v611 = vunpack.c.0.s8 %v610
          %v612 = vlaneseq
          %v613 = vshrl.u32 %v612, 7
          %v614 = vsub.s32 %v611, %v613
          %v615 = vrot.slane %v601, %v614
          %v616 = vcombine.high %v608, %v608
          %v617 = vcombine.high %v615, %v615
          %v619 = vunpack.c.l.s4 1966171168
          %v620 = vunpack.c.0.s8 %v619
          %v621 = vlaneseq
          %v622 = vshrl.u32 %v621, 7
          %v623 = vsub.s32 %v620, %v622
          %v624 = vrot.slane %v608, %v623
          %v626 = vunpack.c.l.s4 1966171168
          %v627 = vunpack.c.0.s8 %v626
          %v628 = vlaneseq
          %v629 = vshrl.u32 %v628, 7
          %v630 = vsub.s32 %v627, %v629
          %v631 = vrot.slane %v615, %v630
          %v633 = vunpack.c.l.s4 1966171168
          %v634 = vunpack.c.0.s8 %v633
          %v635 = vlaneseq
          %v636 = vshrl.u32 %v635, 7
          %v637 = vsub.s32 %v634, %v636
          %v638 = vrot.slane %v616, %v637
          %v640 = vunpack.c.l.s4 1966171168
          %v641 = vunpack.c.0.s8 %v640
          %v642 = vlaneseq
          %v643 = vshrl.u32 %v642, 7
          %v644 = vsub.s32 %v641, %v643
          %v645 = vrot.slane %v617, %v644
          %v646 = vcombine.high %v624, %v624
          %v647 = vcombine.high %v631, %v631
          %v648 = vcombine.high %v638, %v638
          %v649 = vcombine.high %v645, %v645
          %v650 = vcombine.high %v544, %v544
          %v652 = vunpack.c.l.s4 1966171168
          %v653 = vunpack.c.0.s8 %v652
          %v654 = vlaneseq
          %v655 = vshrl.u32 %v654, 7
          %v656 = vsub.s32 %v653, %v655
          %v657 = vrot.slane %v544, %v656
          %v659 = vunpack.c.l.s4 1966171168
          %v660 = vunpack.c.0.s8 %v659
          %v661 = vlaneseq
          %v662 = vshrl.u32 %v661, 7
          %v663 = vsub.s32 %v660, %v662
          %v664 = vrot.slane %v650, %v663
          %v665 = vcombine.high %v657, %v657
          %v666 = vcombine.high %v664, %v664
          %v668 = vunpack.c.l.s4 1966171168
          %v669 = vunpack.c.0.s8 %v668
          %v670 = vlaneseq
          %v671 = vshrl.u32 %v670, 7
          %v672 = vsub.s32 %v669, %v671
          %v673 = vrot.slane %v657, %v672
          %v675 = vunpack.c.l.s4 1966171168
          %v676 = vunpack.c.0.s8 %v675
          %v677 = vlaneseq
          %v678 = vshrl.u32 %v677, 7
          %v679 = vsub.s32 %v676, %v678
          %v680 = vrot.slane %v664, %v679
          %v682 = vunpack.c.l.s4 1966171168
          %v683 = vunpack.c.0.s8 %v682
          %v684 = vlaneseq
          %v685 = vshrl.u32 %v684, 7
          %v686 = vsub.s32 %v683, %v685
          %v687 = vrot.slane %v665, %v686
          %v689 = vunpack.c.l.s4 1966171168
          %v690 = vunpack.c.0.s8 %v689
          %v691 = vlaneseq
          %v692 = vshrl.u32 %v691, 7
          %v693 = vsub.s32 %v690, %v692
          %v694 = vrot.slane %v666, %v693
          %v695 = vcombine.high %v673, %v673
          %v696 = vcombine.high %v680, %v680
          %v697 = vcombine.high %v687, %v687
          %v698 = vcombine.high %v694, %v694
          %v699 = vcombine.high %v545, %v545
          %v701 = vunpack.c.l.s4 1966171168
          %v702 = vunpack.c.0.s8 %v701
          %v703 = vlaneseq
          %v704 = vshrl.u32 %v703, 7
          %v705 = vsub.s32 %v702, %v704
          %v706 = vrot.slane %v545, %v705
          %v708 = vunpack.c.l.s4 1966171168
          %v709 = vunpack.c.0.s8 %v708
          %v710 = vlaneseq
          %v711 = vshrl.u32 %v710, 7
          %v712 = vsub.s32 %v709, %v711
          %v713 = vrot.slane %v699, %v712
          %v714 = vcombine.high %v706, %v706
          %v715 = vcombine.high %v713, %v713
          %v717 = vunpack.c.l.s4 1966171168
          %v718 = vunpack.c.0.s8 %v717
          %v719 = vlaneseq
          %v720 = vshrl.u32 %v719, 7
          %v721 = vsub.s32 %v718, %v720
          %v722 = vrot.slane %v706, %v721
          %v724 = vunpack.c.l.s4 1966171168
          %v725 = vunpack.c.0.s8 %v724
          %v726 = vlaneseq
          %v727 = vshrl.u32 %v726, 7
          %v728 = vsub.s32 %v725, %v727
          %v729 = vrot.slane %v713, %v728
          %v731 = vunpack.c.l.s4 1966171168
          %v732 = vunpack.c.0.s8 %v731
          %v733 = vlaneseq
          %v734 = vshrl.u32 %v733, 7
          %v735 = vsub.s32 %v732, %v734
          %v736 = vrot.slane %v714, %v735
          %v738 = vunpack.c.l.s4 1966171168
          %v739 = vunpack.c.0.s8 %v738
          %v740 = vlaneseq
          %v741 = vshrl.u32 %v740, 7
          %v742 = vsub.s32 %v739, %v741
          %v743 = vrot.slane %v715, %v742
          %v744 = vcombine.high %v722, %v722
          %v745 = vcombine.high %v729, %v729
          %v746 = vcombine.high %v736, %v736
          %v747 = vcombine.high %v743, %v743
          %v748 = vcombine.high %v546, %v546
          %v750 = vunpack.c.l.s4 1966171168
          %v751 = vunpack.c.0.s8 %v750
          %v752 = vlaneseq
          %v753 = vshrl.u32 %v752, 7
          %v754 = vsub.s32 %v751, %v753
          %v755 = vrot.slane %v546, %v754
          %v757 = vunpack.c.l.s4 1966171168
          %v758 = vunpack.c.0.s8 %v757
          %v759 = vlaneseq
          %v760 = vshrl.u32 %v759, 7
          %v761 = vsub.s32 %v758, %v760
          %v762 = vrot.slane %v748, %v761
          %v763 = vcombine.high %v755, %v755
          %v764 = vcombine.high %v762, %v762
          %v766 = vunpack.c.l.s4 1966171168
          %v767 = vunpack.c.0.s8 %v766
          %v768 = vlaneseq
          %v769 = vshrl.u32 %v768, 7
          %v770 = vsub.s32 %v767, %v769
          %v771 = vrot.slane %v755, %v770
          %v773 = vunpack.c.l.s4 1966171168
          %v774 = vunpack.c.0.s8 %v773
          %v775 = vlaneseq
          %v776 = vshrl.u32 %v775, 7
          %v777 = vsub.s32 %v774, %v776
          %v778 = vrot.slane %v762, %v777
          %v780 = vunpack.c.l.s4 1966171168
          %v781 = vunpack.c.0.s8 %v780
          %v782 = vlaneseq
          %v783 = vshrl.u32 %v782, 7
          %v784 = vsub.s32 %v781, %v783
          %v785 = vrot.slane %v763, %v784
          %v787 = vunpack.c.l.s4 1966171168
          %v788 = vunpack.c.0.s8 %v787
          %v789 = vlaneseq
          %v790 = vshrl.u32 %v789, 7
          %v791 = vsub.s32 %v788, %v790
          %v792 = vrot.slane %v764, %v791
          %v793 = vcombine.high %v771, %v771
          %v794 = vcombine.high %v778, %v778
          %v795 = vcombine.high %v785, %v785
          %v796 = vcombine.high %v792, %v792
          %v797 = vcombine.high %v547, %v547
          %v799 = vunpack.c.l.s4 1966171168
          %v800 = vunpack.c.0.s8 %v799
          %v801 = vlaneseq
          %v802 = vshrl.u32 %v801, 7
          %v803 = vsub.s32 %v800, %v802
          %v804 = vrot.slane %v547, %v803
          %v806 = vunpack.c.l.s4 1966171168
          %v807 = vunpack.c.0.s8 %v806
          %v808 = vlaneseq
          %v809 = vshrl.u32 %v808, 7
          %v810 = vsub.s32 %v807, %v809
          %v811 = vrot.slane %v797, %v810
          %v812 = vcombine.high %v804, %v804
          %v813 = vcombine.high %v811, %v811
          %v815 = vunpack.c.l.s4 1966171168
          %v816 = vunpack.c.0.s8 %v815
          %v817 = vlaneseq
          %v818 = vshrl.u32 %v817, 7
          %v819 = vsub.s32 %v816, %v818
          %v820 = vrot.slane %v804, %v819
          %v822 = vunpack.c.l.s4 1966171168
          %v823 = vunpack.c.0.s8 %v822
          %v824 = vlaneseq
          %v825 = vshrl.u32 %v824, 7
          %v826 = vsub.s32 %v823, %v825
          %v827 = vrot.slane %v811, %v826
          %v829 = vunpack.c.l.s4 1966171168
          %v830 = vunpack.c.0.s8 %v829
          %v831 = vlaneseq
          %v832 = vshrl.u32 %v831, 7
          %v833 = vsub.s32 %v830, %v832
          %v834 = vrot.slane %v812, %v833
          %v836 = vunpack.c.l.s4 1966171168
          %v837 = vunpack.c.0.s8 %v836
          %v838 = vlaneseq
          %v839 = vshrl.u32 %v838, 7
          %v840 = vsub.s32 %v837, %v839
          %v841 = vrot.slane %v813, %v840
          %v842 = vcombine.high %v820, %v820
          %v843 = vcombine.high %v827, %v827
          %v844 = vcombine.high %v834, %v834
          %v845 = vcombine.high %v841, %v841
          %v846 = vcombine.high %v548, %v548
          %v848 = vunpack.c.l.s4 1966171168
          %v849 = vunpack.c.0.s8 %v848
          %v850 = vlaneseq
          %v851 = vshrl.u32 %v850, 7
          %v852 = vsub.s32 %v849, %v851
          %v853 = vrot.slane %v548, %v852
          %v855 = vunpack.c.l.s4 1966171168
          %v856 = vunpack.c.0.s8 %v855
          %v857 = vlaneseq
          %v858 = vshrl.u32 %v857, 7
          %v859 = vsub.s32 %v856, %v858
          %v860 = vrot.slane %v846, %v859
          %v861 = vcombine.high %v853, %v853
          %v862 = vcombine.high %v860, %v860
          %v864 = vunpack.c.l.s4 1966171168
          %v865 = vunpack.c.0.s8 %v864
          %v866 = vlaneseq
          %v867 = vshrl.u32 %v866, 7
          %v868 = vsub.s32 %v865, %v867
          %v869 = vrot.slane %v853, %v868
          %v871 = vunpack.c.l.s4 1966171168
          %v872 = vunpack.c.0.s8 %v871
          %v873 = vlaneseq
          %v874 = vshrl.u32 %v873, 7
          %v875 = vsub.s32 %v872, %v874
          %v876 = vrot.slane %v860, %v875
          %v878 = vunpack.c.l.s4 1966171168
          %v879 = vunpack.c.0.s8 %v878
          %v880 = vlaneseq
          %v881 = vshrl.u32 %v880, 7
          %v882 = vsub.s32 %v879, %v881
          %v883 = vrot.slane %v861, %v882
          %v885 = vunpack.c.l.s4 1966171168
          %v886 = vunpack.c.0.s8 %v885
          %v887 = vlaneseq
          %v888 = vshrl.u32 %v887, 7
          %v889 = vsub.s32 %v886, %v888
          %v890 = vrot.slane %v862, %v889
          %v891 = vcombine.high %v869, %v869
          %v892 = vcombine.high %v876, %v876
          %v893 = vcombine.high %v883, %v883
          %v894 = vcombine.high %v890, %v890
          %v895 = vcombine.high %v549, %v549
          %v897 = vunpack.c.l.s4 1966171168
          %v898 = vunpack.c.0.s8 %v897
          %v899 = vlaneseq
          %v900 = vshrl.u32 %v899, 7
          %v901 = vsub.s32 %v898, %v900
          %v902 = vrot.slane %v549, %v901
          %v904 = vunpack.c.l.s4 1966171168
          %v905 = vunpack.c.0.s8 %v904
          %v906 = vlaneseq
          %v907 = vshrl.u32 %v906, 7
          %v908 = vsub.s32 %v905, %v907
          %v909 = vrot.slane %v895, %v908
          %v910 = vcombine.high %v902, %v902
          %v911 = vcombine.high %v909, %v909
          %v913 = vunpack.c.l.s4 1966171168
          %v914 = vunpack.c.0.s8 %v913
          %v915 = vlaneseq
          %v916 = vshrl.u32 %v915, 7
          %v917 = vsub.s32 %v914, %v916
          %v918 = vrot.slane %v902, %v917
          %v920 = vunpack.c.l.s4 1966171168
          %v921 = vunpack.c.0.s8 %v920
          %v922 = vlaneseq
          %v923 = vshrl.u32 %v922, 7
          %v924 = vsub.s32 %v921, %v923
          %v925 = vrot.slane %v909, %v924
          %v927 = vunpack.c.l.s4 1966171168
          %v928 = vunpack.c.0.s8 %v927
          %v929 = vlaneseq
          %v930 = vshrl.u32 %v929, 7
          %v931 = vsub.s32 %v928, %v930
          %v932 = vrot.slane %v910, %v931
          %v934 = vunpack.c.l.s4 1966171168
          %v935 = vunpack.c.0.s8 %v934
          %v936 = vlaneseq
          %v937 = vshrl.u32 %v936, 7
          %v938 = vsub.s32 %v935, %v937
          %v939 = vrot.slane %v911, %v938
          %v940 = vcombine.high %v918, %v918
          %v941 = vcombine.high %v925, %v925
          %v942 = vcombine.high %v932, %v932
          %v943 = vcombine.high %v939, %v939
          %v944 = vcombine.high %v550, %v550
          %v946 = vunpack.c.l.s4 1966171168
          %v947 = vunpack.c.0.s8 %v946
          %v948 = vlaneseq
          %v949 = vshrl.u32 %v948, 7
          %v950 = vsub.s32 %v947, %v949
          %v951 = vrot.slane %v550, %v950
          %v953 = vunpack.c.l.s4 1966171168
          %v954 = vunpack.c.0.s8 %v953
          %v955 = vlaneseq
          %v956 = vshrl.u32 %v955, 7
          %v957 = vsub.s32 %v954, %v956
          %v958 = vrot.slane %v944, %v957
          %v959 = vcombine.high %v951, %v951
          %v960 = vcombine.high %v958, %v958
          %v962 = vunpack.c.l.s4 1966171168
          %v963 = vunpack.c.0.s8 %v962
          %v964 = vlaneseq
          %v965 = vshrl.u32 %v964, 7
          %v966 = vsub.s32 %v963, %v965
          %v967 = vrot.slane %v951, %v966
          %v969 = vunpack.c.l.s4 1966171168
          %v970 = vunpack.c.0.s8 %v969
          %v971 = vlaneseq
          %v972 = vshrl.u32 %v971, 7
          %v973 = vsub.s32 %v970, %v972
          %v974 = vrot.slane %v958, %v973
          %v976 = vunpack.c.l.s4 1966171168
          %v977 = vunpack.c.0.s8 %v976
          %v978 = vlaneseq
          %v979 = vshrl.u32 %v978, 7
          %v980 = vsub.s32 %v977, %v979
          %v981 = vrot.slane %v959, %v980
          %v983 = vunpack.c.l.s4 1966171168
          %v984 = vunpack.c.0.s8 %v983
          %v985 = vlaneseq
          %v986 = vshrl.u32 %v985, 7
          %v987 = vsub.s32 %v984, %v986
          %v988 = vrot.slane %v960, %v987
          %v989 = vcombine.high %v967, %v967
          %v990 = vcombine.high %v974, %v974
          %v991 = vcombine.high %v981, %v981
          %v992 = vcombine.high %v988, %v988
          %v993 = vcombine.high %v551, %v551
          %v995 = vunpack.c.l.s4 1966171168
          %v996 = vunpack.c.0.s8 %v995
          %v997 = vlaneseq
          %v998 = vshrl.u32 %v997, 7
          %v999 = vsub.s32 %v996, %v998
          %v1000 = vrot.slane %v551, %v999
          %v1002 = vunpack.c.l.s4 1966171168
          %v1003 = vunpack.c.0.s8 %v1002
          %v1004 = vlaneseq
          %v1005 = vshrl.u32 %v1004, 7
          %v1006 = vsub.s32 %v1003, %v1005
          %v1007 = vrot.slane %v993, %v1006
          %v1008 = vcombine.high %v1000, %v1000
          %v1009 = vcombine.high %v1007, %v1007
          %v1011 = vunpack.c.l.s4 1966171168
          %v1012 = vunpack.c.0.s8 %v1011
          %v1013 = vlaneseq
          %v1014 = vshrl.u32 %v1013, 7
          %v1015 = vsub.s32 %v1012, %v1014
          %v1016 = vrot.slane %v1000, %v1015
          %v1018 = vunpack.c.l.s4 1966171168
          %v1019 = vunpack.c.0.s8 %v1018
          %v1020 = vlaneseq
          %v1021 = vshrl.u32 %v1020, 7
          %v1022 = vsub.s32 %v1019, %v1021
          %v1023 = vrot.slane %v1007, %v1022
          %v1025 = vunpack.c.l.s4 1966171168
          %v1026 = vunpack.c.0.s8 %v1025
          %v1027 = vlaneseq
          %v1028 = vshrl.u32 %v1027, 7
          %v1029 = vsub.s32 %v1026, %v1028
          %v1030 = vrot.slane %v1008, %v1029
          %v1032 = vunpack.c.l.s4 1966171168
          %v1033 = vunpack.c.0.s8 %v1032
          %v1034 = vlaneseq
          %v1035 = vshrl.u32 %v1034, 7
          %v1036 = vsub.s32 %v1033, %v1035
          %v1037 = vrot.slane %v1009, %v1036
          %v1038 = vcombine.high %v1016, %v1016
          %v1039 = vcombine.high %v1023, %v1023
          %v1040 = vcombine.high %v1030, %v1030
          %v1041 = vcombine.high %v1037, %v1037
          %v1042 = vcombine.high %v552, %v552
          %v1044 = vunpack.c.l.s4 1966171168
          %v1045 = vunpack.c.0.s8 %v1044
          %v1046 = vlaneseq
          %v1047 = vshrl.u32 %v1046, 7
          %v1048 = vsub.s32 %v1045, %v1047
          %v1049 = vrot.slane %v552, %v1048
          %v1051 = vunpack.c.l.s4 1966171168
          %v1052 = vunpack.c.0.s8 %v1051
          %v1053 = vlaneseq
          %v1054 = vshrl.u32 %v1053, 7
          %v1055 = vsub.s32 %v1052, %v1054
          %v1056 = vrot.slane %v1042, %v1055
          %v1057 = vcombine.high %v1049, %v1049
          %v1058 = vcombine.high %v1056, %v1056
          %v1060 = vunpack.c.l.s4 1966171168
          %v1061 = vunpack.c.0.s8 %v1060
          %v1062 = vlaneseq
          %v1063 = vshrl.u32 %v1062, 7
          %v1064 = vsub.s32 %v1061, %v1063
          %v1065 = vrot.slane %v1049, %v1064
          %v1067 = vunpack.c.l.s4 1966171168
          %v1068 = vunpack.c.0.s8 %v1067
          %v1069 = vlaneseq
          %v1070 = vshrl.u32 %v1069, 7
          %v1071 = vsub.s32 %v1068, %v1070
          %v1072 = vrot.slane %v1056, %v1071
          %v1074 = vunpack.c.l.s4 1966171168
          %v1075 = vunpack.c.0.s8 %v1074
          %v1076 = vlaneseq
          %v1077 = vshrl.u32 %v1076, 7
          %v1078 = vsub.s32 %v1075, %v1077
          %v1079 = vrot.slane %v1057, %v1078
          %v1081 = vunpack.c.l.s4 1966171168
          %v1082 = vunpack.c.0.s8 %v1081
          %v1083 = vlaneseq
          %v1084 = vshrl.u32 %v1083, 7
          %v1085 = vsub.s32 %v1082, %v1084
          %v1086 = vrot.slane %v1058, %v1085
          %v1087 = vcombine.high %v1065, %v1065
          %v1088 = vcombine.high %v1072, %v1072
          %v1089 = vcombine.high %v1079, %v1079
          %v1090 = vcombine.high %v1086, %v1086
          %v1091 = vcombine.high %v553, %v553
          %v1093 = vunpack.c.l.s4 1966171168
          %v1094 = vunpack.c.0.s8 %v1093
          %v1095 = vlaneseq
          %v1096 = vshrl.u32 %v1095, 7
          %v1097 = vsub.s32 %v1094, %v1096
          %v1098 = vrot.slane %v553, %v1097
          %v1100 = vunpack.c.l.s4 1966171168
          %v1101 = vunpack.c.0.s8 %v1100
          %v1102 = vlaneseq
          %v1103 = vshrl.u32 %v1102, 7
          %v1104 = vsub.s32 %v1101, %v1103
          %v1105 = vrot.slane %v1091, %v1104
          %v1106 = vcombine.high %v1098, %v1098
          %v1107 = vcombine.high %v1105, %v1105
          %v1109 = vunpack.c.l.s4 1966171168
          %v1110 = vunpack.c.0.s8 %v1109
          %v1111 = vlaneseq
          %v1112 = vshrl.u32 %v1111, 7
          %v1113 = vsub.s32 %v1110, %v1112
          %v1114 = vrot.slane %v1098, %v1113
          %v1116 = vunpack.c.l.s4 1966171168
          %v1117 = vunpack.c.0.s8 %v1116
          %v1118 = vlaneseq
          %v1119 = vshrl.u32 %v1118, 7
          %v1120 = vsub.s32 %v1117, %v1119
          %v1121 = vrot.slane %v1105, %v1120
          %v1123 = vunpack.c.l.s4 1966171168
          %v1124 = vunpack.c.0.s8 %v1123
          %v1125 = vlaneseq
          %v1126 = vshrl.u32 %v1125, 7
          %v1127 = vsub.s32 %v1124, %v1126
          %v1128 = vrot.slane %v1106, %v1127
          %v1130 = vunpack.c.l.s4 1966171168
          %v1131 = vunpack.c.0.s8 %v1130
          %v1132 = vlaneseq
          %v1133 = vshrl.u32 %v1132, 7
          %v1134 = vsub.s32 %v1131, %v1133
          %v1135 = vrot.slane %v1107, %v1134
          %v1136 = vcombine.high %v1114, %v1114
          %v1137 = vcombine.high %v1121, %v1121
          %v1138 = vcombine.high %v1128, %v1128
          %v1139 = vcombine.high %v1135, %v1135
          %v1140 = vcombine.high %v554, %v554
          %v1142 = vunpack.c.l.s4 1966171168
          %v1143 = vunpack.c.0.s8 %v1142
          %v1144 = vlaneseq
          %v1145 = vshrl.u32 %v1144, 7
          %v1146 = vsub.s32 %v1143, %v1145
          %v1147 = vrot.slane %v554, %v1146
          %v1149 = vunpack.c.l.s4 1966171168
          %v1150 = vunpack.c.0.s8 %v1149
          %v1151 = vlaneseq
          %v1152 = vshrl.u32 %v1151, 7
          %v1153 = vsub.s32 %v1150, %v1152
          %v1154 = vrot.slane %v1140, %v1153
          %v1155 = vcombine.high %v1147, %v1147
          %v1156 = vcombine.high %v1154, %v1154
          %v1158 = vunpack.c.l.s4 1966171168
          %v1159 = vunpack.c.0.s8 %v1158
          %v1160 = vlaneseq
          %v1161 = vshrl.u32 %v1160, 7
          %v1162 = vsub.s32 %v1159, %v1161
          %v1163 = vrot.slane %v1147, %v1162
          %v1165 = vunpack.c.l.s4 1966171168
          %v1166 = vunpack.c.0.s8 %v1165
          %v1167 = vlaneseq
          %v1168 = vshrl.u32 %v1167, 7
          %v1169 = vsub.s32 %v1166, %v1168
          %v1170 = vrot.slane %v1154, %v1169
          %v1172 = vunpack.c.l.s4 1966171168
          %v1173 = vunpack.c.0.s8 %v1172
          %v1174 = vlaneseq
          %v1175 = vshrl.u32 %v1174, 7
          %v1176 = vsub.s32 %v1173, %v1175
          %v1177 = vrot.slane %v1155, %v1176
          %v1179 = vunpack.c.l.s4 1966171168
          %v1180 = vunpack.c.0.s8 %v1179
          %v1181 = vlaneseq
          %v1182 = vshrl.u32 %v1181, 7
          %v1183 = vsub.s32 %v1180, %v1182
          %v1184 = vrot.slane %v1156, %v1183
          %v1185 = vcombine.high %v1163, %v1163
          %v1186 = vcombine.high %v1170, %v1170
          %v1187 = vcombine.high %v1177, %v1177
          %v1188 = vcombine.high %v1184, %v1184
          %v1189 = vcombine.high %v555, %v555
          %v1191 = vunpack.c.l.s4 1966171168
          %v1192 = vunpack.c.0.s8 %v1191
          %v1193 = vlaneseq
          %v1194 = vshrl.u32 %v1193, 7
          %v1195 = vsub.s32 %v1192, %v1194
          %v1196 = vrot.slane %v555, %v1195
          %v1198 = vunpack.c.l.s4 1966171168
          %v1199 = vunpack.c.0.s8 %v1198
          %v1200 = vlaneseq
          %v1201 = vshrl.u32 %v1200, 7
          %v1202 = vsub.s32 %v1199, %v1201
          %v1203 = vrot.slane %v1189, %v1202
          %v1204 = vcombine.high %v1196, %v1196
          %v1205 = vcombine.high %v1203, %v1203
          %v1207 = vunpack.c.l.s4 1966171168
          %v1208 = vunpack.c.0.s8 %v1207
          %v1209 = vlaneseq
          %v1210 = vshrl.u32 %v1209, 7
          %v1211 = vsub.s32 %v1208, %v1210
          %v1212 = vrot.slane %v1196, %v1211
          %v1214 = vunpack.c.l.s4 1966171168
          %v1215 = vunpack.c.0.s8 %v1214
          %v1216 = vlaneseq
          %v1217 = vshrl.u32 %v1216, 7
          %v1218 = vsub.s32 %v1215, %v1217
          %v1219 = vrot.slane %v1203, %v1218
          %v1221 = vunpack.c.l.s4 1966171168
          %v1222 = vunpack.c.0.s8 %v1221
          %v1223 = vlaneseq
          %v1224 = vshrl.u32 %v1223, 7
          %v1225 = vsub.s32 %v1222, %v1224
          %v1226 = vrot.slane %v1204, %v1225
          %v1228 = vunpack.c.l.s4 1966171168
          %v1229 = vunpack.c.0.s8 %v1228
          %v1230 = vlaneseq
          %v1231 = vshrl.u32 %v1230, 7
          %v1232 = vsub.s32 %v1229, %v1231
          %v1233 = vrot.slane %v1205, %v1232
          %v1234 = vcombine.high %v1212, %v1212
          %v1235 = vcombine.high %v1219, %v1219
          %v1236 = vcombine.high %v1226, %v1226
          %v1237 = vcombine.high %v1233, %v1233
          %v1238 = vcombine.high %v556, %v556
          %v1240 = vunpack.c.l.s4 1966171168
          %v1241 = vunpack.c.0.s8 %v1240
          %v1242 = vlaneseq
          %v1243 = vshrl.u32 %v1242, 7
          %v1244 = vsub.s32 %v1241, %v1243
          %v1245 = vrot.slane %v556, %v1244
          %v1247 = vunpack.c.l.s4 1966171168
          %v1248 = vunpack.c.0.s8 %v1247
          %v1249 = vlaneseq
          %v1250 = vshrl.u32 %v1249, 7
          %v1251 = vsub.s32 %v1248, %v1250
          %v1252 = vrot.slane %v1238, %v1251
          %v1253 = vcombine.high %v1245, %v1245
          %v1254 = vcombine.high %v1252, %v1252
          %v1256 = vunpack.c.l.s4 1966171168
          %v1257 = vunpack.c.0.s8 %v1256
          %v1258 = vlaneseq
          %v1259 = vshrl.u32 %v1258, 7
          %v1260 = vsub.s32 %v1257, %v1259
          %v1261 = vrot.slane %v1245, %v1260
          %v1263 = vunpack.c.l.s4 1966171168
          %v1264 = vunpack.c.0.s8 %v1263
          %v1265 = vlaneseq
          %v1266 = vshrl.u32 %v1265, 7
          %v1267 = vsub.s32 %v1264, %v1266
          %v1268 = vrot.slane %v1252, %v1267
          %v1270 = vunpack.c.l.s4 1966171168
          %v1271 = vunpack.c.0.s8 %v1270
          %v1272 = vlaneseq
          %v1273 = vshrl.u32 %v1272, 7
          %v1274 = vsub.s32 %v1271, %v1273
          %v1275 = vrot.slane %v1253, %v1274
          %v1277 = vunpack.c.l.s4 1966171168
          %v1278 = vunpack.c.0.s8 %v1277
          %v1279 = vlaneseq
          %v1280 = vshrl.u32 %v1279, 7
          %v1281 = vsub.s32 %v1278, %v1280
          %v1282 = vrot.slane %v1254, %v1281
          %v1283 = vcombine.high %v1261, %v1261
          %v1284 = vcombine.high %v1268, %v1268
          %v1285 = vcombine.high %v1275, %v1275
          %v1286 = vcombine.high %v1282, %v1282
          %v1287 = vcombine.high %v557, %v557
          %v1289 = vunpack.c.l.s4 1966171168
          %v1290 = vunpack.c.0.s8 %v1289
          %v1291 = vlaneseq
          %v1292 = vshrl.u32 %v1291, 7
          %v1293 = vsub.s32 %v1290, %v1292
          %v1294 = vrot.slane %v557, %v1293
          %v1296 = vunpack.c.l.s4 1966171168
          %v1297 = vunpack.c.0.s8 %v1296
          %v1298 = vlaneseq
          %v1299 = vshrl.u32 %v1298, 7
          %v1300 = vsub.s32 %v1297, %v1299
          %v1301 = vrot.slane %v1287, %v1300
          %v1302 = vcombine.high %v1294, %v1294
          %v1303 = vcombine.high %v1301, %v1301
          %v1305 = vunpack.c.l.s4 1966171168
          %v1306 = vunpack.c.0.s8 %v1305
          %v1307 = vlaneseq
          %v1308 = vshrl.u32 %v1307, 7
          %v1309 = vsub.s32 %v1306, %v1308
          %v1310 = vrot.slane %v1294, %v1309
          %v1312 = vunpack.c.l.s4 1966171168
          %v1313 = vunpack.c.0.s8 %v1312
          %v1314 = vlaneseq
          %v1315 = vshrl.u32 %v1314, 7
          %v1316 = vsub.s32 %v1313, %v1315
          %v1317 = vrot.slane %v1301, %v1316
          %v1319 = vunpack.c.l.s4 1966171168
          %v1320 = vunpack.c.0.s8 %v1319
          %v1321 = vlaneseq
          %v1322 = vshrl.u32 %v1321, 7
          %v1323 = vsub.s32 %v1320, %v1322
          %v1324 = vrot.slane %v1302, %v1323
          %v1326 = vunpack.c.l.s4 1966171168
          %v1327 = vunpack.c.0.s8 %v1326
          %v1328 = vlaneseq
          %v1329 = vshrl.u32 %v1328, 7
          %v1330 = vsub.s32 %v1327, %v1329
          %v1331 = vrot.slane %v1303, %v1330
          %v1332 = vcombine.high %v1310, %v1310
          %v1333 = vcombine.high %v1317, %v1317
          %v1334 = vcombine.high %v1324, %v1324
          %v1335 = vcombine.high %v1331, %v1331
          %v1336 = vcombine.high %v558, %v558
          %v1338 = vunpack.c.l.s4 1966171168
          %v1339 = vunpack.c.0.s8 %v1338
          %v1340 = vlaneseq
          %v1341 = vshrl.u32 %v1340, 7
          %v1342 = vsub.s32 %v1339, %v1341
          %v1343 = vrot.slane %v558, %v1342
          %v1345 = vunpack.c.l.s4 1966171168
          %v1346 = vunpack.c.0.s8 %v1345
          %v1347 = vlaneseq
          %v1348 = vshrl.u32 %v1347, 7
          %v1349 = vsub.s32 %v1346, %v1348
          %v1350 = vrot.slane %v1336, %v1349
          %v1351 = vcombine.high %v1343, %v1343
          %v1352 = vcombine.high %v1350, %v1350
          %v1354 = vunpack.c.l.s4 1966171168
          %v1355 = vunpack.c.0.s8 %v1354
          %v1356 = vlaneseq
          %v1357 = vshrl.u32 %v1356, 7
          %v1358 = vsub.s32 %v1355, %v1357
          %v1359 = vrot.slane %v1343, %v1358
          %v1361 = vunpack.c.l.s4 1966171168
          %v1362 = vunpack.c.0.s8 %v1361
          %v1363 = vlaneseq
          %v1364 = vshrl.u32 %v1363, 7
          %v1365 = vsub.s32 %v1362, %v1364
          %v1366 = vrot.slane %v1350, %v1365
          %v1368 = vunpack.c.l.s4 1966171168
          %v1369 = vunpack.c.0.s8 %v1368
          %v1370 = vlaneseq
          %v1371 = vshrl.u32 %v1370, 7
          %v1372 = vsub.s32 %v1369, %v1371
          %v1373 = vrot.slane %v1351, %v1372
          %v1375 = vunpack.c.l.s4 1966171168
          %v1376 = vunpack.c.0.s8 %v1375
          %v1377 = vlaneseq
          %v1378 = vshrl.u32 %v1377, 7
          %v1379 = vsub.s32 %v1376, %v1378
          %v1380 = vrot.slane %v1352, %v1379
          %v1381 = vcombine.high %v1359, %v1359
          %v1382 = vcombine.high %v1366, %v1366
          %v1383 = vcombine.high %v1373, %v1373
          %v1384 = vcombine.high %v1380, %v1380
          %v1385 = vlaneseq
          %v1386 = vshrl.u32 %v1385, 7
          %v1387 = vsub.s32 0, %v1386
          %v1388 = vrot.slane %v624, %v1387
          %v1389 = vlaneseq
          %v1390 = vshrl.u32 %v1389, 7
          %v1391 = vsub.s32 0, %v1390
          %v1392 = vrot.slane %v638, %v1391
          %v1393 = vlaneseq
          %v1394 = vshrl.u32 %v1393, 7
          %v1395 = vsub.s32 0, %v1394
          %v1396 = vrot.slane %v646, %v1395
          %v1397 = vlaneseq
          %v1398 = vshrl.u32 %v1397, 7
          %v1399 = vsub.s32 0, %v1398
          %v1400 = vrot.slane %v648, %v1399
          %v1401 = vlaneseq
          %v1402 = vshrl.u32 %v1401, 7
          %v1403 = vsub.s32 0, %v1402
          %v1404 = vrot.slane %v631, %v1403
          %v1405 = vlaneseq
          %v1406 = vshrl.u32 %v1405, 7
          %v1407 = vsub.s32 0, %v1406
          %v1408 = vrot.slane %v645, %v1407
          %v1409 = vlaneseq
          %v1410 = vshrl.u32 %v1409, 7
          %v1411 = vsub.s32 0, %v1410
          %v1412 = vrot.slane %v647, %v1411
          %v1413 = vlaneseq
          %v1414 = vshrl.u32 %v1413, 7
          %v1415 = vsub.s32 0, %v1414
          %v1416 = vrot.slane %v649, %v1415
          %v1417 = vlaneseq
          %v1418 = vshrl.u32 %v1417, 7
          %v1419 = vsub.s32 0, %v1418
          %v1420 = vrot.slane %v673, %v1419
          %v1421 = vlaneseq
          %v1422 = vshrl.u32 %v1421, 7
          %v1423 = vsub.s32 0, %v1422
          %v1424 = vrot.slane %v687, %v1423
          %v1425 = vlaneseq
          %v1426 = vshrl.u32 %v1425, 7
          %v1427 = vsub.s32 0, %v1426
          %v1428 = vrot.slane %v695, %v1427
          %v1429 = vlaneseq
          %v1430 = vshrl.u32 %v1429, 7
          %v1431 = vsub.s32 0, %v1430
          %v1432 = vrot.slane %v697, %v1431
          %v1433 = vlaneseq
          %v1434 = vshrl.u32 %v1433, 7
          %v1435 = vsub.s32 0, %v1434
          %v1436 = vrot.slane %v680, %v1435
          %v1437 = vlaneseq
          %v1438 = vshrl.u32 %v1437, 7
          %v1439 = vsub.s32 0, %v1438
          %v1440 = vrot.slane %v694, %v1439
          %v1441 = vlaneseq
          %v1442 = vshrl.u32 %v1441, 7
          %v1443 = vsub.s32 0, %v1442
          %v1444 = vrot.slane %v696, %v1443
          %v1445 = vlaneseq
          %v1446 = vshrl.u32 %v1445, 7
          %v1447 = vsub.s32 0, %v1446
          %v1448 = vrot.slane %v698, %v1447
          %v1449 = vlaneseq
          %v1450 = vshrl.u32 %v1449, 7
          %v1451 = vsub.s32 0, %v1450
          %v1452 = vrot.slane %v722, %v1451
          %v1453 = vlaneseq
          %v1454 = vshrl.u32 %v1453, 7
          %v1455 = vsub.s32 0, %v1454
          %v1456 = vrot.slane %v736, %v1455
          %v1457 = vlaneseq
          %v1458 = vshrl.u32 %v1457, 7
          %v1459 = vsub.s32 0, %v1458
          %v1460 = vrot.slane %v744, %v1459
          %v1461 = vlaneseq
          %v1462 = vshrl.u32 %v1461, 7
          %v1463 = vsub.s32 0, %v1462
          %v1464 = vrot.slane %v746, %v1463
          %v1465 = vlaneseq
          %v1466 = vshrl.u32 %v1465, 7
          %v1467 = vsub.s32 0, %v1466
          %v1468 = vrot.slane %v729, %v1467
          %v1469 = vlaneseq
          %v1470 = vshrl.u32 %v1469, 7
          %v1471 = vsub.s32 0, %v1470
          %v1472 = vrot.slane %v743, %v1471
          %v1473 = vlaneseq
          %v1474 = vshrl.u32 %v1473, 7
          %v1475 = vsub.s32 0, %v1474
          %v1476 = vrot.slane %v745, %v1475
          %v1477 = vlaneseq
          %v1478 = vshrl.u32 %v1477, 7
          %v1479 = vsub.s32 0, %v1478
          %v1480 = vrot.slane %v747, %v1479
          %v1481 = vlaneseq
          %v1482 = vshrl.u32 %v1481, 7
          %v1483 = vsub.s32 0, %v1482
          %v1484 = vrot.slane %v771, %v1483
          %v1485 = vlaneseq
          %v1486 = vshrl.u32 %v1485, 7
          %v1487 = vsub.s32 0, %v1486
          %v1488 = vrot.slane %v785, %v1487
          %v1489 = vlaneseq
          %v1490 = vshrl.u32 %v1489, 7
          %v1491 = vsub.s32 0, %v1490
          %v1492 = vrot.slane %v793, %v1491
          %v1493 = vlaneseq
          %v1494 = vshrl.u32 %v1493, 7
          %v1495 = vsub.s32 0, %v1494
          %v1496 = vrot.slane %v795, %v1495
          %v1497 = vlaneseq
          %v1498 = vshrl.u32 %v1497, 7
          %v1499 = vsub.s32 0, %v1498
          %v1500 = vrot.slane %v778, %v1499
          %v1501 = vlaneseq
          %v1502 = vshrl.u32 %v1501, 7
          %v1503 = vsub.s32 0, %v1502
          %v1504 = vrot.slane %v792, %v1503
          %v1505 = vlaneseq
          %v1506 = vshrl.u32 %v1505, 7
          %v1507 = vsub.s32 0, %v1506
          %v1508 = vrot.slane %v794, %v1507
          %v1509 = vlaneseq
          %v1510 = vshrl.u32 %v1509, 7
          %v1511 = vsub.s32 0, %v1510
          %v1512 = vrot.slane %v796, %v1511
          %v1513 = vlaneseq
          %v1514 = vshrl.u32 %v1513, 7
          %v1515 = vsub.s32 0, %v1514
          %v1516 = vrot.slane %v820, %v1515
          %v1517 = vlaneseq
          %v1518 = vshrl.u32 %v1517, 7
          %v1519 = vsub.s32 0, %v1518
          %v1520 = vrot.slane %v834, %v1519
          %v1521 = vlaneseq
          %v1522 = vshrl.u32 %v1521, 7
          %v1523 = vsub.s32 0, %v1522
          %v1524 = vrot.slane %v842, %v1523
          %v1525 = vlaneseq
          %v1526 = vshrl.u32 %v1525, 7
          %v1527 = vsub.s32 0, %v1526
          %v1528 = vrot.slane %v844, %v1527
          %v1529 = vlaneseq
          %v1530 = vshrl.u32 %v1529, 7
          %v1531 = vsub.s32 0, %v1530
          %v1532 = vrot.slane %v827, %v1531
          %v1533 = vlaneseq
          %v1534 = vshrl.u32 %v1533, 7
          %v1535 = vsub.s32 0, %v1534
          %v1536 = vrot.slane %v841, %v1535
          %v1537 = vlaneseq
          %v1538 = vshrl.u32 %v1537, 7
          %v1539 = vsub.s32 0, %v1538
          %v1540 = vrot.slane %v843, %v1539
          %v1541 = vlaneseq
          %v1542 = vshrl.u32 %v1541, 7
          %v1543 = vsub.s32 0, %v1542
          %v1544 = vrot.slane %v845, %v1543
          %v1545 = vlaneseq
          %v1546 = vshrl.u32 %v1545, 7
          %v1547 = vsub.s32 0, %v1546
          %v1548 = vrot.slane %v869, %v1547
          %v1549 = vlaneseq
          %v1550 = vshrl.u32 %v1549, 7
          %v1551 = vsub.s32 0, %v1550
          %v1552 = vrot.slane %v883, %v1551
          %v1553 = vlaneseq
          %v1554 = vshrl.u32 %v1553, 7
          %v1555 = vsub.s32 0, %v1554
          %v1556 = vrot.slane %v891, %v1555
          %v1557 = vlaneseq
          %v1558 = vshrl.u32 %v1557, 7
          %v1559 = vsub.s32 0, %v1558
          %v1560 = vrot.slane %v893, %v1559
          %v1561 = vlaneseq
          %v1562 = vshrl.u32 %v1561, 7
          %v1563 = vsub.s32 0, %v1562
          %v1564 = vrot.slane %v876, %v1563
          %v1565 = vlaneseq
          %v1566 = vshrl.u32 %v1565, 7
          %v1567 = vsub.s32 0, %v1566
          %v1568 = vrot.slane %v890, %v1567
          %v1569 = vlaneseq
          %v1570 = vshrl.u32 %v1569, 7
          %v1571 = vsub.s32 0, %v1570
          %v1572 = vrot.slane %v892, %v1571
          %v1573 = vlaneseq
          %v1574 = vshrl.u32 %v1573, 7
          %v1575 = vsub.s32 0, %v1574
          %v1576 = vrot.slane %v894, %v1575
          %v1577 = vlaneseq
          %v1578 = vshrl.u32 %v1577, 7
          %v1579 = vsub.s32 0, %v1578
          %v1580 = vrot.slane %v918, %v1579
          %v1581 = vlaneseq
          %v1582 = vshrl.u32 %v1581, 7
          %v1583 = vsub.s32 0, %v1582
          %v1584 = vrot.slane %v932, %v1583
          %v1585 = vlaneseq
          %v1586 = vshrl.u32 %v1585, 7
          %v1587 = vsub.s32 0, %v1586
          %v1588 = vrot.slane %v940, %v1587
          %v1589 = vlaneseq
          %v1590 = vshrl.u32 %v1589, 7
          %v1591 = vsub.s32 0, %v1590
          %v1592 = vrot.slane %v942, %v1591
          %v1593 = vlaneseq
          %v1594 = vshrl.u32 %v1593, 7
          %v1595 = vsub.s32 0, %v1594
          %v1596 = vrot.slane %v925, %v1595
          %v1597 = vlaneseq
          %v1598 = vshrl.u32 %v1597, 7
          %v1599 = vsub.s32 0, %v1598
          %v1600 = vrot.slane %v939, %v1599
          %v1601 = vlaneseq
          %v1602 = vshrl.u32 %v1601, 7
          %v1603 = vsub.s32 0, %v1602
          %v1604 = vrot.slane %v941, %v1603
          %v1605 = vlaneseq
          %v1606 = vshrl.u32 %v1605, 7
          %v1607 = vsub.s32 0, %v1606
          %v1608 = vrot.slane %v943, %v1607
          %v1609 = vlaneseq
          %v1610 = vshrl.u32 %v1609, 7
          %v1611 = vsub.s32 0, %v1610
          %v1612 = vrot.slane %v967, %v1611
          %v1613 = vlaneseq
          %v1614 = vshrl.u32 %v1613, 7
          %v1615 = vsub.s32 0, %v1614
          %v1616 = vrot.slane %v981, %v1615
          %v1617 = vlaneseq
          %v1618 = vshrl.u32 %v1617, 7
          %v1619 = vsub.s32 0, %v1618
          %v1620 = vrot.slane %v989, %v1619
          %v1621 = vlaneseq
          %v1622 = vshrl.u32 %v1621, 7
          %v1623 = vsub.s32 0, %v1622
          %v1624 = vrot.slane %v991, %v1623
          %v1625 = vlaneseq
          %v1626 = vshrl.u32 %v1625, 7
          %v1627 = vsub.s32 0, %v1626
          %v1628 = vrot.slane %v974, %v1627
          %v1629 = vlaneseq
          %v1630 = vshrl.u32 %v1629, 7
          %v1631 = vsub.s32 0, %v1630
          %v1632 = vrot.slane %v988, %v1631
          %v1633 = vlaneseq
          %v1634 = vshrl.u32 %v1633, 7
          %v1635 = vsub.s32 0, %v1634
          %v1636 = vrot.slane %v990, %v1635
          %v1637 = vlaneseq
          %v1638 = vshrl.u32 %v1637, 7
          %v1639 = vsub.s32 0, %v1638
          %v1640 = vrot.slane %v992, %v1639
          %v1641 = vlaneseq
          %v1642 = vshrl.u32 %v1641, 7
          %v1643 = vsub.s32 0, %v1642
          %v1644 = vrot.slane %v1016, %v1643
          %v1645 = vlaneseq
          %v1646 = vshrl.u32 %v1645, 7
          %v1647 = vsub.s32 0, %v1646
          %v1648 = vrot.slane %v1030, %v1647
          %v1649 = vlaneseq
          %v1650 = vshrl.u32 %v1649, 7
          %v1651 = vsub.s32 0, %v1650
          %v1652 = vrot.slane %v1038, %v1651
          %v1653 = vlaneseq
          %v1654 = vshrl.u32 %v1653, 7
          %v1655 = vsub.s32 0, %v1654
          %v1656 = vrot.slane %v1040, %v1655
          %v1657 = vlaneseq
          %v1658 = vshrl.u32 %v1657, 7
          %v1659 = vsub.s32 0, %v1658
          %v1660 = vrot.slane %v1023, %v1659
          %v1661 = vlaneseq
          %v1662 = vshrl.u32 %v1661, 7
          %v1663 = vsub.s32 0, %v1662
          %v1664 = vrot.slane %v1037, %v1663
          %v1665 = vlaneseq
          %v1666 = vshrl.u32 %v1665, 7
          %v1667 = vsub.s32 0, %v1666
          %v1668 = vrot.slane %v1039, %v1667
          %v1669 = vlaneseq
          %v1670 = vshrl.u32 %v1669, 7
          %v1671 = vsub.s32 0, %v1670
          %v1672 = vrot.slane %v1041, %v1671
          %v1673 = vlaneseq
          %v1674 = vshrl.u32 %v1673, 7
          %v1675 = vsub.s32 0, %v1674
          %v1676 = vrot.slane %v1065, %v1675
          %v1677 = vlaneseq
          %v1678 = vshrl.u32 %v1677, 7
          %v1679 = vsub.s32 0, %v1678
          %v1680 = vrot.slane %v1079, %v1679
          %v1681 = vlaneseq
          %v1682 = vshrl.u32 %v1681, 7
          %v1683 = vsub.s32 0, %v1682
          %v1684 = vrot.slane %v1087, %v1683
          %v1685 = vlaneseq
          %v1686 = vshrl.u32 %v1685, 7
          %v1687 = vsub.s32 0, %v1686
          %v1688 = vrot.slane %v1089, %v1687
          %v1689 = vlaneseq
          %v1690 = vshrl.u32 %v1689, 7
          %v1691 = vsub.s32 0, %v1690
          %v1692 = vrot.slane %v1072, %v1691
          %v1693 = vlaneseq
          %v1694 = vshrl.u32 %v1693, 7
          %v1695 = vsub.s32 0, %v1694
          %v1696 = vrot.slane %v1086, %v1695
          %v1697 = vlaneseq
          %v1698 = vshrl.u32 %v1697, 7
          %v1699 = vsub.s32 0, %v1698
          %v1700 = vrot.slane %v1088, %v1699
          %v1701 = vlaneseq
          %v1702 = vshrl.u32 %v1701, 7
          %v1703 = vsub.s32 0, %v1702
          %v1704 = vrot.slane %v1090, %v1703
          %v1705 = vlaneseq
          %v1706 = vshrl.u32 %v1705, 7
          %v1707 = vsub.s32 0, %v1706
          %v1708 = vrot.slane %v1114, %v1707
          %v1709 = vlaneseq
          %v1710 = vshrl.u32 %v1709, 7
          %v1711 = vsub.s32 0, %v1710
          %v1712 = vrot.slane %v1128, %v1711
          %v1713 = vlaneseq
          %v1714 = vshrl.u32 %v1713, 7
          %v1715 = vsub.s32 0, %v1714
          %v1716 = vrot.slane %v1136, %v1715
          %v1717 = vlaneseq
          %v1718 = vshrl.u32 %v1717, 7
          %v1719 = vsub.s32 0, %v1718
          %v1720 = vrot.slane %v1138, %v1719
          %v1721 = vlaneseq
          %v1722 = vshrl.u32 %v1721, 7
          %v1723 = vsub.s32 0, %v1722
          %v1724 = vrot.slane %v1121, %v1723
          %v1725 = vlaneseq
          %v1726 = vshrl.u32 %v1725, 7
          %v1727 = vsub.s32 0, %v1726
          %v1728 = vrot.slane %v1135, %v1727
          %v1729 = vlaneseq
          %v1730 = vshrl.u32 %v1729, 7
          %v1731 = vsub.s32 0, %v1730
          %v1732 = vrot.slane %v1137, %v1731
          %v1733 = vlaneseq
          %v1734 = vshrl.u32 %v1733, 7
          %v1735 = vsub.s32 0, %v1734
          %v1736 = vrot.slane %v1139, %v1735
          %v1737 = vlaneseq
          %v1738 = vshrl.u32 %v1737, 7
          %v1739 = vsub.s32 0, %v1738
          %v1740 = vrot.slane %v1163, %v1739
          %v1741 = vlaneseq
          %v1742 = vshrl.u32 %v1741, 7
          %v1743 = vsub.s32 0, %v1742
          %v1744 = vrot.slane %v1177, %v1743
          %v1745 = vlaneseq
          %v1746 = vshrl.u32 %v1745, 7
          %v1747 = vsub.s32 0, %v1746
          %v1748 = vrot.slane %v1185, %v1747
          %v1749 = vlaneseq
          %v1750 = vshrl.u32 %v1749, 7
          %v1751 = vsub.s32 0, %v1750
          %v1752 = vrot.slane %v1187, %v1751
          %v1753 = vlaneseq
          %v1754 = vshrl.u32 %v1753, 7
          %v1755 = vsub.s32 0, %v1754
          %v1756 = vrot.slane %v1170, %v1755
          %v1757 = vlaneseq
          %v1758 = vshrl.u32 %v1757, 7
          %v1759 = vsub.s32 0, %v1758
          %v1760 = vrot.slane %v1184, %v1759
          %v1761 = vlaneseq
          %v1762 = vshrl.u32 %v1761, 7
          %v1763 = vsub.s32 0, %v1762
          %v1764 = vrot.slane %v1186, %v1763
          %v1765 = vlaneseq
          %v1766 = vshrl.u32 %v1765, 7
          %v1767 = vsub.s32 0, %v1766
          %v1768 = vrot.slane %v1188, %v1767
          %v1769 = vlaneseq
          %v1770 = vshrl.u32 %v1769, 7
          %v1771 = vsub.s32 0, %v1770
          %v1772 = vrot.slane %v1212, %v1771
          %v1773 = vlaneseq
          %v1774 = vshrl.u32 %v1773, 7
          %v1775 = vsub.s32 0, %v1774
          %v1776 = vrot.slane %v1226, %v1775
          %v1777 = vlaneseq
          %v1778 = vshrl.u32 %v1777, 7
          %v1779 = vsub.s32 0, %v1778
          %v1780 = vrot.slane %v1234, %v1779
          %v1781 = vlaneseq
          %v1782 = vshrl.u32 %v1781, 7
          %v1783 = vsub.s32 0, %v1782
          %v1784 = vrot.slane %v1236, %v1783
          %v1785 = vlaneseq
          %v1786 = vshrl.u32 %v1785, 7
          %v1787 = vsub.s32 0, %v1786
          %v1788 = vrot.slane %v1219, %v1787
          %v1789 = vlaneseq
          %v1790 = vshrl.u32 %v1789, 7
          %v1791 = vsub.s32 0, %v1790
          %v1792 = vrot.slane %v1233, %v1791
          %v1793 = vlaneseq
          %v1794 = vshrl.u32 %v1793, 7
          %v1795 = vsub.s32 0, %v1794
          %v1796 = vrot.slane %v1235, %v1795
          %v1797 = vlaneseq
          %v1798 = vshrl.u32 %v1797, 7
          %v1799 = vsub.s32 0, %v1798
          %v1800 = vrot.slane %v1237, %v1799
          %v1801 = vlaneseq
          %v1802 = vshrl.u32 %v1801, 7
          %v1803 = vsub.s32 0, %v1802
          %v1804 = vrot.slane %v1261, %v1803
          %v1805 = vlaneseq
          %v1806 = vshrl.u32 %v1805, 7
          %v1807 = vsub.s32 0, %v1806
          %v1808 = vrot.slane %v1275, %v1807
          %v1809 = vlaneseq
          %v1810 = vshrl.u32 %v1809, 7
          %v1811 = vsub.s32 0, %v1810
          %v1812 = vrot.slane %v1283, %v1811
          %v1813 = vlaneseq
          %v1814 = vshrl.u32 %v1813, 7
          %v1815 = vsub.s32 0, %v1814
          %v1816 = vrot.slane %v1285, %v1815
          %v1817 = vlaneseq
          %v1818 = vshrl.u32 %v1817, 7
          %v1819 = vsub.s32 0, %v1818
          %v1820 = vrot.slane %v1268, %v1819
          %v1821 = vlaneseq
          %v1822 = vshrl.u32 %v1821, 7
          %v1823 = vsub.s32 0, %v1822
          %v1824 = vrot.slane %v1282, %v1823
          %v1825 = vlaneseq
          %v1826 = vshrl.u32 %v1825, 7
          %v1827 = vsub.s32 0, %v1826
          %v1828 = vrot.slane %v1284, %v1827
          %v1829 = vlaneseq
          %v1830 = vshrl.u32 %v1829, 7
          %v1831 = vsub.s32 0, %v1830
          %v1832 = vrot.slane %v1286, %v1831
          %v1833 = vlaneseq
          %v1834 = vshrl.u32 %v1833, 7
          %v1835 = vsub.s32 0, %v1834
          %v1836 = vrot.slane %v1310, %v1835
          %v1837 = vlaneseq
          %v1838 = vshrl.u32 %v1837, 7
          %v1839 = vsub.s32 0, %v1838
          %v1840 = vrot.slane %v1324, %v1839
          %v1841 = vlaneseq
          %v1842 = vshrl.u32 %v1841, 7
          %v1843 = vsub.s32 0, %v1842
          %v1844 = vrot.slane %v1332, %v1843
          %v1845 = vlaneseq
          %v1846 = vshrl.u32 %v1845, 7
          %v1847 = vsub.s32 0, %v1846
          %v1848 = vrot.slane %v1334, %v1847
          %v1849 = vlaneseq
          %v1850 = vshrl.u32 %v1849, 7
          %v1851 = vsub.s32 0, %v1850
          %v1852 = vrot.slane %v1317, %v1851
          %v1853 = vlaneseq
          %v1854 = vshrl.u32 %v1853, 7
          %v1855 = vsub.s32 0, %v1854
          %v1856 = vrot.slane %v1331, %v1855
          %v1857 = vlaneseq
          %v1858 = vshrl.u32 %v1857, 7
          %v1859 = vsub.s32 0, %v1858
          %v1860 = vrot.slane %v1333, %v1859
          %v1861 = vlaneseq
          %v1862 = vshrl.u32 %v1861, 7
          %v1863 = vsub.s32 0, %v1862
          %v1864 = vrot.slane %v1335, %v1863
          %v1865 = vlaneseq
          %v1866 = vshrl.u32 %v1865, 7
          %v1867 = vsub.s32 0, %v1866
          %v1868 = vrot.slane %v1359, %v1867
          %v1869 = vlaneseq
          %v1870 = vshrl.u32 %v1869, 7
          %v1871 = vsub.s32 0, %v1870
          %v1872 = vrot.slane %v1373, %v1871
          %v1873 = vlaneseq
          %v1874 = vshrl.u32 %v1873, 7
          %v1875 = vsub.s32 0, %v1874
          %v1876 = vrot.slane %v1381, %v1875
          %v1877 = vlaneseq
          %v1878 = vshrl.u32 %v1877, 7
          %v1879 = vsub.s32 0, %v1878
          %v1880 = vrot.slane %v1383, %v1879
          %v1881 = vlaneseq
          %v1882 = vshrl.u32 %v1881, 7
          %v1883 = vsub.s32 0, %v1882
          %v1884 = vrot.slane %v1366, %v1883
          %v1885 = vlaneseq
          %v1886 = vshrl.u32 %v1885, 7
          %v1887 = vsub.s32 0, %v1886
          %v1888 = vrot.slane %v1380, %v1887
          %v1889 = vlaneseq
          %v1890 = vshrl.u32 %v1889, 7
          %v1891 = vsub.s32 0, %v1890
          %v1892 = vrot.slane %v1382, %v1891
          %v1893 = vlaneseq
          %v1894 = vshrl.u32 %v1893, 7
          %v1895 = vsub.s32 0, %v1894
          %v1896 = vrot.slane %v1384, %v1895
          %v2025 = vsub.f32 %v1388, %v583
          %v2026 = vsub.f32 %v1388, %v584
          %v2027 = vsub.f32 %v1392, %v583
          %v2028 = vsub.f32 %v1392, %v584
          %v2029 = vsub.f32 %v1396, %v583
          %v2030 = vsub.f32 %v1396, %v584
          %v2031 = vsub.f32 %v1400, %v583
          %v2032 = vsub.f32 %v1400, %v584
          %v2033 = vsub.f32 %v1404, %v583
          %v2034 = vsub.f32 %v1404, %v584
          %v2035 = vsub.f32 %v1408, %v583
          %v2036 = vsub.f32 %v1408, %v584
          %v2037 = vsub.f32 %v1412, %v583
          %v2038 = vsub.f32 %v1412, %v584
          %v2039 = vsub.f32 %v1416, %v583
          %v2040 = vsub.f32 %v1416, %v584
          %v2041 = vsub.f32 %v1420, %v583
          %v2042 = vsub.f32 %v1420, %v584
          %v2043 = vsub.f32 %v1424, %v583
          %v2044 = vsub.f32 %v1424, %v584
          %v2045 = vsub.f32 %v1428, %v583
          %v2046 = vsub.f32 %v1428, %v584
          %v2047 = vsub.f32 %v1432, %v583
          %v2048 = vsub.f32 %v1432, %v584
          %v2049 = vsub.f32 %v1436, %v583
          %v2050 = vsub.f32 %v1436, %v584
          %v2051 = vsub.f32 %v1440, %v583
          %v2052 = vsub.f32 %v1440, %v584
          %v2053 = vsub.f32 %v1444, %v583
          %v2054 = vsub.f32 %v1444, %v584
          %v2055 = vsub.f32 %v1448, %v583
          %v2056 = vsub.f32 %v1448, %v584
          %v2057 = vsub.f32 %v1452, %v583
          %v2058 = vsub.f32 %v1452, %v584
          %v2059 = vsub.f32 %v1456, %v583
          %v2060 = vsub.f32 %v1456, %v584
          %v2061 = vsub.f32 %v1460, %v583
          %v2062 = vsub.f32 %v1460, %v584
          %v2063 = vsub.f32 %v1464, %v583
          %v2064 = vsub.f32 %v1464, %v584
          %v2065 = vsub.f32 %v1468, %v583
          %v2066 = vsub.f32 %v1468, %v584
          %v2067 = vsub.f32 %v1472, %v583
          %v2068 = vsub.f32 %v1472, %v584
          %v2069 = vsub.f32 %v1476, %v583
          %v2070 = vsub.f32 %v1476, %v584
          %v2071 = vsub.f32 %v1480, %v583
          %v2072 = vsub.f32 %v1480, %v584
          %v2073 = vsub.f32 %v1484, %v583
          %v2074 = vsub.f32 %v1484, %v584
          %v2075 = vsub.f32 %v1488, %v583
          %v2076 = vsub.f32 %v1488, %v584
          %v2077 = vsub.f32 %v1492, %v583
          %v2078 = vsub.f32 %v1492, %v584
          %v2079 = vsub.f32 %v1496, %v583
          %v2080 = vsub.f32 %v1496, %v584
          %v2081 = vsub.f32 %v1500, %v583
          %v2082 = vsub.f32 %v1500, %v584
          %v2083 = vsub.f32 %v1504, %v583
          %v2084 = vsub.f32 %v1504, %v584
          %v2085 = vsub.f32 %v1508, %v583
          %v2086 = vsub.f32 %v1508, %v584
          %v2087 = vsub.f32 %v1512, %v583
          %v2088 = vsub.f32 %v1512, %v584
          %v2089 = vsub.f32 %v1516, %v583
          %v2090 = vsub.f32 %v1516, %v584
          %v2091 = vsub.f32 %v1520, %v583
          %v2092 = vsub.f32 %v1520, %v584
          %v2093 = vsub.f32 %v1524, %v583
          %v2094 = vsub.f32 %v1524, %v584
          %v2095 = vsub.f32 %v1528, %v583
          %v2096 = vsub.f32 %v1528, %v584
          %v2097 = vsub.f32 %v1532, %v583
          %v2098 = vsub.f32 %v1532, %v584
          %v2099 = vsub.f32 %v1536, %v583
          %v2100 = vsub.f32 %v1536, %v584
          %v2101 = vsub.f32 %v1540, %v583
          %v2102 = vsub.f32 %v1540, %v584
          %v2103 = vsub.f32 %v1544, %v583
          %v2104 = vsub.f32 %v1544, %v584
          %v2105 = vsub.f32 %v1548, %v583
          %v2106 = vsub.f32 %v1548, %v584
          %v2107 = vsub.f32 %v1552, %v583
          %v2108 = vsub.f32 %v1552, %v584
          %v2109 = vsub.f32 %v1556, %v583
          %v2110 = vsub.f32 %v1556, %v584
          %v2111 = vsub.f32 %v1560, %v583
          %v2112 = vsub.f32 %v1560, %v584
          %v2113 = vsub.f32 %v1564, %v583
          %v2114 = vsub.f32 %v1564, %v584
          %v2115 = vsub.f32 %v1568, %v583
          %v2116 = vsub.f32 %v1568, %v584
          %v2117 = vsub.f32 %v1572, %v583
          %v2118 = vsub.f32 %v1572, %v584
          %v2119 = vsub.f32 %v1576, %v583
          %v2120 = vsub.f32 %v1576, %v584
          %v2121 = vsub.f32 %v1580, %v583
          %v2122 = vsub.f32 %v1580, %v584
          %v2123 = vsub.f32 %v1584, %v583
          %v2124 = vsub.f32 %v1584, %v584
          %v2125 = vsub.f32 %v1588, %v583
          %v2126 = vsub.f32 %v1588, %v584
          %v2127 = vsub.f32 %v1592, %v583
          %v2128 = vsub.f32 %v1592, %v584
          %v2129 = vsub.f32 %v1596, %v583
          %v2130 = vsub.f32 %v1596, %v584
          %v2131 = vsub.f32 %v1600, %v583
          %v2132 = vsub.f32 %v1600, %v584
          %v2133 = vsub.f32 %v1604, %v583
          %v2134 = vsub.f32 %v1604, %v584
          %v2135 = vsub.f32 %v1608, %v583
          %v2136 = vsub.f32 %v1608, %v584
          %v2137 = vsub.f32 %v1612, %v583
          %v2138 = vsub.f32 %v1612, %v584
          %v2139 = vsub.f32 %v1616, %v583
          %v2140 = vsub.f32 %v1616, %v584
          %v2141 = vsub.f32 %v1620, %v583
          %v2142 = vsub.f32 %v1620, %v584
          %v2143 = vsub.f32 %v1624, %v583
          %v2144 = vsub.f32 %v1624, %v584
          %v2145 = vsub.f32 %v1628, %v583
          %v2146 = vsub.f32 %v1628, %v584
          %v2147 = vsub.f32 %v1632, %v583
          %v2148 = vsub.f32 %v1632, %v584
          %v2149 = vsub.f32 %v1636, %v583
          %v2150 = vsub.f32 %v1636, %v584
          %v2151 = vsub.f32 %v1640, %v583
          %v2152 = vsub.f32 %v1640, %v584
          %v2153 = vsub.f32 %v1644, %v583
          %v2154 = vsub.f32 %v1644, %v584
          %v2155 = vsub.f32 %v1648, %v583
          %v2156 = vsub.f32 %v1648, %v584
          %v2157 = vsub.f32 %v1652, %v583
          %v2158 = vsub.f32 %v1652, %v584
          %v2159 = vsub.f32 %v1656, %v583
          %v2160 = vsub.f32 %v1656, %v584
          %v2161 = vsub.f32 %v1660, %v583
          %v2162 = vsub.f32 %v1660, %v584
          %v2163 = vsub.f32 %v1664, %v583
          %v2164 = vsub.f32 %v1664, %v584
          %v2165 = vsub.f32 %v1668, %v583
          %v2166 = vsub.f32 %v1668, %v584
          %v2167 = vsub.f32 %v1672, %v583
          %v2168 = vsub.f32 %v1672, %v584
          %v2169 = vsub.f32 %v1676, %v583
          %v2170 = vsub.f32 %v1676, %v584
          %v2171 = vsub.f32 %v1680, %v583
          %v2172 = vsub.f32 %v1680, %v584
          %v2173 = vsub.f32 %v1684, %v583
          %v2174 = vsub.f32 %v1684, %v584
          %v2175 = vsub.f32 %v1688, %v583
          %v2176 = vsub.f32 %v1688, %v584
          %v2177 = vsub.f32 %v1692, %v583
          %v2178 = vsub.f32 %v1692, %v584
          %v2179 = vsub.f32 %v1696, %v583
          %v2180 = vsub.f32 %v1696, %v584
          %v2181 = vsub.f32 %v1700, %v583
          %v2182 = vsub.f32 %v1700, %v584
          %v2183 = vsub.f32 %v1704, %v583
          %v2184 = vsub.f32 %v1704, %v584
          %v2185 = vsub.f32 %v1708, %v583
          %v2186 = vsub.f32 %v1708, %v584
          %v2187 = vsub.f32 %v1712, %v583
          %v2188 = vsub.f32 %v1712, %v584
          %v2189 = vsub.f32 %v1716, %v583
          %v2190 = vsub.f32 %v1716, %v584
          %v2191 = vsub.f32 %v1720, %v583
          %v2192 = vsub.f32 %v1720, %v584
          %v2193 = vsub.f32 %v1724, %v583
          %v2194 = vsub.f32 %v1724, %v584
          %v2195 = vsub.f32 %v1728, %v583
          %v2196 = vsub.f32 %v1728, %v584
          %v2197 = vsub.f32 %v1732, %v583
          %v2198 = vsub.f32 %v1732, %v584
          %v2199 = vsub.f32 %v1736, %v583
          %v2200 = vsub.f32 %v1736, %v584
          %v2201 = vsub.f32 %v1740, %v583
          %v2202 = vsub.f32 %v1740, %v584
          %v2203 = vsub.f32 %v1744, %v583
          %v2204 = vsub.f32 %v1744, %v584
          %v2205 = vsub.f32 %v1748, %v583
          %v2206 = vsub.f32 %v1748, %v584
          %v2207 = vsub.f32 %v1752, %v583
          %v2208 = vsub.f32 %v1752, %v584
          %v2209 = vsub.f32 %v1756, %v583
          %v2210 = vsub.f32 %v1756, %v584
          %v2211 = vsub.f32 %v1760, %v583
          %v2212 = vsub.f32 %v1760, %v584
          %v2213 = vsub.f32 %v1764, %v583
          %v2214 = vsub.f32 %v1764, %v584
          %v2215 = vsub.f32 %v1768, %v583
          %v2216 = vsub.f32 %v1768, %v584
          %v2217 = vsub.f32 %v1772, %v583
          %v2218 = vsub.f32 %v1772, %v584
          %v2219 = vsub.f32 %v1776, %v583
          %v2220 = vsub.f32 %v1776, %v584
          %v2221 = vsub.f32 %v1780, %v583
          %v2222 = vsub.f32 %v1780, %v584
          %v2223 = vsub.f32 %v1784, %v583
          %v2224 = vsub.f32 %v1784, %v584
          %v2225 = vsub.f32 %v1788, %v583
          %v2226 = vsub.f32 %v1788, %v584
          %v2227 = vsub.f32 %v1792, %v583
          %v2228 = vsub.f32 %v1792, %v584
          %v2229 = vsub.f32 %v1796, %v583
          %v2230 = vsub.f32 %v1796, %v584
          %v2231 = vsub.f32 %v1800, %v583
          %v2232 = vsub.f32 %v1800, %v584
          %v2233 = vsub.f32 %v1804, %v583
          %v2234 = vsub.f32 %v1804, %v584
          %v2235 = vsub.f32 %v1808, %v583
          %v2236 = vsub.f32 %v1808, %v584
          %v2237 = vsub.f32 %v1812, %v583
          %v2238 = vsub.f32 %v1812, %v584
          %v2239 = vsub.f32 %v1816, %v583
          %v2240 = vsub.f32 %v1816, %v584
          %v2241 = vsub.f32 %v1820, %v583
          %v2242 = vsub.f32 %v1820, %v584
          %v2243 = vsub.f32 %v1824, %v583
          %v2244 = vsub.f32 %v1824, %v584
          %v2245 = vsub.f32 %v1828, %v583
          %v2246 = vsub.f32 %v1828, %v584
          %v2247 = vsub.f32 %v1832, %v583
          %v2248 = vsub.f32 %v1832, %v584
          %v2249 = vsub.f32 %v1836, %v583
          %v2250 = vsub.f32 %v1836, %v584
          %v2251 = vsub.f32 %v1840, %v583
          %v2252 = vsub.f32 %v1840, %v584
          %v2253 = vsub.f32 %v1844, %v583
          %v2254 = vsub.f32 %v1844, %v584
          %v2255 = vsub.f32 %v1848, %v583
          %v2256 = vsub.f32 %v1848, %v584
          %v2257 = vsub.f32 %v1852, %v583
          %v2258 = vsub.f32 %v1852, %v584
          %v2259 = vsub.f32 %v1856, %v583
          %v2260 = vsub.f32 %v1856, %v584
          %v2261 = vsub.f32 %v1860, %v583
          %v2262 = vsub.f32 %v1860, %v584
          %v2263 = vsub.f32 %v1864, %v583
          %v2264 = vsub.f32 %v1864, %v584
          %v2265 = vsub.f32 %v1868, %v583
          %v2266 = vsub.f32 %v1868, %v584
          %v2267 = vsub.f32 %v1872, %v583
          %v2268 = vsub.f32 %v1872, %v584
          %v2269 = vsub.f32 %v1876, %v583
          %v2270 = vsub.f32 %v1876, %v584
          %v2271 = vsub.f32 %v1880, %v583
          %v2272 = vsub.f32 %v1880, %v584
          %v2273 = vsub.f32 %v1884, %v583
          %v2274 = vsub.f32 %v1884, %v584
          %v2275 = vsub.f32 %v1888, %v583
          %v2276 = vsub.f32 %v1888, %v584
          %v2277 = vsub.f32 %v1892, %v583
          %v2278 = vsub.f32 %v1892, %v584
          %v2279 = vsub.f32 %v1896, %v583
          %v2280 = vsub.f32 %v1896, %v584
          %v2281 = vand.u32 2147483647, %v2025
          %v2282 = vand.u32 2147483647, %v2026
          %v2283 = vand.u32 2147483647, %v2027
          %v2284 = vand.u32 2147483647, %v2028
          %v2285 = vand.u32 2147483647, %v2029
          %v2286 = vand.u32 2147483647, %v2030
          %v2287 = vand.u32 2147483647, %v2031
          %v2288 = vand.u32 2147483647, %v2032
          %v2289 = vand.u32 2147483647, %v2033
          %v2290 = vand.u32 2147483647, %v2034
          %v2291 = vand.u32 2147483647, %v2035
          %v2292 = vand.u32 2147483647, %v2036
          %v2293 = vand.u32 2147483647, %v2037
          %v2294 = vand.u32 2147483647, %v2038
          %v2295 = vand.u32 2147483647, %v2039
          %v2296 = vand.u32 2147483647, %v2040
          %v2297 = vand.u32 2147483647, %v2041
          %v2298 = vand.u32 2147483647, %v2042
          %v2299 = vand.u32 2147483647, %v2043
          %v2300 = vand.u32 2147483647, %v2044
          %v2301 = vand.u32 2147483647, %v2045
          %v2302 = vand.u32 2147483647, %v2046
          %v2303 = vand.u32 2147483647, %v2047
          %v2304 = vand.u32 2147483647, %v2048
          %v2305 = vand.u32 2147483647, %v2049
          %v2306 = vand.u32 2147483647, %v2050
          %v2307 = vand.u32 2147483647, %v2051
          %v2308 = vand.u32 2147483647, %v2052
          %v2309 = vand.u32 2147483647, %v2053
          %v2310 = vand.u32 2147483647, %v2054
          %v2311 = vand.u32 2147483647, %v2055
          %v2312 = vand.u32 2147483647, %v2056
          %v2313 = vand.u32 2147483647, %v2057
          %v2314 = vand.u32 2147483647, %v2058
          %v2315 = vand.u32 2147483647, %v2059
          %v2316 = vand.u32 2147483647, %v2060
          %v2317 = vand.u32 2147483647, %v2061
          %v2318 = vand.u32 2147483647, %v2062
          %v2319 = vand.u32 2147483647, %v2063
          %v2320 = vand.u32 2147483647, %v2064
          %v2321 = vand.u32 2147483647, %v2065
          %v2322 = vand.u32 2147483647, %v2066
          %v2323 = vand.u32 2147483647, %v2067
          %v2324 = vand.u32 2147483647, %v2068
          %v2325 = vand.u32 2147483647, %v2069
          %v2326 = vand.u32 2147483647, %v2070
          %v2327 = vand.u32 2147483647, %v2071
          %v2328 = vand.u32 2147483647, %v2072
          %v2329 = vand.u32 2147483647, %v2073
          %v2330 = vand.u32 2147483647, %v2074
          %v2331 = vand.u32 2147483647, %v2075
          %v2332 = vand.u32 2147483647, %v2076
          %v2333 = vand.u32 2147483647, %v2077
          %v2334 = vand.u32 2147483647, %v2078
          %v2335 = vand.u32 2147483647, %v2079
          %v2336 = vand.u32 2147483647, %v2080
          %v2337 = vand.u32 2147483647, %v2081
          %v2338 = vand.u32 2147483647, %v2082
          %v2339 = vand.u32 2147483647, %v2083
          %v2340 = vand.u32 2147483647, %v2084
          %v2341 = vand.u32 2147483647, %v2085
          %v2342 = vand.u32 2147483647, %v2086
          %v2343 = vand.u32 2147483647, %v2087
          %v2344 = vand.u32 2147483647, %v2088
          %v2345 = vand.u32 2147483647, %v2089
          %v2346 = vand.u32 2147483647, %v2090
          %v2347 = vand.u32 2147483647, %v2091
          %v2348 = vand.u32 2147483647, %v2092
          %v2349 = vand.u32 2147483647, %v2093
          %v2350 = vand.u32 2147483647, %v2094
          %v2351 = vand.u32 2147483647, %v2095
          %v2352 = vand.u32 2147483647, %v2096
          %v2353 = vand.u32 2147483647, %v2097
          %v2354 = vand.u32 2147483647, %v2098
          %v2355 = vand.u32 2147483647, %v2099
          %v2356 = vand.u32 2147483647, %v2100
          %v2357 = vand.u32 2147483647, %v2101
          %v2358 = vand.u32 2147483647, %v2102
          %v2359 = vand.u32 2147483647, %v2103
          %v2360 = vand.u32 2147483647, %v2104
          %v2361 = vand.u32 2147483647, %v2105
          %v2362 = vand.u32 2147483647, %v2106
          %v2363 = vand.u32 2147483647, %v2107
          %v2364 = vand.u32 2147483647, %v2108
          %v2365 = vand.u32 2147483647, %v2109
          %v2366 = vand.u32 2147483647, %v2110
          %v2367 = vand.u32 2147483647, %v2111
          %v2368 = vand.u32 2147483647, %v2112
          %v2369 = vand.u32 2147483647, %v2113
          %v2370 = vand.u32 2147483647, %v2114
          %v2371 = vand.u32 2147483647, %v2115
          %v2372 = vand.u32 2147483647, %v2116
          %v2373 = vand.u32 2147483647, %v2117
          %v2374 = vand.u32 2147483647, %v2118
          %v2375 = vand.u32 2147483647, %v2119
          %v2376 = vand.u32 2147483647, %v2120
          %v2377 = vand.u32 2147483647, %v2121
          %v2378 = vand.u32 2147483647, %v2122
          %v2379 = vand.u32 2147483647, %v2123
          %v2380 = vand.u32 2147483647, %v2124
          %v2381 = vand.u32 2147483647, %v2125
          %v2382 = vand.u32 2147483647, %v2126
          %v2383 = vand.u32 2147483647, %v2127
          %v2384 = vand.u32 2147483647, %v2128
          %v2385 = vand.u32 2147483647, %v2129
          %v2386 = vand.u32 2147483647, %v2130
          %v2387 = vand.u32 2147483647, %v2131
          %v2388 = vand.u32 2147483647, %v2132
          %v2389 = vand.u32 2147483647, %v2133
          %v2390 = vand.u32 2147483647, %v2134
          %v2391 = vand.u32 2147483647, %v2135
          %v2392 = vand.u32 2147483647, %v2136
          %v2393 = vand.u32 2147483647, %v2137
          %v2394 = vand.u32 2147483647, %v2138
          %v2395 = vand.u32 2147483647, %v2139
          %v2396 = vand.u32 2147483647, %v2140
          %v2397 = vand.u32 2147483647, %v2141
          %v2398 = vand.u32 2147483647, %v2142
          %v2399 = vand.u32 2147483647, %v2143
          %v2400 = vand.u32 2147483647, %v2144
          %v2401 = vand.u32 2147483647, %v2145
          %v2402 = vand.u32 2147483647, %v2146
          %v2403 = vand.u32 2147483647, %v2147
          %v2404 = vand.u32 2147483647, %v2148
          %v2405 = vand.u32 2147483647, %v2149
          %v2406 = vand.u32 2147483647, %v2150
          %v2407 = vand.u32 2147483647, %v2151
          %v2408 = vand.u32 2147483647, %v2152
          %v2409 = vand.u32 2147483647, %v2153
          %v2410 = vand.u32 2147483647, %v2154
          %v2411 = vand.u32 2147483647, %v2155
          %v2412 = vand.u32 2147483647, %v2156
          %v2413 = vand.u32 2147483647, %v2157
          %v2414 = vand.u32 2147483647, %v2158
          %v2415 = vand.u32 2147483647, %v2159
          %v2416 = vand.u32 2147483647, %v2160
          %v2417 = vand.u32 2147483647, %v2161
          %v2418 = vand.u32 2147483647, %v2162
          %v2419 = vand.u32 2147483647, %v2163
          %v2420 = vand.u32 2147483647, %v2164
          %v2421 = vand.u32 2147483647, %v2165
          %v2422 = vand.u32 2147483647, %v2166
          %v2423 = vand.u32 2147483647, %v2167
          %v2424 = vand.u32 2147483647, %v2168
          %v2425 = vand.u32 2147483647, %v2169
          %v2426 = vand.u32 2147483647, %v2170
          %v2427 = vand.u32 2147483647, %v2171
          %v2428 = vand.u32 2147483647, %v2172
          %v2429 = vand.u32 2147483647, %v2173
          %v2430 = vand.u32 2147483647, %v2174
          %v2431 = vand.u32 2147483647, %v2175
          %v2432 = vand.u32 2147483647, %v2176
          %v2433 = vand.u32 2147483647, %v2177
          %v2434 = vand.u32 2147483647, %v2178
          %v2435 = vand.u32 2147483647, %v2179
          %v2436 = vand.u32 2147483647, %v2180
          %v2437 = vand.u32 2147483647, %v2181
          %v2438 = vand.u32 2147483647, %v2182
          %v2439 = vand.u32 2147483647, %v2183
          %v2440 = vand.u32 2147483647, %v2184
          %v2441 = vand.u32 2147483647, %v2185
          %v2442 = vand.u32 2147483647, %v2186
          %v2443 = vand.u32 2147483647, %v2187
          %v2444 = vand.u32 2147483647, %v2188
          %v2445 = vand.u32 2147483647, %v2189
          %v2446 = vand.u32 2147483647, %v2190
          %v2447 = vand.u32 2147483647, %v2191
          %v2448 = vand.u32 2147483647, %v2192
          %v2449 = vand.u32 2147483647, %v2193
          %v2450 = vand.u32 2147483647, %v2194
          %v2451 = vand.u32 2147483647, %v2195
          %v2452 = vand.u32 2147483647, %v2196
          %v2453 = vand.u32 2147483647, %v2197
          %v2454 = vand.u32 2147483647, %v2198
          %v2455 = vand.u32 2147483647, %v2199
          %v2456 = vand.u32 2147483647, %v2200
          %v2457 = vand.u32 2147483647, %v2201
          %v2458 = vand.u32 2147483647, %v2202
          %v2459 = vand.u32 2147483647, %v2203
          %v2460 = vand.u32 2147483647, %v2204
          %v2461 = vand.u32 2147483647, %v2205
          %v2462 = vand.u32 2147483647, %v2206
          %v2463 = vand.u32 2147483647, %v2207
          %v2464 = vand.u32 2147483647, %v2208
          %v2465 = vand.u32 2147483647, %v2209
          %v2466 = vand.u32 2147483647, %v2210
          %v2467 = vand.u32 2147483647, %v2211
          %v2468 = vand.u32 2147483647, %v2212
          %v2469 = vand.u32 2147483647, %v2213
          %v2470 = vand.u32 2147483647, %v2214
          %v2471 = vand.u32 2147483647, %v2215
          %v2472 = vand.u32 2147483647, %v2216
          %v2473 = vand.u32 2147483647, %v2217
          %v2474 = vand.u32 2147483647, %v2218
          %v2475 = vand.u32 2147483647, %v2219
          %v2476 = vand.u32 2147483647, %v2220
          %v2477 = vand.u32 2147483647, %v2221
          %v2478 = vand.u32 2147483647, %v2222
          %v2479 = vand.u32 2147483647, %v2223
          %v2480 = vand.u32 2147483647, %v2224
          %v2481 = vand.u32 2147483647, %v2225
          %v2482 = vand.u32 2147483647, %v2226
          %v2483 = vand.u32 2147483647, %v2227
          %v2484 = vand.u32 2147483647, %v2228
          %v2485 = vand.u32 2147483647, %v2229
          %v2486 = vand.u32 2147483647, %v2230
          %v2487 = vand.u32 2147483647, %v2231
          %v2488 = vand.u32 2147483647, %v2232
          %v2489 = vand.u32 2147483647, %v2233
          %v2490 = vand.u32 2147483647, %v2234
          %v2491 = vand.u32 2147483647, %v2235
          %v2492 = vand.u32 2147483647, %v2236
          %v2493 = vand.u32 2147483647, %v2237
          %v2494 = vand.u32 2147483647, %v2238
          %v2495 = vand.u32 2147483647, %v2239
          %v2496 = vand.u32 2147483647, %v2240
          %v2497 = vand.u32 2147483647, %v2241
          %v2498 = vand.u32 2147483647, %v2242
          %v2499 = vand.u32 2147483647, %v2243
          %v2500 = vand.u32 2147483647, %v2244
          %v2501 = vand.u32 2147483647, %v2245
          %v2502 = vand.u32 2147483647, %v2246
          %v2503 = vand.u32 2147483647, %v2247
          %v2504 = vand.u32 2147483647, %v2248
          %v2505 = vand.u32 2147483647, %v2249
          %v2506 = vand.u32 2147483647, %v2250
          %v2507 = vand.u32 2147483647, %v2251
          %v2508 = vand.u32 2147483647, %v2252
          %v2509 = vand.u32 2147483647, %v2253
          %v2510 = vand.u32 2147483647, %v2254
          %v2511 = vand.u32 2147483647, %v2255
          %v2512 = vand.u32 2147483647, %v2256
          %v2513 = vand.u32 2147483647, %v2257
          %v2514 = vand.u32 2147483647, %v2258
          %v2515 = vand.u32 2147483647, %v2259
          %v2516 = vand.u32 2147483647, %v2260
          %v2517 = vand.u32 2147483647, %v2261
          %v2518 = vand.u32 2147483647, %v2262
          %v2519 = vand.u32 2147483647, %v2263
          %v2520 = vand.u32 2147483647, %v2264
          %v2521 = vand.u32 2147483647, %v2265
          %v2522 = vand.u32 2147483647, %v2266
          %v2523 = vand.u32 2147483647, %v2267
          %v2524 = vand.u32 2147483647, %v2268
          %v2525 = vand.u32 2147483647, %v2269
          %v2526 = vand.u32 2147483647, %v2270
          %v2527 = vand.u32 2147483647, %v2271
          %v2528 = vand.u32 2147483647, %v2272
          %v2529 = vand.u32 2147483647, %v2273
          %v2530 = vand.u32 2147483647, %v2274
          %v2531 = vand.u32 2147483647, %v2275
          %v2532 = vand.u32 2147483647, %v2276
          %v2533 = vand.u32 2147483647, %v2277
          %v2534 = vand.u32 2147483647, %v2278
          %v2535 = vand.u32 2147483647, %v2279
          %v2536 = vand.u32 2147483647, %v2280
          %v2537 = vld [vmem:[#allocation3] sm:$0xff]
          %v2538 = vld [vmem:[#allocation3 + $0x8] sm:$0xff]
          %v2539 = vld [vmem:[#allocation3 + $0x10] sm:$0xff]
          %v2540 = vld [vmem:[#allocation3 + $0x18] sm:$0xff]
          %v2541 = vld [vmem:[#allocation3 + $0x20] sm:$0xff]
          %v2542 = vld [vmem:[#allocation3 + $0x28] sm:$0xff]
          %v2543 = vld [vmem:[#allocation3 + $0x30] sm:$0xff]
          %v2544 = vld [vmem:[#allocation3 + $0x38] sm:$0xff]
          %v2545 = vld [vmem:[#allocation3 + $0x40] sm:$0xff]
          %v2546 = vld [vmem:[#allocation3 + $0x48] sm:$0xff]
          %v2547 = vld [vmem:[#allocation3 + $0x50] sm:$0xff]
          %v2548 = vld [vmem:[#allocation3 + $0x58] sm:$0xff]
          %v2549 = vld [vmem:[#allocation3 + $0x60] sm:$0xff]
          %v2550 = vld [vmem:[#allocation3 + $0x68] sm:$0xff]
          %v2551 = vld [vmem:[#allocation3 + $0x70] sm:$0xff]
          %v2552 = vld [vmem:[#allocation3 + $0x78] sm:$0xff]
          %v2553 = vadd.f32 %v2281, %v2282
          %v2554 = vrot.slane %v2553, 4
          %v2555 = vadd.f32 %v2553, %v2554
          %v2556 = vrot.slane %v2555, 2
          %v2557 = vadd.f32 %v2555, %v2556
          %v2558 = vrot.slane %v2557, 1
          %v2559 = vadd.f32 %v2557, %v2558
          %v2560 = vadd.f32 %v2283, %v2284
          %v2561 = vrot.slane %v2560, 4
          %v2562 = vadd.f32 %v2560, %v2561
          %v2563 = vrot.slane %v2562, 2
          %v2564 = vadd.f32 %v2562, %v2563
          %v2565 = vrot.slane %v2564, 1
          %v2566 = vadd.f32 %v2564, %v2565
          %v2567 = vadd.f32 %v2285, %v2286
          %v2568 = vrot.slane %v2567, 4
          %v2569 = vadd.f32 %v2567, %v2568
          %v2570 = vrot.slane %v2569, 2
          %v2571 = vadd.f32 %v2569, %v2570
          %v2572 = vrot.slane %v2571, 1
          %v2573 = vadd.f32 %v2571, %v2572
          %v2574 = vadd.f32 %v2287, %v2288
          %v2575 = vrot.slane %v2574, 4
          %v2576 = vadd.f32 %v2574, %v2575
          %v2577 = vrot.slane %v2576, 2
          %v2578 = vadd.f32 %v2576, %v2577
          %v2579 = vrot.slane %v2578, 1
          %v2580 = vadd.f32 %v2578, %v2579
          %v2581 = vadd.f32 %v2289, %v2290
          %v2582 = vrot.slane %v2581, 4
          %v2583 = vadd.f32 %v2581, %v2582
          %v2584 = vrot.slane %v2583, 2
          %v2585 = vadd.f32 %v2583, %v2584
          %v2586 = vrot.slane %v2585, 1
          %v2587 = vadd.f32 %v2585, %v2586
          %v2588 = vadd.f32 %v2291, %v2292
          %v2589 = vrot.slane %v2588, 4
          %v2590 = vadd.f32 %v2588, %v2589
          %v2591 = vrot.slane %v2590, 2
          %v2592 = vadd.f32 %v2590, %v2591
          %v2593 = vrot.slane %v2592, 1
          %v2594 = vadd.f32 %v2592, %v2593
          %v2595 = vadd.f32 %v2293, %v2294
          %v2596 = vrot.slane %v2595, 4
          %v2597 = vadd.f32 %v2595, %v2596
          %v2598 = vrot.slane %v2597, 2
          %v2599 = vadd.f32 %v2597, %v2598
          %v2600 = vrot.slane %v2599, 1
          %v2601 = vadd.f32 %v2599, %v2600
          %v2602 = vadd.f32 %v2295, %v2296
          %v2603 = vrot.slane %v2602, 4
          %v2604 = vadd.f32 %v2602, %v2603
          %v2605 = vrot.slane %v2604, 2
          %v2606 = vadd.f32 %v2604, %v2605
          %v2607 = vrot.slane %v2606, 1
          %v2608 = vadd.f32 %v2606, %v2607
          %v2609 = vadd.f32 %v2297, %v2298
          %v2610 = vrot.slane %v2609, 4
          %v2611 = vadd.f32 %v2609, %v2610
          %v2612 = vrot.slane %v2611, 2
          %v2613 = vadd.f32 %v2611, %v2612
          %v2614 = vrot.slane %v2613, 1
          %v2615 = vadd.f32 %v2613, %v2614
          %v2616 = vadd.f32 %v2299, %v2300
          %v2617 = vrot.slane %v2616, 4
          %v2618 = vadd.f32 %v2616, %v2617
          %v2619 = vrot.slane %v2618, 2
          %v2620 = vadd.f32 %v2618, %v2619
          %v2621 = vrot.slane %v2620, 1
          %v2622 = vadd.f32 %v2620, %v2621
          %v2623 = vadd.f32 %v2301, %v2302
          %v2624 = vrot.slane %v2623, 4
          %v2625 = vadd.f32 %v2623, %v2624
          %v2626 = vrot.slane %v2625, 2
          %v2627 = vadd.f32 %v2625, %v2626
          %v2628 = vrot.slane %v2627, 1
          %v2629 = vadd.f32 %v2627, %v2628
          %v2630 = vadd.f32 %v2303, %v2304
          %v2631 = vrot.slane %v2630, 4
          %v2632 = vadd.f32 %v2630, %v2631
          %v2633 = vrot.slane %v2632, 2
          %v2634 = vadd.f32 %v2632, %v2633
          %v2635 = vrot.slane %v2634, 1
          %v2636 = vadd.f32 %v2634, %v2635
          %v2637 = vadd.f32 %v2305, %v2306
          %v2638 = vrot.slane %v2637, 4
          %v2639 = vadd.f32 %v2637, %v2638
          %v2640 = vrot.slane %v2639, 2
          %v2641 = vadd.f32 %v2639, %v2640
          %v2642 = vrot.slane %v2641, 1
          %v2643 = vadd.f32 %v2641, %v2642
          %v2644 = vadd.f32 %v2307, %v2308
          %v2645 = vrot.slane %v2644, 4
          %v2646 = vadd.f32 %v2644, %v2645
          %v2647 = vrot.slane %v2646, 2
          %v2648 = vadd.f32 %v2646, %v2647
          %v2649 = vrot.slane %v2648, 1
          %v2650 = vadd.f32 %v2648, %v2649
          %v2651 = vadd.f32 %v2309, %v2310
          %v2652 = vrot.slane %v2651, 4
          %v2653 = vadd.f32 %v2651, %v2652
          %v2654 = vrot.slane %v2653, 2
          %v2655 = vadd.f32 %v2653, %v2654
          %v2656 = vrot.slane %v2655, 1
          %v2657 = vadd.f32 %v2655, %v2656
          %v2658 = vadd.f32 %v2311, %v2312
          %v2659 = vrot.slane %v2658, 4
          %v2660 = vadd.f32 %v2658, %v2659
          %v2661 = vrot.slane %v2660, 2
          %v2662 = vadd.f32 %v2660, %v2661
          %v2663 = vrot.slane %v2662, 1
          %v2664 = vadd.f32 %v2662, %v2663
          %v2665 = vadd.f32 %v2313, %v2314
          %v2666 = vrot.slane %v2665, 4
          %v2667 = vadd.f32 %v2665, %v2666
          %v2668 = vrot.slane %v2667, 2
          %v2669 = vadd.f32 %v2667, %v2668
          %v2670 = vrot.slane %v2669, 1
          %v2671 = vadd.f32 %v2669, %v2670
          %v2672 = vadd.f32 %v2315, %v2316
          %v2673 = vrot.slane %v2672, 4
          %v2674 = vadd.f32 %v2672, %v2673
          %v2675 = vrot.slane %v2674, 2
          %v2676 = vadd.f32 %v2674, %v2675
          %v2677 = vrot.slane %v2676, 1
          %v2678 = vadd.f32 %v2676, %v2677
          %v2679 = vadd.f32 %v2317, %v2318
          %v2680 = vrot.slane %v2679, 4
          %v2681 = vadd.f32 %v2679, %v2680
          %v2682 = vrot.slane %v2681, 2
          %v2683 = vadd.f32 %v2681, %v2682
          %v2684 = vrot.slane %v2683, 1
          %v2685 = vadd.f32 %v2683, %v2684
          %v2686 = vadd.f32 %v2319, %v2320
          %v2687 = vrot.slane %v2686, 4
          %v2688 = vadd.f32 %v2686, %v2687
          %v2689 = vrot.slane %v2688, 2
          %v2690 = vadd.f32 %v2688, %v2689
          %v2691 = vrot.slane %v2690, 1
          %v2692 = vadd.f32 %v2690, %v2691
          %v2693 = vadd.f32 %v2321, %v2322
          %v2694 = vrot.slane %v2693, 4
          %v2695 = vadd.f32 %v2693, %v2694
          %v2696 = vrot.slane %v2695, 2
          %v2697 = vadd.f32 %v2695, %v2696
          %v2698 = vrot.slane %v2697, 1
          %v2699 = vadd.f32 %v2697, %v2698
          %v2700 = vadd.f32 %v2323, %v2324
          %v2701 = vrot.slane %v2700, 4
          %v2702 = vadd.f32 %v2700, %v2701
          %v2703 = vrot.slane %v2702, 2
          %v2704 = vadd.f32 %v2702, %v2703
          %v2705 = vrot.slane %v2704, 1
          %v2706 = vadd.f32 %v2704, %v2705
          %v2707 = vadd.f32 %v2325, %v2326
          %v2708 = vrot.slane %v2707, 4
          %v2709 = vadd.f32 %v2707, %v2708
          %v2710 = vrot.slane %v2709, 2
          %v2711 = vadd.f32 %v2709, %v2710
          %v2712 = vrot.slane %v2711, 1
          %v2713 = vadd.f32 %v2711, %v2712
          %v2714 = vadd.f32 %v2327, %v2328
          %v2715 = vrot.slane %v2714, 4
          %v2716 = vadd.f32 %v2714, %v2715
          %v2717 = vrot.slane %v2716, 2
          %v2718 = vadd.f32 %v2716, %v2717
          %v2719 = vrot.slane %v2718, 1
          %v2720 = vadd.f32 %v2718, %v2719
          %v2721 = vadd.f32 %v2329, %v2330
          %v2722 = vrot.slane %v2721, 4
          %v2723 = vadd.f32 %v2721, %v2722
          %v2724 = vrot.slane %v2723, 2
          %v2725 = vadd.f32 %v2723, %v2724
          %v2726 = vrot.slane %v2725, 1
          %v2727 = vadd.f32 %v2725, %v2726
          %v2728 = vadd.f32 %v2331, %v2332
          %v2729 = vrot.slane %v2728, 4
          %v2730 = vadd.f32 %v2728, %v2729
          %v2731 = vrot.slane %v2730, 2
          %v2732 = vadd.f32 %v2730, %v2731
          %v2733 = vrot.slane %v2732, 1
          %v2734 = vadd.f32 %v2732, %v2733
          %v2735 = vadd.f32 %v2333, %v2334
          %v2736 = vrot.slane %v2735, 4
          %v2737 = vadd.f32 %v2735, %v2736
          %v2738 = vrot.slane %v2737, 2
          %v2739 = vadd.f32 %v2737, %v2738
          %v2740 = vrot.slane %v2739, 1
          %v2741 = vadd.f32 %v2739, %v2740
          %v2742 = vadd.f32 %v2335, %v2336
          %v2743 = vrot.slane %v2742, 4
          %v2744 = vadd.f32 %v2742, %v2743
          %v2745 = vrot.slane %v2744, 2
          %v2746 = vadd.f32 %v2744, %v2745
          %v2747 = vrot.slane %v2746, 1
          %v2748 = vadd.f32 %v2746, %v2747
          %v2749 = vadd.f32 %v2337, %v2338
          %v2750 = vrot.slane %v2749, 4
          %v2751 = vadd.f32 %v2749, %v2750
          %v2752 = vrot.slane %v2751, 2
          %v2753 = vadd.f32 %v2751, %v2752
          %v2754 = vrot.slane %v2753, 1
          %v2755 = vadd.f32 %v2753, %v2754
          %v2756 = vadd.f32 %v2339, %v2340
          %v2757 = vrot.slane %v2756, 4
          %v2758 = vadd.f32 %v2756, %v2757
          %v2759 = vrot.slane %v2758, 2
          %v2760 = vadd.f32 %v2758, %v2759
          %v2761 = vrot.slane %v2760, 1
          %v2762 = vadd.f32 %v2760, %v2761
          %v2763 = vadd.f32 %v2341, %v2342
          %v2764 = vrot.slane %v2763, 4
          %v2765 = vadd.f32 %v2763, %v2764
          %v2766 = vrot.slane %v2765, 2
          %v2767 = vadd.f32 %v2765, %v2766
          %v2768 = vrot.slane %v2767, 1
          %v2769 = vadd.f32 %v2767, %v2768
          %v2770 = vadd.f32 %v2343, %v2344
          %v2771 = vrot.slane %v2770, 4
          %v2772 = vadd.f32 %v2770, %v2771
          %v2773 = vrot.slane %v2772, 2
          %v2774 = vadd.f32 %v2772, %v2773
          %v2775 = vrot.slane %v2774, 1
          %v2776 = vadd.f32 %v2774, %v2775
          %v2777 = vadd.f32 %v2345, %v2346
          %v2778 = vrot.slane %v2777, 4
          %v2779 = vadd.f32 %v2777, %v2778
          %v2780 = vrot.slane %v2779, 2
          %v2781 = vadd.f32 %v2779, %v2780
          %v2782 = vrot.slane %v2781, 1
          %v2783 = vadd.f32 %v2781, %v2782
          %v2784 = vadd.f32 %v2347, %v2348
          %v2785 = vrot.slane %v2784, 4
          %v2786 = vadd.f32 %v2784, %v2785
          %v2787 = vrot.slane %v2786, 2
          %v2788 = vadd.f32 %v2786, %v2787
          %v2789 = vrot.slane %v2788, 1
          %v2790 = vadd.f32 %v2788, %v2789
          %v2791 = vadd.f32 %v2349, %v2350
          %v2792 = vrot.slane %v2791, 4
          %v2793 = vadd.f32 %v2791, %v2792
          %v2794 = vrot.slane %v2793, 2
          %v2795 = vadd.f32 %v2793, %v2794
          %v2796 = vrot.slane %v2795, 1
          %v2797 = vadd.f32 %v2795, %v2796
          %v2798 = vadd.f32 %v2351, %v2352
          %v2799 = vrot.slane %v2798, 4
          %v2800 = vadd.f32 %v2798, %v2799
          %v2801 = vrot.slane %v2800, 2
          %v2802 = vadd.f32 %v2800, %v2801
          %v2803 = vrot.slane %v2802, 1
          %v2804 = vadd.f32 %v2802, %v2803
          %v2805 = vadd.f32 %v2353, %v2354
          %v2806 = vrot.slane %v2805, 4
          %v2807 = vadd.f32 %v2805, %v2806
          %v2808 = vrot.slane %v2807, 2
          %v2809 = vadd.f32 %v2807, %v2808
          %v2810 = vrot.slane %v2809, 1
          %v2811 = vadd.f32 %v2809, %v2810
          %v2812 = vadd.f32 %v2355, %v2356
          %v2813 = vrot.slane %v2812, 4
          %v2814 = vadd.f32 %v2812, %v2813
          %v2815 = vrot.slane %v2814, 2
          %v2816 = vadd.f32 %v2814, %v2815
          %v2817 = vrot.slane %v2816, 1
          %v2818 = vadd.f32 %v2816, %v2817
          %v2819 = vadd.f32 %v2357, %v2358
          %v2820 = vrot.slane %v2819, 4
          %v2821 = vadd.f32 %v2819, %v2820
          %v2822 = vrot.slane %v2821, 2
          %v2823 = vadd.f32 %v2821, %v2822
          %v2824 = vrot.slane %v2823, 1
          %v2825 = vadd.f32 %v2823, %v2824
          %v2826 = vadd.f32 %v2359, %v2360
          %v2827 = vrot.slane %v2826, 4
          %v2828 = vadd.f32 %v2826, %v2827
          %v2829 = vrot.slane %v2828, 2
          %v2830 = vadd.f32 %v2828, %v2829
          %v2831 = vrot.slane %v2830, 1
          %v2832 = vadd.f32 %v2830, %v2831
          %v2833 = vadd.f32 %v2361, %v2362
          %v2834 = vrot.slane %v2833, 4
          %v2835 = vadd.f32 %v2833, %v2834
          %v2836 = vrot.slane %v2835, 2
          %v2837 = vadd.f32 %v2835, %v2836
          %v2838 = vrot.slane %v2837, 1
          %v2839 = vadd.f32 %v2837, %v2838
          %v2840 = vadd.f32 %v2363, %v2364
          %v2841 = vrot.slane %v2840, 4
          %v2842 = vadd.f32 %v2840, %v2841
          %v2843 = vrot.slane %v2842, 2
          %v2844 = vadd.f32 %v2842, %v2843
          %v2845 = vrot.slane %v2844, 1
          %v2846 = vadd.f32 %v2844, %v2845
          %v2847 = vadd.f32 %v2365, %v2366
          %v2848 = vrot.slane %v2847, 4
          %v2849 = vadd.f32 %v2847, %v2848
          %v2850 = vrot.slane %v2849, 2
          %v2851 = vadd.f32 %v2849, %v2850
          %v2852 = vrot.slane %v2851, 1
          %v2853 = vadd.f32 %v2851, %v2852
          %v2854 = vadd.f32 %v2367, %v2368
          %v2855 = vrot.slane %v2854, 4
          %v2856 = vadd.f32 %v2854, %v2855
          %v2857 = vrot.slane %v2856, 2
          %v2858 = vadd.f32 %v2856, %v2857
          %v2859 = vrot.slane %v2858, 1
          %v2860 = vadd.f32 %v2858, %v2859
          %v2861 = vadd.f32 %v2369, %v2370
          %v2862 = vrot.slane %v2861, 4
          %v2863 = vadd.f32 %v2861, %v2862
          %v2864 = vrot.slane %v2863, 2
          %v2865 = vadd.f32 %v2863, %v2864
          %v2866 = vrot.slane %v2865, 1
          %v2867 = vadd.f32 %v2865, %v2866
          %v2868 = vadd.f32 %v2371, %v2372
          %v2869 = vrot.slane %v2868, 4
          %v2870 = vadd.f32 %v2868, %v2869
          %v2871 = vrot.slane %v2870, 2
          %v2872 = vadd.f32 %v2870, %v2871
          %v2873 = vrot.slane %v2872, 1
          %v2874 = vadd.f32 %v2872, %v2873
          %v2875 = vadd.f32 %v2373, %v2374
          %v2876 = vrot.slane %v2875, 4
          %v2877 = vadd.f32 %v2875, %v2876
          %v2878 = vrot.slane %v2877, 2
          %v2879 = vadd.f32 %v2877, %v2878
          %v2880 = vrot.slane %v2879, 1
          %v2881 = vadd.f32 %v2879, %v2880
          %v2882 = vadd.f32 %v2375, %v2376
          %v2883 = vrot.slane %v2882, 4
          %v2884 = vadd.f32 %v2882, %v2883
          %v2885 = vrot.slane %v2884, 2
          %v2886 = vadd.f32 %v2884, %v2885
          %v2887 = vrot.slane %v2886, 1
          %v2888 = vadd.f32 %v2886, %v2887
          %v2889 = vadd.f32 %v2377, %v2378
          %v2890 = vrot.slane %v2889, 4
          %v2891 = vadd.f32 %v2889, %v2890
          %v2892 = vrot.slane %v2891, 2
          %v2893 = vadd.f32 %v2891, %v2892
          %v2894 = vrot.slane %v2893, 1
          %v2895 = vadd.f32 %v2893, %v2894
          %v2896 = vadd.f32 %v2379, %v2380
          %v2897 = vrot.slane %v2896, 4
          %v2898 = vadd.f32 %v2896, %v2897
          %v2899 = vrot.slane %v2898, 2
          %v2900 = vadd.f32 %v2898, %v2899
          %v2901 = vrot.slane %v2900, 1
          %v2902 = vadd.f32 %v2900, %v2901
          %v2903 = vadd.f32 %v2381, %v2382
          %v2904 = vrot.slane %v2903, 4
          %v2905 = vadd.f32 %v2903, %v2904
          %v2906 = vrot.slane %v2905, 2
          %v2907 = vadd.f32 %v2905, %v2906
          %v2908 = vrot.slane %v2907, 1
          %v2909 = vadd.f32 %v2907, %v2908
          %v2910 = vadd.f32 %v2383, %v2384
          %v2911 = vrot.slane %v2910, 4
          %v2912 = vadd.f32 %v2910, %v2911
          %v2913 = vrot.slane %v2912, 2
          %v2914 = vadd.f32 %v2912, %v2913
          %v2915 = vrot.slane %v2914, 1
          %v2916 = vadd.f32 %v2914, %v2915
          %v2917 = vadd.f32 %v2385, %v2386
          %v2918 = vrot.slane %v2917, 4
          %v2919 = vadd.f32 %v2917, %v2918
          %v2920 = vrot.slane %v2919, 2
          %v2921 = vadd.f32 %v2919, %v2920
          %v2922 = vrot.slane %v2921, 1
          %v2923 = vadd.f32 %v2921, %v2922
          %v2924 = vadd.f32 %v2387, %v2388
          %v2925 = vrot.slane %v2924, 4
          %v2926 = vadd.f32 %v2924, %v2925
          %v2927 = vrot.slane %v2926, 2
          %v2928 = vadd.f32 %v2926, %v2927
          %v2929 = vrot.slane %v2928, 1
          %v2930 = vadd.f32 %v2928, %v2929
          %v2931 = vadd.f32 %v2389, %v2390
          %v2932 = vrot.slane %v2931, 4
          %v2933 = vadd.f32 %v2931, %v2932
          %v2934 = vrot.slane %v2933, 2
          %v2935 = vadd.f32 %v2933, %v2934
          %v2936 = vrot.slane %v2935, 1
          %v2937 = vadd.f32 %v2935, %v2936
          %v2938 = vadd.f32 %v2391, %v2392
          %v2939 = vrot.slane %v2938, 4
          %v2940 = vadd.f32 %v2938, %v2939
          %v2941 = vrot.slane %v2940, 2
          %v2942 = vadd.f32 %v2940, %v2941
          %v2943 = vrot.slane %v2942, 1
          %v2944 = vadd.f32 %v2942, %v2943
          %v2945 = vadd.f32 %v2393, %v2394
          %v2946 = vrot.slane %v2945, 4
          %v2947 = vadd.f32 %v2945, %v2946
          %v2948 = vrot.slane %v2947, 2
          %v2949 = vadd.f32 %v2947, %v2948
          %v2950 = vrot.slane %v2949, 1
          %v2951 = vadd.f32 %v2949, %v2950
          %v2952 = vadd.f32 %v2395, %v2396
          %v2953 = vrot.slane %v2952, 4
          %v2954 = vadd.f32 %v2952, %v2953
          %v2955 = vrot.slane %v2954, 2
          %v2956 = vadd.f32 %v2954, %v2955
          %v2957 = vrot.slane %v2956, 1
          %v2958 = vadd.f32 %v2956, %v2957
          %v2959 = vadd.f32 %v2397, %v2398
          %v2960 = vrot.slane %v2959, 4
          %v2961 = vadd.f32 %v2959, %v2960
          %v2962 = vrot.slane %v2961, 2
          %v2963 = vadd.f32 %v2961, %v2962
          %v2964 = vrot.slane %v2963, 1
          %v2965 = vadd.f32 %v2963, %v2964
          %v2966 = vadd.f32 %v2399, %v2400
          %v2967 = vrot.slane %v2966, 4
          %v2968 = vadd.f32 %v2966, %v2967
          %v2969 = vrot.slane %v2968, 2
          %v2970 = vadd.f32 %v2968, %v2969
          %v2971 = vrot.slane %v2970, 1
          %v2972 = vadd.f32 %v2970, %v2971
          %v2973 = vadd.f32 %v2401, %v2402
          %v2974 = vrot.slane %v2973, 4
          %v2975 = vadd.f32 %v2973, %v2974
          %v2976 = vrot.slane %v2975, 2
          %v2977 = vadd.f32 %v2975, %v2976
          %v2978 = vrot.slane %v2977, 1
          %v2979 = vadd.f32 %v2977, %v2978
          %v2980 = vadd.f32 %v2403, %v2404
          %v2981 = vrot.slane %v2980, 4
          %v2982 = vadd.f32 %v2980, %v2981
          %v2983 = vrot.slane %v2982, 2
          %v2984 = vadd.f32 %v2982, %v2983
          %v2985 = vrot.slane %v2984, 1
          %v2986 = vadd.f32 %v2984, %v2985
          %v2987 = vadd.f32 %v2405, %v2406
          %v2988 = vrot.slane %v2987, 4
          %v2989 = vadd.f32 %v2987, %v2988
          %v2990 = vrot.slane %v2989, 2
          %v2991 = vadd.f32 %v2989, %v2990
          %v2992 = vrot.slane %v2991, 1
          %v2993 = vadd.f32 %v2991, %v2992
          %v2994 = vadd.f32 %v2407, %v2408
          %v2995 = vrot.slane %v2994, 4
          %v2996 = vadd.f32 %v2994, %v2995
          %v2997 = vrot.slane %v2996, 2
          %v2998 = vadd.f32 %v2996, %v2997
          %v2999 = vrot.slane %v2998, 1
          %v3000 = vadd.f32 %v2998, %v2999
          %v3001 = vadd.f32 %v2409, %v2410
          %v3002 = vrot.slane %v3001, 4
          %v3003 = vadd.f32 %v3001, %v3002
          %v3004 = vrot.slane %v3003, 2
          %v3005 = vadd.f32 %v3003, %v3004
          %v3006 = vrot.slane %v3005, 1
          %v3007 = vadd.f32 %v3005, %v3006
          %v3008 = vadd.f32 %v2411, %v2412
          %v3009 = vrot.slane %v3008, 4
          %v3010 = vadd.f32 %v3008, %v3009
          %v3011 = vrot.slane %v3010, 2
          %v3012 = vadd.f32 %v3010, %v3011
          %v3013 = vrot.slane %v3012, 1
          %v3014 = vadd.f32 %v3012, %v3013
          %v3015 = vadd.f32 %v2413, %v2414
          %v3016 = vrot.slane %v3015, 4
          %v3017 = vadd.f32 %v3015, %v3016
          %v3018 = vrot.slane %v3017, 2
          %v3019 = vadd.f32 %v3017, %v3018
          %v3020 = vrot.slane %v3019, 1
          %v3021 = vadd.f32 %v3019, %v3020
          %v3022 = vadd.f32 %v2415, %v2416
          %v3023 = vrot.slane %v3022, 4
          %v3024 = vadd.f32 %v3022, %v3023
          %v3025 = vrot.slane %v3024, 2
          %v3026 = vadd.f32 %v3024, %v3025
          %v3027 = vrot.slane %v3026, 1
          %v3028 = vadd.f32 %v3026, %v3027
          %v3029 = vadd.f32 %v2417, %v2418
          %v3030 = vrot.slane %v3029, 4
          %v3031 = vadd.f32 %v3029, %v3030
          %v3032 = vrot.slane %v3031, 2
          %v3033 = vadd.f32 %v3031, %v3032
          %v3034 = vrot.slane %v3033, 1
          %v3035 = vadd.f32 %v3033, %v3034
          %v3036 = vadd.f32 %v2419, %v2420
          %v3037 = vrot.slane %v3036, 4
          %v3038 = vadd.f32 %v3036, %v3037
          %v3039 = vrot.slane %v3038, 2
          %v3040 = vadd.f32 %v3038, %v3039
          %v3041 = vrot.slane %v3040, 1
          %v3042 = vadd.f32 %v3040, %v3041
          %v3043 = vadd.f32 %v2421, %v2422
          %v3044 = vrot.slane %v3043, 4
          %v3045 = vadd.f32 %v3043, %v3044
          %v3046 = vrot.slane %v3045, 2
          %v3047 = vadd.f32 %v3045, %v3046
          %v3048 = vrot.slane %v3047, 1
          %v3049 = vadd.f32 %v3047, %v3048
          %v3050 = vadd.f32 %v2423, %v2424
          %v3051 = vrot.slane %v3050, 4
          %v3052 = vadd.f32 %v3050, %v3051
          %v3053 = vrot.slane %v3052, 2
          %v3054 = vadd.f32 %v3052, %v3053
          %v3055 = vrot.slane %v3054, 1
          %v3056 = vadd.f32 %v3054, %v3055
          %v3057 = vadd.f32 %v2425, %v2426
          %v3058 = vrot.slane %v3057, 4
          %v3059 = vadd.f32 %v3057, %v3058
          %v3060 = vrot.slane %v3059, 2
          %v3061 = vadd.f32 %v3059, %v3060
          %v3062 = vrot.slane %v3061, 1
          %v3063 = vadd.f32 %v3061, %v3062
          %v3064 = vadd.f32 %v2427, %v2428
          %v3065 = vrot.slane %v3064, 4
          %v3066 = vadd.f32 %v3064, %v3065
          %v3067 = vrot.slane %v3066, 2
          %v3068 = vadd.f32 %v3066, %v3067
          %v3069 = vrot.slane %v3068, 1
          %v3070 = vadd.f32 %v3068, %v3069
          %v3071 = vadd.f32 %v2429, %v2430
          %v3072 = vrot.slane %v3071, 4
          %v3073 = vadd.f32 %v3071, %v3072
          %v3074 = vrot.slane %v3073, 2
          %v3075 = vadd.f32 %v3073, %v3074
          %v3076 = vrot.slane %v3075, 1
          %v3077 = vadd.f32 %v3075, %v3076
          %v3078 = vadd.f32 %v2431, %v2432
          %v3079 = vrot.slane %v3078, 4
          %v3080 = vadd.f32 %v3078, %v3079
          %v3081 = vrot.slane %v3080, 2
          %v3082 = vadd.f32 %v3080, %v3081
          %v3083 = vrot.slane %v3082, 1
          %v3084 = vadd.f32 %v3082, %v3083
          %v3085 = vadd.f32 %v2433, %v2434
          %v3086 = vrot.slane %v3085, 4
          %v3087 = vadd.f32 %v3085, %v3086
          %v3088 = vrot.slane %v3087, 2
          %v3089 = vadd.f32 %v3087, %v3088
          %v3090 = vrot.slane %v3089, 1
          %v3091 = vadd.f32 %v3089, %v3090
          %v3092 = vadd.f32 %v2435, %v2436
          %v3093 = vrot.slane %v3092, 4
          %v3094 = vadd.f32 %v3092, %v3093
          %v3095 = vrot.slane %v3094, 2
          %v3096 = vadd.f32 %v3094, %v3095
          %v3097 = vrot.slane %v3096, 1
          %v3098 = vadd.f32 %v3096, %v3097
          %v3099 = vadd.f32 %v2437, %v2438
          %v3100 = vrot.slane %v3099, 4
          %v3101 = vadd.f32 %v3099, %v3100
          %v3102 = vrot.slane %v3101, 2
          %v3103 = vadd.f32 %v3101, %v3102
          %v3104 = vrot.slane %v3103, 1
          %v3105 = vadd.f32 %v3103, %v3104
          %v3106 = vadd.f32 %v2439, %v2440
          %v3107 = vrot.slane %v3106, 4
          %v3108 = vadd.f32 %v3106, %v3107
          %v3109 = vrot.slane %v3108, 2
          %v3110 = vadd.f32 %v3108, %v3109
          %v3111 = vrot.slane %v3110, 1
          %v3112 = vadd.f32 %v3110, %v3111
          %v3113 = vadd.f32 %v2441, %v2442
          %v3114 = vrot.slane %v3113, 4
          %v3115 = vadd.f32 %v3113, %v3114
          %v3116 = vrot.slane %v3115, 2
          %v3117 = vadd.f32 %v3115, %v3116
          %v3118 = vrot.slane %v3117, 1
          %v3119 = vadd.f32 %v3117, %v3118
          %v3120 = vadd.f32 %v2443, %v2444
          %v3121 = vrot.slane %v3120, 4
          %v3122 = vadd.f32 %v3120, %v3121
          %v3123 = vrot.slane %v3122, 2
          %v3124 = vadd.f32 %v3122, %v3123
          %v3125 = vrot.slane %v3124, 1
          %v3126 = vadd.f32 %v3124, %v3125
          %v3127 = vadd.f32 %v2445, %v2446
          %v3128 = vrot.slane %v3127, 4
          %v3129 = vadd.f32 %v3127, %v3128
          %v3130 = vrot.slane %v3129, 2
          %v3131 = vadd.f32 %v3129, %v3130
          %v3132 = vrot.slane %v3131, 1
          %v3133 = vadd.f32 %v3131, %v3132
          %v3134 = vadd.f32 %v2447, %v2448
          %v3135 = vrot.slane %v3134, 4
          %v3136 = vadd.f32 %v3134, %v3135
          %v3137 = vrot.slane %v3136, 2
          %v3138 = vadd.f32 %v3136, %v3137
          %v3139 = vrot.slane %v3138, 1
          %v3140 = vadd.f32 %v3138, %v3139
          %v3141 = vadd.f32 %v2449, %v2450
          %v3142 = vrot.slane %v3141, 4
          %v3143 = vadd.f32 %v3141, %v3142
          %v3144 = vrot.slane %v3143, 2
          %v3145 = vadd.f32 %v3143, %v3144
          %v3146 = vrot.slane %v3145, 1
          %v3147 = vadd.f32 %v3145, %v3146
          %v3148 = vadd.f32 %v2451, %v2452
          %v3149 = vrot.slane %v3148, 4
          %v3150 = vadd.f32 %v3148, %v3149
          %v3151 = vrot.slane %v3150, 2
          %v3152 = vadd.f32 %v3150, %v3151
          %v3153 = vrot.slane %v3152, 1
          %v3154 = vadd.f32 %v3152, %v3153
          %v3155 = vadd.f32 %v2453, %v2454
          %v3156 = vrot.slane %v3155, 4
          %v3157 = vadd.f32 %v3155, %v3156
          %v3158 = vrot.slane %v3157, 2
          %v3159 = vadd.f32 %v3157, %v3158
          %v3160 = vrot.slane %v3159, 1
          %v3161 = vadd.f32 %v3159, %v3160
          %v3162 = vadd.f32 %v2455, %v2456
          %v3163 = vrot.slane %v3162, 4
          %v3164 = vadd.f32 %v3162, %v3163
          %v3165 = vrot.slane %v3164, 2
          %v3166 = vadd.f32 %v3164, %v3165
          %v3167 = vrot.slane %v3166, 1
          %v3168 = vadd.f32 %v3166, %v3167
          %v3169 = vadd.f32 %v2457, %v2458
          %v3170 = vrot.slane %v3169, 4
          %v3171 = vadd.f32 %v3169, %v3170
          %v3172 = vrot.slane %v3171, 2
          %v3173 = vadd.f32 %v3171, %v3172
          %v3174 = vrot.slane %v3173, 1
          %v3175 = vadd.f32 %v3173, %v3174
          %v3176 = vadd.f32 %v2459, %v2460
          %v3177 = vrot.slane %v3176, 4
          %v3178 = vadd.f32 %v3176, %v3177
          %v3179 = vrot.slane %v3178, 2
          %v3180 = vadd.f32 %v3178, %v3179
          %v3181 = vrot.slane %v3180, 1
          %v3182 = vadd.f32 %v3180, %v3181
          %v3183 = vadd.f32 %v2461, %v2462
          %v3184 = vrot.slane %v3183, 4
          %v3185 = vadd.f32 %v3183, %v3184
          %v3186 = vrot.slane %v3185, 2
          %v3187 = vadd.f32 %v3185, %v3186
          %v3188 = vrot.slane %v3187, 1
          %v3189 = vadd.f32 %v3187, %v3188
          %v3190 = vadd.f32 %v2463, %v2464
          %v3191 = vrot.slane %v3190, 4
          %v3192 = vadd.f32 %v3190, %v3191
          %v3193 = vrot.slane %v3192, 2
          %v3194 = vadd.f32 %v3192, %v3193
          %v3195 = vrot.slane %v3194, 1
          %v3196 = vadd.f32 %v3194, %v3195
          %v3197 = vadd.f32 %v2465, %v2466
          %v3198 = vrot.slane %v3197, 4
          %v3199 = vadd.f32 %v3197, %v3198
          %v3200 = vrot.slane %v3199, 2
          %v3201 = vadd.f32 %v3199, %v3200
          %v3202 = vrot.slane %v3201, 1
          %v3203 = vadd.f32 %v3201, %v3202
          %v3204 = vadd.f32 %v2467, %v2468
          %v3205 = vrot.slane %v3204, 4
          %v3206 = vadd.f32 %v3204, %v3205
          %v3207 = vrot.slane %v3206, 2
          %v3208 = vadd.f32 %v3206, %v3207
          %v3209 = vrot.slane %v3208, 1
          %v3210 = vadd.f32 %v3208, %v3209
          %v3211 = vadd.f32 %v2469, %v2470
          %v3212 = vrot.slane %v3211, 4
          %v3213 = vadd.f32 %v3211, %v3212
          %v3214 = vrot.slane %v3213, 2
          %v3215 = vadd.f32 %v3213, %v3214
          %v3216 = vrot.slane %v3215, 1
          %v3217 = vadd.f32 %v3215, %v3216
          %v3218 = vadd.f32 %v2471, %v2472
          %v3219 = vrot.slane %v3218, 4
          %v3220 = vadd.f32 %v3218, %v3219
          %v3221 = vrot.slane %v3220, 2
          %v3222 = vadd.f32 %v3220, %v3221
          %v3223 = vrot.slane %v3222, 1
          %v3224 = vadd.f32 %v3222, %v3223
          %v3225 = vadd.f32 %v2473, %v2474
          %v3226 = vrot.slane %v3225, 4
          %v3227 = vadd.f32 %v3225, %v3226
          %v3228 = vrot.slane %v3227, 2
          %v3229 = vadd.f32 %v3227, %v3228
          %v3230 = vrot.slane %v3229, 1
          %v3231 = vadd.f32 %v3229, %v3230
          %v3232 = vadd.f32 %v2475, %v2476
          %v3233 = vrot.slane %v3232, 4
          %v3234 = vadd.f32 %v3232, %v3233
          %v3235 = vrot.slane %v3234, 2
          %v3236 = vadd.f32 %v3234, %v3235
          %v3237 = vrot.slane %v3236, 1
          %v3238 = vadd.f32 %v3236, %v3237
          %v3239 = vadd.f32 %v2477, %v2478
          %v3240 = vrot.slane %v3239, 4
          %v3241 = vadd.f32 %v3239, %v3240
          %v3242 = vrot.slane %v3241, 2
          %v3243 = vadd.f32 %v3241, %v3242
          %v3244 = vrot.slane %v3243, 1
          %v3245 = vadd.f32 %v3243, %v3244
          %v3246 = vadd.f32 %v2479, %v2480
          %v3247 = vrot.slane %v3246, 4
          %v3248 = vadd.f32 %v3246, %v3247
          %v3249 = vrot.slane %v3248, 2
          %v3250 = vadd.f32 %v3248, %v3249
          %v3251 = vrot.slane %v3250, 1
          %v3252 = vadd.f32 %v3250, %v3251
          %v3253 = vadd.f32 %v2481, %v2482
          %v3254 = vrot.slane %v3253, 4
          %v3255 = vadd.f32 %v3253, %v3254
          %v3256 = vrot.slane %v3255, 2
          %v3257 = vadd.f32 %v3255, %v3256
          %v3258 = vrot.slane %v3257, 1
          %v3259 = vadd.f32 %v3257, %v3258
          %v3260 = vadd.f32 %v2483, %v2484
          %v3261 = vrot.slane %v3260, 4
          %v3262 = vadd.f32 %v3260, %v3261
          %v3263 = vrot.slane %v3262, 2
          %v3264 = vadd.f32 %v3262, %v3263
          %v3265 = vrot.slane %v3264, 1
          %v3266 = vadd.f32 %v3264, %v3265
          %v3267 = vadd.f32 %v2485, %v2486
          %v3268 = vrot.slane %v3267, 4
          %v3269 = vadd.f32 %v3267, %v3268
          %v3270 = vrot.slane %v3269, 2
          %v3271 = vadd.f32 %v3269, %v3270
          %v3272 = vrot.slane %v3271, 1
          %v3273 = vadd.f32 %v3271, %v3272
          %v3274 = vadd.f32 %v2487, %v2488
          %v3275 = vrot.slane %v3274, 4
          %v3276 = vadd.f32 %v3274, %v3275
          %v3277 = vrot.slane %v3276, 2
          %v3278 = vadd.f32 %v3276, %v3277
          %v3279 = vrot.slane %v3278, 1
          %v3280 = vadd.f32 %v3278, %v3279
          %v3281 = vadd.f32 %v2489, %v2490
          %v3282 = vrot.slane %v3281, 4
          %v3283 = vadd.f32 %v3281, %v3282
          %v3284 = vrot.slane %v3283, 2
          %v3285 = vadd.f32 %v3283, %v3284
          %v3286 = vrot.slane %v3285, 1
          %v3287 = vadd.f32 %v3285, %v3286
          %v3288 = vadd.f32 %v2491, %v2492
          %v3289 = vrot.slane %v3288, 4
          %v3290 = vadd.f32 %v3288, %v3289
          %v3291 = vrot.slane %v3290, 2
          %v3292 = vadd.f32 %v3290, %v3291
          %v3293 = vrot.slane %v3292, 1
          %v3294 = vadd.f32 %v3292, %v3293
          %v3295 = vadd.f32 %v2493, %v2494
          %v3296 = vrot.slane %v3295, 4
          %v3297 = vadd.f32 %v3295, %v3296
          %v3298 = vrot.slane %v3297, 2
          %v3299 = vadd.f32 %v3297, %v3298
          %v3300 = vrot.slane %v3299, 1
          %v3301 = vadd.f32 %v3299, %v3300
          %v3302 = vadd.f32 %v2495, %v2496
          %v3303 = vrot.slane %v3302, 4
          %v3304 = vadd.f32 %v3302, %v3303
          %v3305 = vrot.slane %v3304, 2
          %v3306 = vadd.f32 %v3304, %v3305
          %v3307 = vrot.slane %v3306, 1
          %v3308 = vadd.f32 %v3306, %v3307
          %v3309 = vadd.f32 %v2497, %v2498
          %v3310 = vrot.slane %v3309, 4
          %v3311 = vadd.f32 %v3309, %v3310
          %v3312 = vrot.slane %v3311, 2
          %v3313 = vadd.f32 %v3311, %v3312
          %v3314 = vrot.slane %v3313, 1
          %v3315 = vadd.f32 %v3313, %v3314
          %v3316 = vadd.f32 %v2499, %v2500
          %v3317 = vrot.slane %v3316, 4
          %v3318 = vadd.f32 %v3316, %v3317
          %v3319 = vrot.slane %v3318, 2
          %v3320 = vadd.f32 %v3318, %v3319
          %v3321 = vrot.slane %v3320, 1
          %v3322 = vadd.f32 %v3320, %v3321
          %v3323 = vadd.f32 %v2501, %v2502
          %v3324 = vrot.slane %v3323, 4
          %v3325 = vadd.f32 %v3323, %v3324
          %v3326 = vrot.slane %v3325, 2
          %v3327 = vadd.f32 %v3325, %v3326
          %v3328 = vrot.slane %v3327, 1
          %v3329 = vadd.f32 %v3327, %v3328
          %v3330 = vadd.f32 %v2503, %v2504
          %v3331 = vrot.slane %v3330, 4
          %v3332 = vadd.f32 %v3330, %v3331
          %v3333 = vrot.slane %v3332, 2
          %v3334 = vadd.f32 %v3332, %v3333
          %v3335 = vrot.slane %v3334, 1
          %v3336 = vadd.f32 %v3334, %v3335
          %v3337 = vadd.f32 %v2505, %v2506
          %v3338 = vrot.slane %v3337, 4
          %v3339 = vadd.f32 %v3337, %v3338
          %v3340 = vrot.slane %v3339, 2
          %v3341 = vadd.f32 %v3339, %v3340
          %v3342 = vrot.slane %v3341, 1
          %v3343 = vadd.f32 %v3341, %v3342
          %v3344 = vadd.f32 %v2507, %v2508
          %v3345 = vrot.slane %v3344, 4
          %v3346 = vadd.f32 %v3344, %v3345
          %v3347 = vrot.slane %v3346, 2
          %v3348 = vadd.f32 %v3346, %v3347
          %v3349 = vrot.slane %v3348, 1
          %v3350 = vadd.f32 %v3348, %v3349
          %v3351 = vadd.f32 %v2509, %v2510
          %v3352 = vrot.slane %v3351, 4
          %v3353 = vadd.f32 %v3351, %v3352
          %v3354 = vrot.slane %v3353, 2
          %v3355 = vadd.f32 %v3353, %v3354
          %v3356 = vrot.slane %v3355, 1
          %v3357 = vadd.f32 %v3355, %v3356
          %v3358 = vadd.f32 %v2511, %v2512
          %v3359 = vrot.slane %v3358, 4
          %v3360 = vadd.f32 %v3358, %v3359
          %v3361 = vrot.slane %v3360, 2
          %v3362 = vadd.f32 %v3360, %v3361
          %v3363 = vrot.slane %v3362, 1
          %v3364 = vadd.f32 %v3362, %v3363
          %v3365 = vadd.f32 %v2513, %v2514
          %v3366 = vrot.slane %v3365, 4
          %v3367 = vadd.f32 %v3365, %v3366
          %v3368 = vrot.slane %v3367, 2
          %v3369 = vadd.f32 %v3367, %v3368
          %v3370 = vrot.slane %v3369, 1
          %v3371 = vadd.f32 %v3369, %v3370
          %v3372 = vadd.f32 %v2515, %v2516
          %v3373 = vrot.slane %v3372, 4
          %v3374 = vadd.f32 %v3372, %v3373
          %v3375 = vrot.slane %v3374, 2
          %v3376 = vadd.f32 %v3374, %v3375
          %v3377 = vrot.slane %v3376, 1
          %v3378 = vadd.f32 %v3376, %v3377
          %v3379 = vadd.f32 %v2517, %v2518
          %v3380 = vrot.slane %v3379, 4
          %v3381 = vadd.f32 %v3379, %v3380
          %v3382 = vrot.slane %v3381, 2
          %v3383 = vadd.f32 %v3381, %v3382
          %v3384 = vrot.slane %v3383, 1
          %v3385 = vadd.f32 %v3383, %v3384
          %v3386 = vadd.f32 %v2519, %v2520
          %v3387 = vrot.slane %v3386, 4
          %v3388 = vadd.f32 %v3386, %v3387
          %v3389 = vrot.slane %v3388, 2
          %v3390 = vadd.f32 %v3388, %v3389
          %v3391 = vrot.slane %v3390, 1
          %v3392 = vadd.f32 %v3390, %v3391
          %v3393 = vadd.f32 %v2521, %v2522
          %v3394 = vrot.slane %v3393, 4
          %v3395 = vadd.f32 %v3393, %v3394
          %v3396 = vrot.slane %v3395, 2
          %v3397 = vadd.f32 %v3395, %v3396
          %v3398 = vrot.slane %v3397, 1
          %v3399 = vadd.f32 %v3397, %v3398
          %v3400 = vadd.f32 %v2523, %v2524
          %v3401 = vrot.slane %v3400, 4
          %v3402 = vadd.f32 %v3400, %v3401
          %v3403 = vrot.slane %v3402, 2
          %v3404 = vadd.f32 %v3402, %v3403
          %v3405 = vrot.slane %v3404, 1
          %v3406 = vadd.f32 %v3404, %v3405
          %v3407 = vadd.f32 %v2525, %v2526
          %v3408 = vrot.slane %v3407, 4
          %v3409 = vadd.f32 %v3407, %v3408
          %v3410 = vrot.slane %v3409, 2
          %v3411 = vadd.f32 %v3409, %v3410
          %v3412 = vrot.slane %v3411, 1
          %v3413 = vadd.f32 %v3411, %v3412
          %v3414 = vadd.f32 %v2527, %v2528
          %v3415 = vrot.slane %v3414, 4
          %v3416 = vadd.f32 %v3414, %v3415
          %v3417 = vrot.slane %v3416, 2
          %v3418 = vadd.f32 %v3416, %v3417
          %v3419 = vrot.slane %v3418, 1
          %v3420 = vadd.f32 %v3418, %v3419
          %v3421 = vadd.f32 %v2529, %v2530
          %v3422 = vrot.slane %v3421, 4
          %v3423 = vadd.f32 %v3421, %v3422
          %v3424 = vrot.slane %v3423, 2
          %v3425 = vadd.f32 %v3423, %v3424
          %v3426 = vrot.slane %v3425, 1
          %v3427 = vadd.f32 %v3425, %v3426
          %v3428 = vadd.f32 %v2531, %v2532
          %v3429 = vrot.slane %v3428, 4
          %v3430 = vadd.f32 %v3428, %v3429
          %v3431 = vrot.slane %v3430, 2
          %v3432 = vadd.f32 %v3430, %v3431
          %v3433 = vrot.slane %v3432, 1
          %v3434 = vadd.f32 %v3432, %v3433
          %v3435 = vadd.f32 %v2533, %v2534
          %v3436 = vrot.slane %v3435, 4
          %v3437 = vadd.f32 %v3435, %v3436
          %v3438 = vrot.slane %v3437, 2
          %v3439 = vadd.f32 %v3437, %v3438
          %v3440 = vrot.slane %v3439, 1
          %v3441 = vadd.f32 %v3439, %v3440
          %v3442 = vadd.f32 %v2535, %v2536
          %v3443 = vrot.slane %v3442, 4
          %v3444 = vadd.f32 %v3442, %v3443
          %v3445 = vrot.slane %v3444, 2
          %v3446 = vadd.f32 %v3444, %v3445
          %v3447 = vrot.slane %v3446, 1
          %v3448 = vadd.f32 %v3446, %v3447
          %vm3577 = vcmask 1041409
          %v3578 = vsel %vm3577, %v2566, %v2559
          %vm3579 = vcmask 1042434
          %v3580 = vsel %vm3579, %v2573, %v3578
          %vm3581 = vcmask 1043459
          %v3582 = vsel %vm3581, %v2580, %v3580
          %vm3583 = vcmask 1044484
          %v3584 = vsel %vm3583, %v2587, %v3582
          %vm3585 = vcmask 1045509
          %v3586 = vsel %vm3585, %v2594, %v3584
          %vm3587 = vcmask 1046534
          %v3588 = vsel %vm3587, %v2601, %v3586
          %vm3589 = vcmask 1047559
          %v3590 = vsel %vm3589, %v2608, %v3588
          %v3591 = vsel %vm3577, %v2622, %v2615
          %v3592 = vsel %vm3579, %v2629, %v3591
          %v3593 = vsel %vm3581, %v2636, %v3592
          %v3594 = vsel %vm3583, %v2643, %v3593
          %v3595 = vsel %vm3585, %v2650, %v3594
          %v3596 = vsel %vm3587, %v2657, %v3595
          %v3597 = vsel %vm3589, %v2664, %v3596
          %v3598 = vsel %vm3577, %v2678, %v2671
          %v3599 = vsel %vm3579, %v2685, %v3598
          %v3600 = vsel %vm3581, %v2692, %v3599
          %v3601 = vsel %vm3583, %v2699, %v3600
          %v3602 = vsel %vm3585, %v2706, %v3601
          %v3603 = vsel %vm3587, %v2713, %v3602
          %v3604 = vsel %vm3589, %v2720, %v3603
          %v3605 = vsel %vm3577, %v2734, %v2727
          %v3606 = vsel %vm3579, %v2741, %v3605
          %v3607 = vsel %vm3581, %v2748, %v3606
          %v3608 = vsel %vm3583, %v2755, %v3607
          %v3609 = vsel %vm3585, %v2762, %v3608
          %v3610 = vsel %vm3587, %v2769, %v3609
          %v3611 = vsel %vm3589, %v2776, %v3610
          %v3612 = vsel %vm3577, %v2790, %v2783
          %v3613 = vsel %vm3579, %v2797, %v3612
          %v3614 = vsel %vm3581, %v2804, %v3613
          %v3615 = vsel %vm3583, %v2811, %v3614
          %v3616 = vsel %vm3585, %v2818, %v3615
          %v3617 = vsel %vm3587, %v2825, %v3616
          %v3618 = vsel %vm3589, %v2832, %v3617
          %v3619 = vsel %vm3577, %v2846, %v2839
          %v3620 = vsel %vm3579, %v2853, %v3619
          %v3621 = vsel %vm3581, %v2860, %v3620
          %v3622 = vsel %vm3583, %v2867, %v3621
          %v3623 = vsel %vm3585, %v2874, %v3622
          %v3624 = vsel %vm3587, %v2881, %v3623
          %v3625 = vsel %vm3589, %v2888, %v3624
          %v3626 = vsel %vm3577, %v2902, %v2895
          %v3627 = vsel %vm3579, %v2909, %v3626
          %v3628 = vsel %vm3581, %v2916, %v3627
          %v3629 = vsel %vm3583, %v2923, %v3628
          %v3630 = vsel %vm3585, %v2930, %v3629
          %v3631 = vsel %vm3587, %v2937, %v3630
          %v3632 = vsel %vm3589, %v2944, %v3631
          %v3633 = vsel %vm3577, %v2958, %v2951
          %v3634 = vsel %vm3579, %v2965, %v3633
          %v3635 = vsel %vm3581, %v2972, %v3634
          %v3636 = vsel %vm3583, %v2979, %v3635
          %v3637 = vsel %vm3585, %v2986, %v3636
          %v3638 = vsel %vm3587, %v2993, %v3637
          %v3639 = vsel %vm3589, %v3000, %v3638
          %v3640 = vsel %vm3577, %v3014, %v3007
          %v3641 = vsel %vm3579, %v3021, %v3640
          %v3642 = vsel %vm3581, %v3028, %v3641
          %v3643 = vsel %vm3583, %v3035, %v3642
          %v3644 = vsel %vm3585, %v3042, %v3643
          %v3645 = vsel %vm3587, %v3049, %v3644
          %v3646 = vsel %vm3589, %v3056, %v3645
          %v3647 = vsel %vm3577, %v3070, %v3063
          %v3648 = vsel %vm3579, %v3077, %v3647
          %v3649 = vsel %vm3581, %v3084, %v3648
          %v3650 = vsel %vm3583, %v3091, %v3649
          %v3651 = vsel %vm3585, %v3098, %v3650
          %v3652 = vsel %vm3587, %v3105, %v3651
          %v3653 = vsel %vm3589, %v3112, %v3652
          %v3654 = vsel %vm3577, %v3126, %v3119
          %v3655 = vsel %vm3579, %v3133, %v3654
          %v3656 = vsel %vm3581, %v3140, %v3655
          %v3657 = vsel %vm3583, %v3147, %v3656
          %v3658 = vsel %vm3585, %v3154, %v3657
          %v3659 = vsel %vm3587, %v3161, %v3658
          %v3660 = vsel %vm3589, %v3168, %v3659
          %v3661 = vsel %vm3577, %v3182, %v3175
          %v3662 = vsel %vm3579, %v3189, %v3661
          %v3663 = vsel %vm3581, %v3196, %v3662
          %v3664 = vsel %vm3583, %v3203, %v3663
          %v3665 = vsel %vm3585, %v3210, %v3664
          %v3666 = vsel %vm3587, %v3217, %v3665
          %v3667 = vsel %vm3589, %v3224, %v3666
          %v3668 = vsel %vm3577, %v3238, %v3231
          %v3669 = vsel %vm3579, %v3245, %v3668
          %v3670 = vsel %vm3581, %v3252, %v3669
          %v3671 = vsel %vm3583, %v3259, %v3670
          %v3672 = vsel %vm3585, %v3266, %v3671
          %v3673 = vsel %vm3587, %v3273, %v3672
          %v3674 = vsel %vm3589, %v3280, %v3673
          %v3675 = vsel %vm3577, %v3294, %v3287
          %v3676 = vsel %vm3579, %v3301, %v3675
          %v3677 = vsel %vm3581, %v3308, %v3676
          %v3678 = vsel %vm3583, %v3315, %v3677
          %v3679 = vsel %vm3585, %v3322, %v3678
          %v3680 = vsel %vm3587, %v3329, %v3679
          %v3681 = vsel %vm3589, %v3336, %v3680
          %v3682 = vsel %vm3577, %v3350, %v3343
          %v3683 = vsel %vm3579, %v3357, %v3682
          %v3684 = vsel %vm3581, %v3364, %v3683
          %v3685 = vsel %vm3583, %v3371, %v3684
          %v3686 = vsel %vm3585, %v3378, %v3685
          %v3687 = vsel %vm3587, %v3385, %v3686
          %v3688 = vsel %vm3589, %v3392, %v3687
          %v3689 = vsel %vm3577, %v3406, %v3399
          %v3690 = vsel %vm3579, %v3413, %v3689
          %v3691 = vsel %vm3581, %v3420, %v3690
          %v3692 = vsel %vm3583, %v3427, %v3691
          %v3693 = vsel %vm3585, %v3434, %v3692
          %v3694 = vsel %vm3587, %v3441, %v3693
          %v3695 = vsel %vm3589, %v3448, %v3694
          %v3712 = vadd.f32 %v2537, %v3590
          %v3713 = vadd.f32 %v2538, %v3597
          %v3714 = vadd.f32 %v2539, %v3604
          %v3715 = vadd.f32 %v2540, %v3611
          %v3716 = vadd.f32 %v2541, %v3618
          %v3717 = vadd.f32 %v2542, %v3625
          %v3718 = vadd.f32 %v2543, %v3632
          %v3719 = vadd.f32 %v2544, %v3639
          %v3720 = vadd.f32 %v2545, %v3646
          %v3721 = vadd.f32 %v2546, %v3653
          %v3722 = vadd.f32 %v2547, %v3660
          %v3723 = vadd.f32 %v2548, %v3667
          %v3724 = vadd.f32 %v2549, %v3674
          %v3725 = vadd.f32 %v2550, %v3681
          %v3726 = vadd.f32 %v2551, %v3688
          %v3727 = vadd.f32 %v2552, %v3695
          %3728 = vst [vmem:[#allocation3] sm:$0xff] %v3712
          %3729 = vst [vmem:[#allocation3 + $0x8] sm:$0xff] %v3713
          %3730 = vst [vmem:[#allocation3 + $0x10] sm:$0xff] %v3714
          %3731 = vst [vmem:[#allocation3 + $0x18] sm:$0xff] %v3715
          %3732 = vst [vmem:[#allocation3 + $0x20] sm:$0xff] %v3716
          %3733 = vst [vmem:[#allocation3 + $0x28] sm:$0xff] %v3717
          %3734 = vst [vmem:[#allocation3 + $0x30] sm:$0xff] %v3718
          %3735 = vst [vmem:[#allocation3 + $0x38] sm:$0xff] %v3719
          %3736 = vst [vmem:[#allocation3 + $0x40] sm:$0xff] %v3720
          %3737 = vst [vmem:[#allocation3 + $0x48] sm:$0xff] %v3721
          %3738 = vst [vmem:[#allocation3 + $0x50] sm:$0xff] %v3722
          %3739 = vst [vmem:[#allocation3 + $0x58] sm:$0xff] %v3723
          %3740 = vst [vmem:[#allocation3 + $0x60] sm:$0xff] %v3724
          %3741 = vst [vmem:[#allocation3 + $0x68] sm:$0xff] %v3725
          %3742 = vst [vmem:[#allocation3 + $0x70] sm:$0xff] %v3726
          %3743 = vst [vmem:[#allocation3 + $0x78] sm:$0xff] %v3727
        $region71: #{tpu_custom_call.1} parent=61 // loop_footer
          %s580 = sadd.s32 1, %s576
        $region72: #{tpu_custom_call.1} parent=61 // loop_footer_branch
          %575 = sbr.rel target = $region68
        $region73: #{tpu_custom_call.1} parent=61 // loop_exit
          _
        %v3744 = vld [vmem:[#allocation3] sm:$0xff]
        %v3745 = vld [vmem:[#allocation3 + $0x8] sm:$0xff]
        %v3746 = vld [vmem:[#allocation3 + $0x10] sm:$0xff]
        %v3747 = vld [vmem:[#allocation3 + $0x18] sm:$0xff]
        %v3748 = vld [vmem:[#allocation3 + $0x20] sm:$0xff]
        %v3749 = vld [vmem:[#allocation3 + $0x28] sm:$0xff]
        %v3750 = vld [vmem:[#allocation3 + $0x30] sm:$0xff]
        %v3751 = vld [vmem:[#allocation3 + $0x38] sm:$0xff]
        %v3752 = vld [vmem:[#allocation3 + $0x40] sm:$0xff]
        %v3753 = vld [vmem:[#allocation3 + $0x48] sm:$0xff]
        %v3754 = vld [vmem:[#allocation3 + $0x50] sm:$0xff]
        %v3755 = vld [vmem:[#allocation3 + $0x58] sm:$0xff]
        %v3756 = vld [vmem:[#allocation3 + $0x60] sm:$0xff]
        %v3757 = vld [vmem:[#allocation3 + $0x68] sm:$0xff]
        %v3758 = vld [vmem:[#allocation3 + $0x70] sm:$0xff]
        %v3759 = vld [vmem:[#allocation3 + $0x78] sm:$0xff]
        %v3760 = vmul.f32 %v543, 0.0625
        %v3761 = vmul.f32 %v544, 0.0625
        %v3762 = vmul.f32 %v545, 0.0625
        %v3763 = vmul.f32 %v546, 0.0625
        %v3764 = vmul.f32 %v547, 0.0625
        %v3765 = vmul.f32 %v548, 0.0625
        %v3766 = vmul.f32 %v549, 0.0625
        %v3767 = vmul.f32 %v550, 0.0625
        %v3768 = vmul.f32 %v551, 0.0625
        %v3769 = vmul.f32 %v552, 0.0625
        %v3770 = vmul.f32 %v553, 0.0625
        %v3771 = vmul.f32 %v554, 0.0625
        %v3772 = vmul.f32 %v555, 0.0625
        %v3773 = vmul.f32 %v556, 0.0625
        %v3774 = vmul.f32 %v557, 0.0625
        %v3775 = vmul.f32 %v558, 0.0625
        %v3776 = vmul.f32 %v3744, 0.0625
        %v3777 = vmul.f32 %v3745, 0.0625
        %v3778 = vmul.f32 %v3746, 0.0625
        %v3779 = vmul.f32 %v3747, 0.0625
        %v3780 = vmul.f32 %v3748, 0.0625
        %v3781 = vmul.f32 %v3749, 0.0625
        %v3782 = vmul.f32 %v3750, 0.0625
        %v3783 = vmul.f32 %v3751, 0.0625
        %v3784 = vmul.f32 %v3752, 0.0625
        %v3785 = vmul.f32 %v3753, 0.0625
        %v3786 = vmul.f32 %v3754, 0.0625
        %v3787 = vmul.f32 %v3755, 0.0625
        %v3788 = vmul.f32 %v3756, 0.0625
        %v3789 = vmul.f32 %v3757, 0.0625
        %v3790 = vmul.f32 %v3758, 0.0625
        %v3791 = vmul.f32 %v3759, 0.0625
        %v3792 = vmul.f32 %v3760, 127.0
        %v3793 = vmul.f32 %v3761, 127.0
        %v3794 = vmul.f32 %v3762, 127.0
        %v3795 = vmul.f32 %v3763, 127.0
        %v3796 = vmul.f32 %v3764, 127.0
        %v3797 = vmul.f32 %v3765, 127.0
        %v3798 = vmul.f32 %v3766, 127.0
        %v3799 = vmul.f32 %v3767, 127.0
        %v3800 = vmul.f32 %v3768, 127.0
        %v3801 = vmul.f32 %v3769, 127.0
        %v3802 = vmul.f32 %v3770, 127.0
        %v3803 = vmul.f32 %v3771, 127.0
        %v3804 = vmul.f32 %v3772, 127.0
        %v3805 = vmul.f32 %v3773, 127.0
        %v3806 = vmul.f32 %v3774, 127.0
        %v3807 = vmul.f32 %v3775, 127.0
        %v3808 = vsub.f32 %v3792, %v3776
        %v3809 = vsub.f32 %v3793, %v3777
        %v3810 = vsub.f32 %v3794, %v3778
        %v3811 = vsub.f32 %v3795, %v3779
        %v3812 = vsub.f32 %v3796, %v3780
        %v3813 = vsub.f32 %v3797, %v3781
        %v3814 = vsub.f32 %v3798, %v3782
        %v3815 = vsub.f32 %v3799, %v3783
        %v3816 = vsub.f32 %v3800, %v3784
        %v3817 = vsub.f32 %v3801, %v3785
        %v3818 = vsub.f32 %v3802, %v3786
        %v3819 = vsub.f32 %v3803, %v3787
        %v3820 = vsub.f32 %v3804, %v3788
        %v3821 = vsub.f32 %v3805, %v3789
        %v3822 = vsub.f32 %v3806, %v3790
        %v3823 = vsub.f32 %v3807, %v3791
        %v3824 = vmax.f32 %v3808, %v3812
        %v3825 = vmax.f32 %v3809, %v3813
        %v3826 = vmax.f32 %v3810, %v3814
        %v3827 = vmax.f32 %v3811, %v3815
        %v3828 = vmax.f32 %v3824, %v3816
        %v3829 = vmax.f32 %v3825, %v3817
        %v3830 = vmax.f32 %v3826, %v3818
        %v3831 = vmax.f32 %v3827, %v3819
        %v3832 = vmax.f32 %v3828, %v3820
        %v3833 = vmax.f32 %v3829, %v3821
        %v3834 = vmax.f32 %v3830, %v3822
        %v3835 = vmax.f32 %v3831, %v3823
        %v3836 = vmax.f32 %v3832, %v3833
        %v3837 = vmax.f32 %v3834, %v3835
        %v3838 = vmax.f32 %v3836, %v3837
        %v3839 = vrot.slane %v3838, 4
        %v3840 = vmax.f32 %v3838, %v3839
        %v3841 = vrot.slane %v3840, 2
        %v3842 = vmax.f32 %v3840, %v3841
        %v3843 = vrot.slane %v3842, 1
        %v3844 = vmax.f32 %v3842, %v3843
        %v3845 = vsub.f32 %v3808, %v3844
        %v3846 = vsub.f32 %v3809, %v3844
        %v3847 = vsub.f32 %v3810, %v3844
        %v3848 = vsub.f32 %v3811, %v3844
        %v3849 = vsub.f32 %v3812, %v3844
        %v3850 = vsub.f32 %v3813, %v3844
        %v3851 = vsub.f32 %v3814, %v3844
        %v3852 = vsub.f32 %v3815, %v3844
        %v3853 = vsub.f32 %v3816, %v3844
        %v3854 = vsub.f32 %v3817, %v3844
        %v3855 = vsub.f32 %v3818, %v3844
        %v3856 = vsub.f32 %v3819, %v3844
        %v3857 = vsub.f32 %v3820, %v3844
        %v3858 = vsub.f32 %v3821, %v3844
        %v3859 = vsub.f32 %v3822, %v3844
        %v3860 = vsub.f32 %v3823, %v3844
        %v3861 = vmul.f32 %v3845, 1.442695
        %v3862 = vpow.pop %v3861
        %v3863 = vmul.f32 %v3846, 1.442695
        %v3864 = vpow.pop %v3863
        %v3865 = vmul.f32 %v3847, 1.442695
        %v3866 = vpow.pop %v3865
        %v3867 = vmul.f32 %v3848, 1.442695
        %v3868 = vpow.pop %v3867
        %v3869 = vmul.f32 %v3849, 1.442695
        %v3870 = vpow.pop %v3869
        %v3871 = vmul.f32 %v3850, 1.442695
        %v3872 = vpow.pop %v3871
        %v3873 = vmul.f32 %v3851, 1.442695
        %v3874 = vpow.pop %v3873
        %v3875 = vmul.f32 %v3852, 1.442695
        %v3876 = vpow.pop %v3875
        %v3877 = vmul.f32 %v3853, 1.442695
        %v3878 = vpow.pop %v3877
        %v3879 = vmul.f32 %v3854, 1.442695
        %v3880 = vpow.pop %v3879
        %v3881 = vmul.f32 %v3855, 1.442695
        %v3882 = vpow.pop %v3881
        %v3883 = vmul.f32 %v3856, 1.442695
        %v3884 = vpow.pop %v3883
        %v3885 = vmul.f32 %v3857, 1.442695
        %v3886 = vpow.pop %v3885
        %v3887 = vmul.f32 %v3858, 1.442695
        %v3888 = vpow.pop %v3887
        %v3889 = vmul.f32 %v3859, 1.442695
        %v3890 = vpow.pop %v3889
        %v3891 = vmul.f32 %v3860, 1.442695
        %v3892 = vpow.pop %v3891
        %v3893 = vadd.f32 %v3862, %v3864
        %v3894 = vadd.f32 %v3893, %v3866
        %v3895 = vadd.f32 %v3894, %v3868
        %v3896 = vadd.f32 %v3895, %v3870
        %v3897 = vadd.f32 %v3896, %v3872
        %v3898 = vadd.f32 %v3897, %v3874
        %v3899 = vadd.f32 %v3898, %v3876
        %v3900 = vadd.f32 %v3899, %v3878
        %v3901 = vadd.f32 %v3900, %v3880
        %v3902 = vadd.f32 %v3901, %v3882
        %v3903 = vadd.f32 %v3902, %v3884
        %v3904 = vadd.f32 %v3903, %v3886
        %v3905 = vadd.f32 %v3904, %v3888
        %v3906 = vadd.f32 %v3905, %v3890
        %v3907 = vadd.f32 %v3906, %v3892
        %v3908 = vrot.slane %v3907, 4
        %v3909 = vadd.f32 %v3907, %v3908
        %v3910 = vrot.slane %v3909, 2
        %v3911 = vadd.f32 %v3909, %v3910
        %v3912 = vrot.slane %v3911, 1
        %v3913 = vadd.f32 %v3911, %v3912
        %v3914 = vrcp.pop %v3913
        %v3915 = vmul.f32 %v3862, %v3914
        %v3916 = vmul.f32 %v3864, %v3914
        %v3917 = vmul.f32 %v3866, %v3914
        %v3918 = vmul.f32 %v3868, %v3914
        %v3919 = vmul.f32 %v3870, %v3914
        %v3920 = vmul.f32 %v3872, %v3914
        %v3921 = vmul.f32 %v3874, %v3914
        %v3922 = vmul.f32 %v3876, %v3914
        %v3923 = vmul.f32 %v3878, %v3914
        %v3924 = vmul.f32 %v3880, %v3914
        %v3925 = vmul.f32 %v3882, %v3914
        %v3926 = vmul.f32 %v3884, %v3914
        %v3927 = vmul.f32 %v3886, %v3914
        %v3928 = vmul.f32 %v3888, %v3914
        %v3929 = vmul.f32 %v3890, %v3914
        %v3930 = vmul.f32 %v3892, %v3914
        %v3931 = vadd.f32 %v3915, 0.0
        %v3932 = vadd.f32 %v3916, 0.0
        %v3933 = vadd.f32 %v3917, 0.0
        %v3934 = vadd.f32 %v3918, 0.0
        %v3935 = vadd.f32 %v3919, 0.0
        %v3936 = vadd.f32 %v3920, 0.0
        %v3937 = vadd.f32 %v3921, 0.0
        %v3938 = vadd.f32 %v3922, 0.0
        %v3939 = vadd.f32 %v3923, 0.0
        %v3940 = vadd.f32 %v3924, 0.0
        %v3941 = vadd.f32 %v3925, 0.0
        %v3942 = vadd.f32 %v3926, 0.0
        %v3943 = vadd.f32 %v3927, 0.0
        %v3944 = vadd.f32 %v3928, 0.0
        %v3945 = vadd.f32 %v3929, 0.0
        %v3946 = vadd.f32 %v3930, 0.0
        %v3947 = vmul.f32 %v3760, 125.0
        %v3948 = vmul.f32 %v3761, 125.0
        %v3949 = vmul.f32 %v3762, 125.0
        %v3950 = vmul.f32 %v3763, 125.0
        %v3951 = vmul.f32 %v3764, 125.0
        %v3952 = vmul.f32 %v3765, 125.0
        %v3953 = vmul.f32 %v3766, 125.0
        %v3954 = vmul.f32 %v3767, 125.0
        %v3955 = vmul.f32 %v3768, 125.0
        %v3956 = vmul.f32 %v3769, 125.0
        %v3957 = vmul.f32 %v3770, 125.0
        %v3958 = vmul.f32 %v3771, 125.0
        %v3959 = vmul.f32 %v3772, 125.0
        %v3960 = vmul.f32 %v3773, 125.0
        %v3961 = vmul.f32 %v3774, 125.0
        %v3962 = vmul.f32 %v3775, 125.0
        %v3963 = vsub.f32 %v3947, %v3776
        %v3964 = vsub.f32 %v3948, %v3777
        %v3965 = vsub.f32 %v3949, %v3778
        %v3966 = vsub.f32 %v3950, %v3779
        %v3967 = vsub.f32 %v3951, %v3780
        %v3968 = vsub.f32 %v3952, %v3781
        %v3969 = vsub.f32 %v3953, %v3782
        %v3970 = vsub.f32 %v3954, %v3783
        %v3971 = vsub.f32 %v3955, %v3784
        %v3972 = vsub.f32 %v3956, %v3785
        %v3973 = vsub.f32 %v3957, %v3786
        %v3974 = vsub.f32 %v3958, %v3787
        %v3975 = vsub.f32 %v3959, %v3788
        %v3976 = vsub.f32 %v3960, %v3789
        %v3977 = vsub.f32 %v3961, %v3790
        %v3978 = vsub.f32 %v3962, %v3791
        %v3979 = vmax.f32 %v3963, %v3967
        %v3980 = vmax.f32 %v3964, %v3968
        %v3981 = vmax.f32 %v3965, %v3969
        %v3982 = vmax.f32 %v3966, %v3970
        %v3983 = vmax.f32 %v3979, %v3971
        %v3984 = vmax.f32 %v3980, %v3972
        %v3985 = vmax.f32 %v3981, %v3973
        %v3986 = vmax.f32 %v3982, %v3974
        %v3987 = vmax.f32 %v3983, %v3975
        %v3988 = vmax.f32 %v3984, %v3976
        %v3989 = vmax.f32 %v3985, %v3977
        %v3990 = vmax.f32 %v3986, %v3978
        %v3991 = vmax.f32 %v3987, %v3988
        %v3992 = vmax.f32 %v3989, %v3990
        %v3993 = vmax.f32 %v3991, %v3992
        %v3994 = vrot.slane %v3993, 4
        %v3995 = vmax.f32 %v3993, %v3994
        %v3996 = vrot.slane %v3995, 2
        %v3997 = vmax.f32 %v3995, %v3996
        %v3998 = vrot.slane %v3997, 1
        %v3999 = vmax.f32 %v3997, %v3998
        %v4000 = vsub.f32 %v3963, %v3999
        %v4001 = vsub.f32 %v3964, %v3999
        %v4002 = vsub.f32 %v3965, %v3999
        %v4003 = vsub.f32 %v3966, %v3999
        %v4004 = vsub.f32 %v3967, %v3999
        %v4005 = vsub.f32 %v3968, %v3999
        %v4006 = vsub.f32 %v3969, %v3999
        %v4007 = vsub.f32 %v3970, %v3999
        %v4008 = vsub.f32 %v3971, %v3999
        %v4009 = vsub.f32 %v3972, %v3999
        %v4010 = vsub.f32 %v3973, %v3999
        %v4011 = vsub.f32 %v3974, %v3999
        %v4012 = vsub.f32 %v3975, %v3999
        %v4013 = vsub.f32 %v3976, %v3999
        %v4014 = vsub.f32 %v3977, %v3999
        %v4015 = vsub.f32 %v3978, %v3999
        %v4016 = vmul.f32 %v4000, 1.442695
        %v4017 = vpow.pop %v4016
        %v4018 = vmul.f32 %v4001, 1.442695
        %v4019 = vpow.pop %v4018
        %v4020 = vmul.f32 %v4002, 1.442695
        %v4021 = vpow.pop %v4020
        %v4022 = vmul.f32 %v4003, 1.442695
        %v4023 = vpow.pop %v4022
        %v4024 = vmul.f32 %v4004, 1.442695
        %v4025 = vpow.pop %v4024
        %v4026 = vmul.f32 %v4005, 1.442695
        %v4027 = vpow.pop %v4026
        %v4028 = vmul.f32 %v4006, 1.442695
        %v4029 = vpow.pop %v4028
        %v4030 = vmul.f32 %v4007, 1.442695
        %v4031 = vpow.pop %v4030
        %v4032 = vmul.f32 %v4008, 1.442695
        %v4033 = vpow.pop %v4032
        %v4034 = vmul.f32 %v4009, 1.442695
        %v4035 = vpow.pop %v4034
        %v4036 = vmul.f32 %v4010, 1.442695
        %v4037 = vpow.pop %v4036
        %v4038 = vmul.f32 %v4011, 1.442695
        %v4039 = vpow.pop %v4038
        %v4040 = vmul.f32 %v4012, 1.442695
        %v4041 = vpow.pop %v4040
        %v4042 = vmul.f32 %v4013, 1.442695
        %v4043 = vpow.pop %v4042
        %v4044 = vmul.f32 %v4014, 1.442695
        %v4045 = vpow.pop %v4044
        %v4046 = vmul.f32 %v4015, 1.442695
        %v4047 = vpow.pop %v4046
        %v4048 = vadd.f32 %v4017, %v4019
        %v4049 = vadd.f32 %v4048, %v4021
        %v4050 = vadd.f32 %v4049, %v4023
        %v4051 = vadd.f32 %v4050, %v4025
        %v4052 = vadd.f32 %v4051, %v4027
        %v4053 = vadd.f32 %v4052, %v4029
        %v4054 = vadd.f32 %v4053, %v4031
        %v4055 = vadd.f32 %v4054, %v4033
        %v4056 = vadd.f32 %v4055, %v4035
        %v4057 = vadd.f32 %v4056, %v4037
        %v4058 = vadd.f32 %v4057, %v4039
        %v4059 = vadd.f32 %v4058, %v4041
        %v4060 = vadd.f32 %v4059, %v4043
        %v4061 = vadd.f32 %v4060, %v4045
        %v4062 = vadd.f32 %v4061, %v4047
        %v4063 = vrot.slane %v4062, 4
        %v4064 = vadd.f32 %v4062, %v4063
        %v4065 = vrot.slane %v4064, 2
        %v4066 = vadd.f32 %v4064, %v4065
        %v4067 = vrot.slane %v4066, 1
        %v4068 = vadd.f32 %v4066, %v4067
        %v4069 = vrcp.pop %v4068
        %v4070 = vmul.f32 %v4017, %v4069
        %v4071 = vmul.f32 %v4019, %v4069
        %v4072 = vmul.f32 %v4021, %v4069
        %v4073 = vmul.f32 %v4023, %v4069
        %v4074 = vmul.f32 %v4025, %v4069
        %v4075 = vmul.f32 %v4027, %v4069
        %v4076 = vmul.f32 %v4029, %v4069
        %v4077 = vmul.f32 %v4031, %v4069
        %v4078 = vmul.f32 %v4033, %v4069
        %v4079 = vmul.f32 %v4035, %v4069
        %v4080 = vmul.f32 %v4037, %v4069
        %v4081 = vmul.f32 %v4039, %v4069
        %v4082 = vmul.f32 %v4041, %v4069
        %v4083 = vmul.f32 %v4043, %v4069
        %v4084 = vmul.f32 %v4045, %v4069
        %v4085 = vmul.f32 %v4047, %v4069
        %v4086 = vadd.f32 %v3931, %v4070
        %v4087 = vadd.f32 %v3932, %v4071
        %v4088 = vadd.f32 %v3933, %v4072
        %v4089 = vadd.f32 %v3934, %v4073
        %v4090 = vadd.f32 %v3935, %v4074
        %v4091 = vadd.f32 %v3936, %v4075
        %v4092 = vadd.f32 %v3937, %v4076
        %v4093 = vadd.f32 %v3938, %v4077
        %v4094 = vadd.f32 %v3939, %v4078
        %v4095 = vadd.f32 %v3940, %v4079
        %v4096 = vadd.f32 %v3941, %v4080
        %v4097 = vadd.f32 %v3942, %v4081
        %v4098 = vadd.f32 %v3943, %v4082
        %v4099 = vadd.f32 %v3944, %v4083
        %v4100 = vadd.f32 %v3945, %v4084
        %v4101 = vadd.f32 %v3946, %v4085
        %v4102 = vmul.f32 %v3760, 123.0
        %v4103 = vmul.f32 %v3761, 123.0
        %v4104 = vmul.f32 %v3762, 123.0
        %v4105 = vmul.f32 %v3763, 123.0
        %v4106 = vmul.f32 %v3764, 123.0
        %v4107 = vmul.f32 %v3765, 123.0
        %v4108 = vmul.f32 %v3766, 123.0
        %v4109 = vmul.f32 %v3767, 123.0
        %v4110 = vmul.f32 %v3768, 123.0
        %v4111 = vmul.f32 %v3769, 123.0
        %v4112 = vmul.f32 %v3770, 123.0
        %v4113 = vmul.f32 %v3771, 123.0
        %v4114 = vmul.f32 %v3772, 123.0
        %v4115 = vmul.f32 %v3773, 123.0
        %v4116 = vmul.f32 %v3774, 123.0
        %v4117 = vmul.f32 %v3775, 123.0
        %v4118 = vsub.f32 %v4102, %v3776
        %v4119 = vsub.f32 %v4103, %v3777
        %v4120 = vsub.f32 %v4104, %v3778
        %v4121 = vsub.f32 %v4105, %v3779
        %v4122 = vsub.f32 %v4106, %v3780
        %v4123 = vsub.f32 %v4107, %v3781
        %v4124 = vsub.f32 %v4108, %v3782
        %v4125 = vsub.f32 %v4109, %v3783
        %v4126 = vsub.f32 %v4110, %v3784
        %v4127 = vsub.f32 %v4111, %v3785
        %v4128 = vsub.f32 %v4112, %v3786
        %v4129 = vsub.f32 %v4113, %v3787
        %v4130 = vsub.f32 %v4114, %v3788
        %v4131 = vsub.f32 %v4115, %v3789
        %v4132 = vsub.f32 %v4116, %v3790
        %v4133 = vsub.f32 %v4117, %v3791
        %v4134 = vmax.f32 %v4118, %v4122
        %v4135 = vmax.f32 %v4119, %v4123
        %v4136 = vmax.f32 %v4120, %v4124
        %v4137 = vmax.f32 %v4121, %v4125
        %v4138 = vmax.f32 %v4134, %v4126
        %v4139 = vmax.f32 %v4135, %v4127
        %v4140 = vmax.f32 %v4136, %v4128
        %v4141 = vmax.f32 %v4137, %v4129
        %v4142 = vmax.f32 %v4138, %v4130
        %v4143 = vmax.f32 %v4139, %v4131
        %v4144 = vmax.f32 %v4140, %v4132
        %v4145 = vmax.f32 %v4141, %v4133
        %v4146 = vmax.f32 %v4142, %v4143
        %v4147 = vmax.f32 %v4144, %v4145
        %v4148 = vmax.f32 %v4146, %v4147
        %v4149 = vrot.slane %v4148, 4
        %v4150 = vmax.f32 %v4148, %v4149
        %v4151 = vrot.slane %v4150, 2
        %v4152 = vmax.f32 %v4150, %v4151
        %v4153 = vrot.slane %v4152, 1
        %v4154 = vmax.f32 %v4152, %v4153
        %v4155 = vsub.f32 %v4118, %v4154
        %v4156 = vsub.f32 %v4119, %v4154
        %v4157 = vsub.f32 %v4120, %v4154
        %v4158 = vsub.f32 %v4121, %v4154
        %v4159 = vsub.f32 %v4122, %v4154
        %v4160 = vsub.f32 %v4123, %v4154
        %v4161 = vsub.f32 %v4124, %v4154
        %v4162 = vsub.f32 %v4125, %v4154
        %v4163 = vsub.f32 %v4126, %v4154
        %v4164 = vsub.f32 %v4127, %v4154
        %v4165 = vsub.f32 %v4128, %v4154
        %v4166 = vsub.f32 %v4129, %v4154
        %v4167 = vsub.f32 %v4130, %v4154
        %v4168 = vsub.f32 %v4131, %v4154
        %v4169 = vsub.f32 %v4132, %v4154
        %v4170 = vsub.f32 %v4133, %v4154
        %v4171 = vmul.f32 %v4155, 1.442695
        %v4172 = vpow.pop %v4171
        %v4173 = vmul.f32 %v4156, 1.442695
        %v4174 = vpow.pop %v4173
        %v4175 = vmul.f32 %v4157, 1.442695
        %v4176 = vpow.pop %v4175
        %v4177 = vmul.f32 %v4158, 1.442695
        %v4178 = vpow.pop %v4177
        %v4179 = vmul.f32 %v4159, 1.442695
        %v4180 = vpow.pop %v4179
        %v4181 = vmul.f32 %v4160, 1.442695
        %v4182 = vpow.pop %v4181
        %v4183 = vmul.f32 %v4161, 1.442695
        %v4184 = vpow.pop %v4183
        %v4185 = vmul.f32 %v4162, 1.442695
        %v4186 = vpow.pop %v4185
        %v4187 = vmul.f32 %v4163, 1.442695
        %v4188 = vpow.pop %v4187
        %v4189 = vmul.f32 %v4164, 1.442695
        %v4190 = vpow.pop %v4189
        %v4191 = vmul.f32 %v4165, 1.442695
        %v4192 = vpow.pop %v4191
        %v4193 = vmul.f32 %v4166, 1.442695
        %v4194 = vpow.pop %v4193
        %v4195 = vmul.f32 %v4167, 1.442695
        %v4196 = vpow.pop %v4195
        %v4197 = vmul.f32 %v4168, 1.442695
        %v4198 = vpow.pop %v4197
        %v4199 = vmul.f32 %v4169, 1.442695
        %v4200 = vpow.pop %v4199
        %v4201 = vmul.f32 %v4170, 1.442695
        %v4202 = vpow.pop %v4201
        %v4203 = vadd.f32 %v4172, %v4174
        %v4204 = vadd.f32 %v4203, %v4176
        %v4205 = vadd.f32 %v4204, %v4178
        %v4206 = vadd.f32 %v4205, %v4180
        %v4207 = vadd.f32 %v4206, %v4182
        %v4208 = vadd.f32 %v4207, %v4184
        %v4209 = vadd.f32 %v4208, %v4186
        %v4210 = vadd.f32 %v4209, %v4188
        %v4211 = vadd.f32 %v4210, %v4190
        %v4212 = vadd.f32 %v4211, %v4192
        %v4213 = vadd.f32 %v4212, %v4194
        %v4214 = vadd.f32 %v4213, %v4196
        %v4215 = vadd.f32 %v4214, %v4198
        %v4216 = vadd.f32 %v4215, %v4200
        %v4217 = vadd.f32 %v4216, %v4202
        %v4218 = vrot.slane %v4217, 4
        %v4219 = vadd.f32 %v4217, %v4218
        %v4220 = vrot.slane %v4219, 2
        %v4221 = vadd.f32 %v4219, %v4220
        %v4222 = vrot.slane %v4221, 1
        %v4223 = vadd.f32 %v4221, %v4222
        %v4224 = vrcp.pop %v4223
        %v4225 = vmul.f32 %v4172, %v4224
        %v4226 = vmul.f32 %v4174, %v4224
        %v4227 = vmul.f32 %v4176, %v4224
        %v4228 = vmul.f32 %v4178, %v4224
        %v4229 = vmul.f32 %v4180, %v4224
        %v4230 = vmul.f32 %v4182, %v4224
        %v4231 = vmul.f32 %v4184, %v4224
        %v4232 = vmul.f32 %v4186, %v4224
        %v4233 = vmul.f32 %v4188, %v4224
        %v4234 = vmul.f32 %v4190, %v4224
        %v4235 = vmul.f32 %v4192, %v4224
        %v4236 = vmul.f32 %v4194, %v4224
        %v4237 = vmul.f32 %v4196, %v4224
        %v4238 = vmul.f32 %v4198, %v4224
        %v4239 = vmul.f32 %v4200, %v4224
        %v4240 = vmul.f32 %v4202, %v4224
        %v4241 = vadd.f32 %v4086, %v4225
        %v4242 = vadd.f32 %v4087, %v4226
        %v4243 = vadd.f32 %v4088, %v4227
        %v4244 = vadd.f32 %v4089, %v4228
        %v4245 = vadd.f32 %v4090, %v4229
        %v4246 = vadd.f32 %v4091, %v4230
        %v4247 = vadd.f32 %v4092, %v4231
        %v4248 = vadd.f32 %v4093, %v4232
        %v4249 = vadd.f32 %v4094, %v4233
        %v4250 = vadd.f32 %v4095, %v4234
        %v4251 = vadd.f32 %v4096, %v4235
        %v4252 = vadd.f32 %v4097, %v4236
        %v4253 = vadd.f32 %v4098, %v4237
        %v4254 = vadd.f32 %v4099, %v4238
        %v4255 = vadd.f32 %v4100, %v4239
        %v4256 = vadd.f32 %v4101, %v4240
        %v4257 = vmul.f32 %v3760, 121.0
        %v4258 = vmul.f32 %v3761, 121.0
        %v4259 = vmul.f32 %v3762, 121.0
        %v4260 = vmul.f32 %v3763, 121.0
        %v4261 = vmul.f32 %v3764, 121.0
        %v4262 = vmul.f32 %v3765, 121.0
        %v4263 = vmul.f32 %v3766, 121.0
        %v4264 = vmul.f32 %v3767, 121.0
        %v4265 = vmul.f32 %v3768, 121.0
        %v4266 = vmul.f32 %v3769, 121.0
        %v4267 = vmul.f32 %v3770, 121.0
        %v4268 = vmul.f32 %v3771, 121.0
        %v4269 = vmul.f32 %v3772, 121.0
        %v4270 = vmul.f32 %v3773, 121.0
        %v4271 = vmul.f32 %v3774, 121.0
        %v4272 = vmul.f32 %v3775, 121.0
        %v4273 = vsub.f32 %v4257, %v3776
        %v4274 = vsub.f32 %v4258, %v3777
        %v4275 = vsub.f32 %v4259, %v3778
        %v4276 = vsub.f32 %v4260, %v3779
        %v4277 = vsub.f32 %v4261, %v3780
        %v4278 = vsub.f32 %v4262, %v3781
        %v4279 = vsub.f32 %v4263, %v3782
        %v4280 = vsub.f32 %v4264, %v3783
        %v4281 = vsub.f32 %v4265, %v3784
        %v4282 = vsub.f32 %v4266, %v3785
        %v4283 = vsub.f32 %v4267, %v3786
        %v4284 = vsub.f32 %v4268, %v3787
        %v4285 = vsub.f32 %v4269, %v3788
        %v4286 = vsub.f32 %v4270, %v3789
        %v4287 = vsub.f32 %v4271, %v3790
        %v4288 = vsub.f32 %v4272, %v3791
        %v4289 = vmax.f32 %v4273, %v4277
        %v4290 = vmax.f32 %v4274, %v4278
        %v4291 = vmax.f32 %v4275, %v4279
        %v4292 = vmax.f32 %v4276, %v4280
        %v4293 = vmax.f32 %v4289, %v4281
        %v4294 = vmax.f32 %v4290, %v4282
        %v4295 = vmax.f32 %v4291, %v4283
        %v4296 = vmax.f32 %v4292, %v4284
        %v4297 = vmax.f32 %v4293, %v4285
        %v4298 = vmax.f32 %v4294, %v4286
        %v4299 = vmax.f32 %v4295, %v4287
        %v4300 = vmax.f32 %v4296, %v4288
        %v4301 = vmax.f32 %v4297, %v4298
        %v4302 = vmax.f32 %v4299, %v4300
        %v4303 = vmax.f32 %v4301, %v4302
        %v4304 = vrot.slane %v4303, 4
        %v4305 = vmax.f32 %v4303, %v4304
        %v4306 = vrot.slane %v4305, 2
        %v4307 = vmax.f32 %v4305, %v4306
        %v4308 = vrot.slane %v4307, 1
        %v4309 = vmax.f32 %v4307, %v4308
        %v4310 = vsub.f32 %v4273, %v4309
        %v4311 = vsub.f32 %v4274, %v4309
        %v4312 = vsub.f32 %v4275, %v4309
        %v4313 = vsub.f32 %v4276, %v4309
        %v4314 = vsub.f32 %v4277, %v4309
        %v4315 = vsub.f32 %v4278, %v4309
        %v4316 = vsub.f32 %v4279, %v4309
        %v4317 = vsub.f32 %v4280, %v4309
        %v4318 = vsub.f32 %v4281, %v4309
        %v4319 = vsub.f32 %v4282, %v4309
        %v4320 = vsub.f32 %v4283, %v4309
        %v4321 = vsub.f32 %v4284, %v4309
        %v4322 = vsub.f32 %v4285, %v4309
        %v4323 = vsub.f32 %v4286, %v4309
        %v4324 = vsub.f32 %v4287, %v4309
        %v4325 = vsub.f32 %v4288, %v4309
        %v4326 = vmul.f32 %v4310, 1.442695
        %v4327 = vpow.pop %v4326
        %v4328 = vmul.f32 %v4311, 1.442695
        %v4329 = vpow.pop %v4328
        %v4330 = vmul.f32 %v4312, 1.442695
        %v4331 = vpow.pop %v4330
        %v4332 = vmul.f32 %v4313, 1.442695
        %v4333 = vpow.pop %v4332
        %v4334 = vmul.f32 %v4314, 1.442695
        %v4335 = vpow.pop %v4334
        %v4336 = vmul.f32 %v4315, 1.442695
        %v4337 = vpow.pop %v4336
        %v4338 = vmul.f32 %v4316, 1.442695
        %v4339 = vpow.pop %v4338
        %v4340 = vmul.f32 %v4317, 1.442695
        %v4341 = vpow.pop %v4340
        %v4342 = vmul.f32 %v4318, 1.442695
        %v4343 = vpow.pop %v4342
        %v4344 = vmul.f32 %v4319, 1.442695
        %v4345 = vpow.pop %v4344
        %v4346 = vmul.f32 %v4320, 1.442695
        %v4347 = vpow.pop %v4346
        %v4348 = vmul.f32 %v4321, 1.442695
        %v4349 = vpow.pop %v4348
        %v4350 = vmul.f32 %v4322, 1.442695
        %v4351 = vpow.pop %v4350
        %v4352 = vmul.f32 %v4323, 1.442695
        %v4353 = vpow.pop %v4352
        %v4354 = vmul.f32 %v4324, 1.442695
        %v4355 = vpow.pop %v4354
        %v4356 = vmul.f32 %v4325, 1.442695
        %v4357 = vpow.pop %v4356
        %v4358 = vadd.f32 %v4327, %v4329
        %v4359 = vadd.f32 %v4358, %v4331
        %v4360 = vadd.f32 %v4359, %v4333
        %v4361 = vadd.f32 %v4360, %v4335
        %v4362 = vadd.f32 %v4361, %v4337
        %v4363 = vadd.f32 %v4362, %v4339
        %v4364 = vadd.f32 %v4363, %v4341
        %v4365 = vadd.f32 %v4364, %v4343
        %v4366 = vadd.f32 %v4365, %v4345
        %v4367 = vadd.f32 %v4366, %v4347
        %v4368 = vadd.f32 %v4367, %v4349
        %v4369 = vadd.f32 %v4368, %v4351
        %v4370 = vadd.f32 %v4369, %v4353
        %v4371 = vadd.f32 %v4370, %v4355
        %v4372 = vadd.f32 %v4371, %v4357
        %v4373 = vrot.slane %v4372, 4
        %v4374 = vadd.f32 %v4372, %v4373
        %v4375 = vrot.slane %v4374, 2
        %v4376 = vadd.f32 %v4374, %v4375
        %v4377 = vrot.slane %v4376, 1
        %v4378 = vadd.f32 %v4376, %v4377
        %v4379 = vrcp.pop %v4378
        %v4380 = vmul.f32 %v4327, %v4379
        %v4381 = vmul.f32 %v4329, %v4379
        %v4382 = vmul.f32 %v4331, %v4379
        %v4383 = vmul.f32 %v4333, %v4379
        %v4384 = vmul.f32 %v4335, %v4379
        %v4385 = vmul.f32 %v4337, %v4379
        %v4386 = vmul.f32 %v4339, %v4379
        %v4387 = vmul.f32 %v4341, %v4379
        %v4388 = vmul.f32 %v4343, %v4379
        %v4389 = vmul.f32 %v4345, %v4379
        %v4390 = vmul.f32 %v4347, %v4379
        %v4391 = vmul.f32 %v4349, %v4379
        %v4392 = vmul.f32 %v4351, %v4379
        %v4393 = vmul.f32 %v4353, %v4379
        %v4394 = vmul.f32 %v4355, %v4379
        %v4395 = vmul.f32 %v4357, %v4379
        %v4396 = vadd.f32 %v4241, %v4380
        %v4397 = vadd.f32 %v4242, %v4381
        %v4398 = vadd.f32 %v4243, %v4382
        %v4399 = vadd.f32 %v4244, %v4383
        %v4400 = vadd.f32 %v4245, %v4384
        %v4401 = vadd.f32 %v4246, %v4385
        %v4402 = vadd.f32 %v4247, %v4386
        %v4403 = vadd.f32 %v4248, %v4387
        %v4404 = vadd.f32 %v4249, %v4388
        %v4405 = vadd.f32 %v4250, %v4389
        %v4406 = vadd.f32 %v4251, %v4390
        %v4407 = vadd.f32 %v4252, %v4391
        %v4408 = vadd.f32 %v4253, %v4392
        %v4409 = vadd.f32 %v4254, %v4393
        %v4410 = vadd.f32 %v4255, %v4394
        %v4411 = vadd.f32 %v4256, %v4395
        %4412 = vst [vmem:[%s187] sm:$0xff] %v4396
        %4413 = vst [vmem:[%s187 + $0x8] sm:$0xff] %v4397
        %4414 = vst [vmem:[%s187 + $0x10] sm:$0xff] %v4398
        %4415 = vst [vmem:[%s187 + $0x18] sm:$0xff] %v4399
        %4416 = vst [vmem:[%s187 + $0x20] sm:$0xff] %v4400
        %4417 = vst [vmem:[%s187 + $0x28] sm:$0xff] %v4401
        %4418 = vst [vmem:[%s187 + $0x30] sm:$0xff] %v4402
        %4419 = vst [vmem:[%s187 + $0x38] sm:$0xff] %v4403
        %4420 = vst [vmem:[%s187 + $0x40] sm:$0xff] %v4404
        %4421 = vst [vmem:[%s187 + $0x48] sm:$0xff] %v4405
        %4422 = vst [vmem:[%s187 + $0x50] sm:$0xff] %v4406
        %4423 = vst [vmem:[%s187 + $0x58] sm:$0xff] %v4407
        %4424 = vst [vmem:[%s187 + $0x60] sm:$0xff] %v4408
        %4425 = vst [vmem:[%s187 + $0x68] sm:$0xff] %v4409
        %4426 = vst [vmem:[%s187 + $0x70] sm:$0xff] %v4410
        %4427 = vst [vmem:[%s187 + $0x78] sm:$0xff] %v4411
        %s4428 = sand.u32 %s71, 1
        %s4429 = scalar_lea.sflag [#allocation6], %s4428
        %s4430 = sand.u32 %s71, 1
        %s4431 = smul.addr %s4430, 128
        %s4432 = scalar_lea.vmem [#allocation5], %s4431
        // Predicated region
        $region74: #{tpu_custom_call.1} parent=61 // pred_check
          %p4433 = pneg %p81
        $region75: #{tpu_custom_call.1} parent=61 // pred_check_branch
          %4435 = sbr.rel (%p4433) target = $region77
        $region76: #{tpu_custom_call.1} parent=61 // pred_region
          %s4437 = ssub.s32 2048, 2048
          %4438 = vsyncadd %s4429, %s4437
          %s4439 = smul.addr %s16, 128
          %s4440 = scalar_lea.hbm %s2, %s4439
          %s4441 = sshll.u32 %s4432, 4
          %s4442 = int_to_ptr.vmem [resolvable:$true] %s4441
          %4447 = dma.vmem_to_hbm [thread:$0]  %s4442, 2048, %s4440, %s4429, 128, 256, 8
        $region77: #{tpu_custom_call.1} parent=61 // pred_fallthru
          _
      $region62: #{tpu_custom_call.1} parent=5 // pred_fallthru
        _
      %p4448 = scmp.le.s32.totalorder 2, %s11
      // Predicated region
      $region78: #{tpu_custom_call.1} parent=5 // pred_check
        %p4449 = pneg %p4448
      $region79: #{tpu_custom_call.1} parent=5 // pred_check_branch
        %4451 = sbr.rel (%p4449) target = $region81
      $region80: #{tpu_custom_call.1} parent=5 // pred_region
        %s4452 = ssub.s32 %s11, 2
        // Predicated region
        $region82: #{tpu_custom_call.1} parent=80 // pred_check
          %p4453 = pneg %p87
        $region83: #{tpu_custom_call.1} parent=80 // pred_check_branch
          %4455 = sbr.rel (%p4453) target = $region85
        $region84: #{tpu_custom_call.1} parent=80 // pred_region
          %s4456 = sand.u32 %s72, 1
          %s4457 = scalar_lea.sflag [#allocation6], %s4456
          %s4458 = sand.u32 %s72, 1
          %s4459 = smul.addr %s4458, 128
          %s4460 = scalar_lea.vmem [#allocation5], %s4459
          %4461 = dma.done %s4457, 2048
        $region85: #{tpu_custom_call.1} parent=80 // pred_fallthru
          _
      $region81: #{tpu_custom_call.1} parent=5 // pred_fallthru
        _
    $region6: #{tpu_custom_call.1} parent=1 // loop_footer
      %s15 = sadd.s32 1, %s11
    $region7: #{tpu_custom_call.1} parent=1 // loop_footer_branch
      %10 = sbr.rel target = $region3
    $region8: #{tpu_custom_call.1} parent=1 // loop_exit
      _
    %4462 = vsyncpa [#allocation6], 1
    %s4463 = scalar_lea.sflag [#allocation6], 1
    %4464 = vsyncpa %s4463, 1

</llo_original>
